<compile_context>
chip_gen: v5e
topology: v5e:2x2
jax: 0.10.0
libtpu: 0.0.40
codegen_flags: <defaults>
</compile_context>

<pallas_src>
import math

import jax
import jax.numpy as jnp
from jax.experimental import pallas as pl
from jax.experimental.pallas import tpu as pltpu

NUM_HEADS = 4
LN_EPS = 1e-5


def _layernorm(x, g, b):
    mu = jnp.mean(x, axis=-1, keepdims=True)
    var = jnp.mean(jnp.square(x - mu), axis=-1, keepdims=True)
    return (x - mu) * jax.lax.rsqrt(var + LN_EPS) * g + b


def _stack_kernel(
    x_ref,                       # (BB, C, H, W) fp32 input block (read only at l == 0)
    ln1_g_ref, ln1_b_ref,        # (1, 1, D) fp32
    wqkv_ref, bqkv_ref,          # (1, 3, D, D) bf16, (1, 3, D) fp32
    wo_ref, bo_ref,              # (1, NH, hd, D) bf16, (1, 1, D) fp32
    ln2_g_ref, ln2_b_ref,        # (1, 1, D) fp32
    w1_ref, b1_ref,              # (1, D, F) bf16, (1, 1, F) fp32
    w2_ref, b2_ref,              # (1, F, D) bf16, (1, 1, D) fp32
    comb_w_ref, comb_b_ref,      # SMEM (L*C*C,), (L*C,) fp32
    out_ref,                     # (BB, C, H, W) fp32 output block (written at last l)
    act_ref,                     # VMEM scratch (BB*C*H, D) fp32 — layer-resident act
):
    BB, C, H, D = x_ref.shape
    M = BB * C * H
    BC = BB * C
    hd = D // NUM_HEADS
    scale = jnp.float32(1.0 / math.sqrt(hd))
    l = pl.program_id(1)
    n_layers = pl.num_programs(1)

    # Load the activation into the VMEM-resident slab only on the first layer; later
    # layers carry it in act_ref (no HBM round-trip between layers).
    @pl.when(l == 0)
    def _():
        act_ref[...] = x_ref[...].reshape(M, D)

    x = act_ref[...]

    # ---- pre-norm MHSA; weights shared across batch & channels (one (M, D) slab) ----
    xn = _layernorm(x, ln1_g_ref[0], ln1_b_ref[0]).astype(jnp.bfloat16)
    wqkv = wqkv_ref[0]                        # (3, D, D) bf16: leading-axis slices only
    bqkv = bqkv_ref[0]                        # (3, D) fp32
    q = (jnp.dot(xn, wqkv[0], preferred_element_type=jnp.float32) + bqkv[0]) * scale
    k = jnp.dot(xn, wqkv[1], preferred_element_type=jnp.float32) + bqkv[1]
    v = jnp.dot(xn, wqkv[2], preferred_element_type=jnp.float32) + bqkv[2]
    q3 = q.reshape(BC, H, D)
    k3 = k.reshape(BC, H, D)
    v3 = v.reshape(BC, H, D)

    wo = wo_ref[0]                            # (NH, hd, D) bf16
    attn = None
    for n in range(NUM_HEADS):                # static unroll; heads attend per channel
        sl = slice(n * hd, (n + 1) * hd)
        qh = q3[:, :, sl].astype(jnp.bfloat16)
        kh = k3[:, :, sl].astype(jnp.bfloat16)
        vh = v3[:, :, sl].astype(jnp.bfloat16)
        s = jnp.einsum("bqd,bkd->bqk", qh, kh,
                       preferred_element_type=jnp.float32)            # (BC, H, H)
        s = s - jnp.max(s, axis=-1, keepdims=True)
        e = jnp.exp(s)
        p = e * pl.reciprocal(jnp.sum(e, axis=-1, keepdims=True), approx=True)
        oh = jnp.einsum("bqk,bkd->bqd", p.astype(jnp.bfloat16), vh,
                        preferred_element_type=jnp.float32)           # (BC, H, hd)
        proj = jnp.dot(oh.reshape(M, hd).astype(jnp.bfloat16), wo[n],
                       preferred_element_type=jnp.float32)            # (M, D)
        attn = proj if attn is None else attn + proj
    x = x + attn + bo_ref[0]

    # ---- pre-norm MLP (fp32 elementwise; bf16 matmul operands) ----
    xn2 = _layernorm(x, ln2_g_ref[0], ln2_b_ref[0]).astype(jnp.bfloat16)
    h1 = jnp.dot(xn2, w1_ref[0], preferred_element_type=jnp.float32) + b1_ref[0]
    h1 = jax.nn.gelu(h1)
    h2 = jnp.dot(h1.astype(jnp.bfloat16), w2_ref[0],
                 preferred_element_type=jnp.float32) + b2_ref[0]
    x = x + h2

    # ---- 3-channel -> 3-channel linear combinator (SMEM scalars, one fused pass) ----
    enc = x.reshape(BB, C, H, D)
    mixed_channels = []
    for i in range(C):
        acc = comb_b_ref[l * C + i] + comb_w_ref[(l * C + i) * C + 0] * enc[:, 0]
        for j in range(1, C):
            acc = acc + comb_w_ref[(l * C + i) * C + j] * enc[:, j]
        mixed_channels.append(acc)                                    # (BB, H, D)
    mixed = jnp.stack(mixed_channels, axis=1)                         # (BB, C, H, D)

    # Carry the mixed activation to the next layer in VMEM.
    act_ref[...] = mixed.reshape(M, D)

    # Single whole-slab HBM store, only after the last layer.
    @pl.when(l == n_layers - 1)
    def _():
        out_ref[...] = mixed.astype(out_ref.dtype)


def encoder_combinator_stack(x, layer_params, *, batch_block=None):
    """EncoderCombinatorStack forward: the whole layer stack in one pallas_call."""
    B, C, H, W = x.shape
    D = W
    L = len(layer_params)
    F = layer_params[0]["w1"].shape[1]
    assert D % NUM_HEADS == 0, "embedding width (W) must be divisible by NUM_HEADS"
    hd = D // NUM_HEADS
    BB = B if batch_block is None else batch_block
    assert B % BB == 0
    NB = B // BB

    bf16 = jnp.bfloat16
    stk = lambda name: jnp.stack([p[name] for p in layer_params], axis=0)
    vec = lambda name: jnp.stack([p[name][None, :] for p in layer_params], axis=0)

    # Stack per-layer weights on a leading layer axis; bf16 for matmul operands.
    wqkv = jnp.stack([jnp.stack([p["wq"], p["wk"], p["wv"]], 0)
                      for p in layer_params], 0).astype(bf16)          # (L, 3, D, D)
    bqkv = jnp.stack([jnp.stack([p["bq"], p["bk"], p["bv"]], 0)
                      for p in layer_params], 0)                       # (L, 3, D)
    wo = jnp.stack([p["wo"].reshape(NUM_HEADS, hd, D)
                    for p in layer_params], 0).astype(bf16)            # (L, NH, hd, D)
    w1 = stk("w1").astype(bf16)                                        # (L, D, F)
    w2 = stk("w2").astype(bf16)                                        # (L, F, D)
    comb_w = stk("comb_w").reshape(-1)                                 # (L*C*C,) fp32
    comb_b = stk("comb_b").reshape(-1)                                 # (L*C,)   fp32

    weights = [
        vec("ln1_g"), vec("ln1_b"),
        wqkv, bqkv,
        wo, vec("bo"),
        vec("ln2_g"), vec("ln2_b"),
        w1, vec("b1"),
        w2, vec("b2"),
    ]

    def layer_block(arr):
        nd = arr.ndim
        blk = (1,) + tuple(arr.shape[1:])
        return pl.BlockSpec(blk, lambda b, l, nd=nd: (l,) + (0,) * (nd - 1))

    img_spec = pl.BlockSpec((BB, C, H, W), lambda b, l: (b, 0, 0, 0))
    smem_spec = pl.BlockSpec(memory_space=pltpu.MemorySpace.SMEM)

    # Explicit VMEM budget: double-buffered per-layer weights + in/out image blocks +
    # activation scratch + the largest attention/MLP intermediates, with headroom.
    w_bytes = sum(int(w.size) * w.dtype.itemsize for w in weights) // max(L, 1)
    act_bytes = BB * C * H * W * 4
    interm_bytes = 4 * (BB * C * NUM_HEADS * H * H + 4 * BB * C * H * D + BB * C * H * F)
    vmem_limit = int(min(64 << 20,
                         max(32 << 20,
                             4 * (4 * w_bytes + 4 * act_bytes + interm_bytes))))

    return pl.pallas_call(
        _stack_kernel,
        out_shape=jax.ShapeDtypeStruct((B, C, H, W), jnp.float32),
        grid=(NB, L),
        in_specs=[img_spec] + [layer_block(w) for w in weights] + [smem_spec, smem_spec],
        out_specs=img_spec,
        scratch_shapes=[pltpu.VMEM((BB * C * H, D), jnp.float32)],
        compiler_params=pltpu.CompilerParams(
            dimension_semantics=("parallel", "arbitrary"),
            vmem_limit_bytes=vmem_limit,
        ),
    )(x, *weights, comb_w, comb_b)


# ------------------------------ pure-JAX reference ------------------------------

def _reference_layer(x, p):
    B, C, H, D = x.shape
    hd = D // NUM_HEADS
    scale = 1.0 / math.sqrt(hd)

    def enc_one(xc):  # (H, D)
        xn = _layernorm(xc, p["ln1_g"], p["ln1_b"])
        q = xn @ p["wq"] + p["bq"]
        k = xn @ p["wk"] + p["bk"]
        v = xn @ p["wv"] + p["bv"]
        heads = []
        for h in range(NUM_HEADS):
            sl = slice(h * hd, (h + 1) * hd)
            s = (q[:, sl] @ k[:, sl].T) * scale
            a = jax.nn.softmax(s, axis=-1)
            heads.append(a @ v[:, sl])
        y = xc + jnp.concatenate(heads, axis=-1) @ p["wo"] + p["bo"]
        yn = _layernorm(y, p["ln2_g"], p["ln2_b"])
        return y + jax.nn.gelu(yn @ p["w1"] + p["b1"]) @ p["w2"] + p["b2"]

    enc = jax.vmap(jax.vmap(enc_one))(x)                      # (B, C, H, D)
    out = jnp.einsum("ij,bjhd->bihd", p["comb_w"], enc)
    return out + p["comb_b"][None, :, None, None]


def reference_stack(x, layer_params):
    for p in layer_params:
        x = _reference_layer(x, p)
    return x


def init_layer_params(key, C, D):
    F = 4 * D
    ks = jax.random.split(key, 7)
    s = 0.02
    nrm = lambda k, shape: (s * jax.random.normal(k, shape)).astype(jnp.float32)
    return dict(
        ln1_g=jnp.ones((D,), jnp.float32), ln1_b=jnp.zeros((D,), jnp.float32),
        wq=nrm(ks[0], (D, D)), bq=jnp.zeros((D,), jnp.float32),
        wk=nrm(ks[1], (D, D)), bk=jnp.zeros((D,), jnp.float32),
        wv=nrm(ks[2], (D, D)), bv=jnp.zeros((D,), jnp.float32),
        wo=nrm(ks[3], (D, D)), bo=jnp.zeros((D,), jnp.float32),
        ln2_g=jnp.ones((D,), jnp.float32), ln2_b=jnp.zeros((D,), jnp.float32),
        w1=nrm(ks[4], (D, F)), b1=jnp.zeros((F,), jnp.float32),
        w2=nrm(ks[5], (F, D)), b2=jnp.zeros((D,), jnp.float32),
        comb_w=(jnp.eye(C, dtype=jnp.float32)
                + 0.1 * jax.random.normal(ks[6], (C, C)).astype(jnp.float32)),
        comb_b=jnp.zeros((C,), jnp.float32),
    )


if __name__ == "__main__":
    B, C, H, W = 2, 3, 16, 32        # batch, channels, rows(tokens), cols(embedding)
    N_LAYERS = 2                     # n_high_level_layers in EncoderCombinatorStack

    kx, kp = jax.random.split(jax.random.PRNGKey(0))
    x = jax.random.normal(kx, (B, C, H, W), dtype=jnp.float32)
    layer_params = [init_layer_params(k, C, W) for k in jax.random.split(kp, N_LAYERS)]

    out = jax.block_until_ready(encoder_combinator_stack(x, layer_params))
    ref = reference_stack(x, layer_params)

    assert out.shape == (B, C, H, W) and out.dtype == jnp.float32
    if not bool(jnp.allclose(out, ref, atol=2e-2, rtol=2e-2)):
        max_err = float(jnp.max(jnp.abs(out - ref)))
        raise AssertionError(f"Pallas output mismatch vs reference (max abs err {max_err})")
    print("KERNEL_OK")
</pallas_src>

<mosaic_0001>
module attributes {stable_mosaic.version = 11 : i64} {
  func.func @_stack_kernel(%arg0: i32, %arg1: i32, %arg2: memref<2x3x16x32xf32, #tpu.memory_space<vmem>>, %arg3: memref<1x1x32xf32, #tpu.memory_space<vmem>>, %arg4: memref<1x1x32xf32, #tpu.memory_space<vmem>>, %arg5: memref<1x3x32x32xbf16, #tpu.memory_space<vmem>>, %arg6: memref<1x3x32xf32, #tpu.memory_space<vmem>>, %arg7: memref<1x4x8x32xbf16, #tpu.memory_space<vmem>>, %arg8: memref<1x1x32xf32, #tpu.memory_space<vmem>>, %arg9: memref<1x1x32xf32, #tpu.memory_space<vmem>>, %arg10: memref<1x1x32xf32, #tpu.memory_space<vmem>>, %arg11: memref<1x32x128xbf16, #tpu.memory_space<vmem>>, %arg12: memref<1x1x128xf32, #tpu.memory_space<vmem>>, %arg13: memref<1x128x32xbf16, #tpu.memory_space<vmem>>, %arg14: memref<1x1x32xf32, #tpu.memory_space<vmem>>, %arg15: memref<18xf32, #tpu.memory_space<smem>>, %arg16: memref<6xf32, #tpu.memory_space<smem>>, %arg17: memref<2x3x16x32xf32, #tpu.memory_space<vmem>>, %arg18: memref<96x32xf32, #tpu.memory_space<vmem>>) attributes {dimension_semantics = [#tpu.dimension_semantics<parallel>, #tpu.dimension_semantics<arbitrary>], iteration_bounds = array<i64: 1, 2>, scalar_prefetch = 0 : i64, scratch_operands = 1 : i64, tpu.core_type = #tpu.core_type<tc>, window_params = [{transform_indices = @transform_0, window_bounds = array<i64: 2, 3, 16, 32>}, {transform_indices = @transform_1, window_bounds = array<i64: 1, 1, 32>}, {transform_indices = @transform_2, window_bounds = array<i64: 1, 1, 32>}, {transform_indices = @transform_3, window_bounds = array<i64: 1, 3, 32, 32>}, {transform_indices = @transform_4, window_bounds = array<i64: 1, 3, 32>}, {transform_indices = @transform_5, window_bounds = array<i64: 1, 4, 8, 32>}, {transform_indices = @transform_6, window_bounds = array<i64: 1, 1, 32>}, {transform_indices = @transform_7, window_bounds = array<i64: 1, 1, 32>}, {transform_indices = @transform_8, window_bounds = array<i64: 1, 1, 32>}, {transform_indices = @transform_9, window_bounds = array<i64: 1, 32, 128>}, {transform_indices = @transform_10, window_bounds = array<i64: 1, 1, 128>}, {transform_indices = @transform_11, window_bounds = array<i64: 1, 128, 32>}, {transform_indices = @transform_12, window_bounds = array<i64: 1, 1, 32>}, {transform_indices = @transform_13, window_bounds = array<i64: 18>}, {transform_indices = @transform_14, window_bounds = array<i64: 6>}, {transform_indices = @transform_15, window_bounds = array<i64: 2, 3, 16, 32>}]} {
    %c0_i32 = arith.constant 0 : i32
    %0 = arith.cmpi eq, %arg1, %c0_i32 : i32
    %1 = arith.extui %0 : i1 to i32
    %c0_i32_0 = arith.constant 0 : i32
    %2 = arith.cmpi ne, %1, %c0_i32_0 : i32
    scf.if %2 {
      %c0_122 = arith.constant 0 : index
      %c0_123 = arith.constant 0 : index
      %c0_124 = arith.constant 0 : index
      %c0_125 = arith.constant 0 : index
      %350 = vector.load %arg2[%c0_122, %c0_123, %c0_124, %c0_125] : memref<2x3x16x32xf32, #tpu.memory_space<vmem>>, vector<2x3x16x32xf32>
      %351 = vector.shape_cast %350 : vector<2x3x16x32xf32> to vector<96x32xf32>
      %c0_126 = arith.constant 0 : index
      %c0_127 = arith.constant 0 : index
      %352 = vector.load %arg18[%c0_126, %c0_127] : memref<96x32xf32, #tpu.memory_space<vmem>>, vector<96x32xf32>
      tpu.vector_store %arg18[%c0_126, %c0_127], %351 {strides = array<i32>} : memref<96x32xf32, #tpu.memory_space<vmem>>, vector<96x32xf32>,
    } else {
    }
    %c0 = arith.constant 0 : index
    %c0_1 = arith.constant 0 : index
    %3 = vector.load %arg18[%c0, %c0_1] : memref<96x32xf32, #tpu.memory_space<vmem>>, vector<96x32xf32>
    %c0_2 = arith.constant 0 : index
    %c0_3 = arith.constant 0 : index
    %c0_4 = arith.constant 0 : index
    %4 = vector.load %arg3[%c0_2, %c0_3, %c0_4] : memref<1x1x32xf32, #tpu.memory_space<vmem>>, vector<1x1x32xf32>
    %5 = vector.shape_cast %4 : vector<1x1x32xf32> to vector<1x32xf32>
    %c0_5 = arith.constant 0 : index
    %c0_6 = arith.constant 0 : index
    %c0_7 = arith.constant 0 : index
    %6 = vector.load %arg4[%c0_5, %c0_6, %c0_7] : memref<1x1x32xf32, #tpu.memory_space<vmem>>, vector<1x1x32xf32>
    %7 = vector.shape_cast %6 : vector<1x1x32xf32> to vector<1x32xf32>
    %cst = arith.constant dense<0.000000e+00> : vector<96xf32>
    %8 = vector.multi_reduction <add>, %3, %cst [1] : vector<96x32xf32> to vector<96xf32>
    %9 = vector.shape_cast %8 : vector<96xf32> to vector<96x1xf32>
    %cst_8 = arith.constant 3.200000e+01 : f32
    %10 = vector.broadcast %cst_8 : f32 to vector<96x1xf32>
    %11 = arith.divf %9, %10 : vector<96x1xf32>
    %12 = vector.broadcast %11 : vector<96x1xf32> to vector<96x32xf32>
    %13 = arith.subf %3, %12 : vector<96x32xf32>
    %14 = arith.mulf %13, %13 : vector<96x32xf32>
    %cst_9 = arith.constant dense<0.000000e+00> : vector<96xf32>
    %15 = vector.multi_reduction <add>, %14, %cst_9 [1] : vector<96x32xf32> to vector<96xf32>
    %16 = vector.shape_cast %15 : vector<96xf32> to vector<96x1xf32>
    %cst_10 = arith.constant 3.200000e+01 : f32
    %17 = vector.broadcast %cst_10 : f32 to vector<96x1xf32>
    %18 = arith.divf %16, %17 : vector<96x1xf32>
    %19 = vector.broadcast %11 : vector<96x1xf32> to vector<96x32xf32>
    %20 = arith.subf %3, %19 : vector<96x32xf32>
    %cst_11 = arith.constant 9.99999974E-6 : f32
    %21 = vector.broadcast %cst_11 : f32 to vector<96x1xf32>
    %22 = arith.addf %18, %21 : vector<96x1xf32>
    %23 = math.rsqrt %22 : vector<96x1xf32>
    %24 = vector.broadcast %23 : vector<96x1xf32> to vector<96x32xf32>
    %25 = arith.mulf %20, %24 : vector<96x32xf32>
    %26 = vector.broadcast %5 : vector<1x32xf32> to vector<96x32xf32>
    %27 = arith.mulf %25, %26 : vector<96x32xf32>
    %28 = vector.broadcast %7 : vector<1x32xf32> to vector<96x32xf32>
    %29 = arith.addf %27, %28 : vector<96x32xf32>
    %30 = arith.truncf %29 : vector<96x32xf32> to vector<96x32xbf16>
    %c0_12 = arith.constant 0 : index
    %c0_13 = arith.constant 0 : index
    %c0_14 = arith.constant 0 : index
    %c0_15 = arith.constant 0 : index
    %31 = vector.load %arg5[%c0_12, %c0_13, %c0_14, %c0_15] : memref<1x3x32x32xbf16, #tpu.memory_space<vmem>>, vector<1x3x32x32xbf16>
    %32 = vector.shape_cast %31 : vector<1x3x32x32xbf16> to vector<3x32x32xbf16>
    %c0_16 = arith.constant 0 : index
    %c0_17 = arith.constant 0 : index
    %c0_18 = arith.constant 0 : index
    %33 = vector.load %arg6[%c0_16, %c0_17, %c0_18] : memref<1x3x32xf32, #tpu.memory_space<vmem>>, vector<1x3x32xf32>
    %34 = vector.shape_cast %33 : vector<1x3x32xf32> to vector<3x32xf32>
    %35 = vector.extract_strided_slice %32 {offsets = [0, 0, 0], sizes = [1, 32, 32], strides = [1, 1, 1]} : vector<3x32x32xbf16> to vector<1x32x32xbf16>
    %36 = vector.shape_cast %35 : vector<1x32x32xbf16> to vector<32x32xbf16>
    %cst_19 = arith.constant dense<0.000000e+00> : vector<96x32xf32>
    %37 = tpu.matmul %30, %36, %cst_19 {dimension_numbers = #tpu.dot_dimension_numbers<[1], [0], [0], [1], [0, 0, 1, 1], [], []>} : vector<96x32xbf16>, vector<32x32xbf16>, vector<96x32xf32> -> vector<96x32xf32>
    %38 = vector.extract_strided_slice %34 {offsets = [0, 0], sizes = [1, 32], strides = [1, 1]} : vector<3x32xf32> to vector<1x32xf32>
    %39 = vector.shape_cast %38 : vector<1x32xf32> to vector<32xf32>
    %40 = vector.shape_cast %39 : vector<32xf32> to vector<1x32xf32>
    %41 = vector.broadcast %40 : vector<1x32xf32> to vector<96x32xf32>
    %42 = arith.addf %37, %41 : vector<96x32xf32>
    %cst_20 = arith.constant 0.353553385 : f32
    %43 = vector.broadcast %cst_20 : f32 to vector<96x32xf32>
    %44 = arith.mulf %42, %43 : vector<96x32xf32>
    %45 = vector.extract_strided_slice %32 {offsets = [1, 0, 0], sizes = [1, 32, 32], strides = [1, 1, 1]} : vector<3x32x32xbf16> to vector<1x32x32xbf16>
    %46 = vector.shape_cast %45 : vector<1x32x32xbf16> to vector<32x32xbf16>
    %cst_21 = arith.constant dense<0.000000e+00> : vector<96x32xf32>
    %47 = tpu.matmul %30, %46, %cst_21 {dimension_numbers = #tpu.dot_dimension_numbers<[1], [0], [0], [1], [0, 0, 1, 1], [], []>} : vector<96x32xbf16>, vector<32x32xbf16>, vector<96x32xf32> -> vector<96x32xf32>
    %48 = vector.extract_strided_slice %34 {offsets = [1, 0], sizes = [1, 32], strides = [1, 1]} : vector<3x32xf32> to vector<1x32xf32>
    %49 = vector.shape_cast %48 : vector<1x32xf32> to vector<32xf32>
    %50 = vector.shape_cast %49 : vector<32xf32> to vector<1x32xf32>
    %51 = vector.broadcast %50 : vector<1x32xf32> to vector<96x32xf32>
    %52 = arith.addf %47, %51 : vector<96x32xf32>
    %53 = vector.extract_strided_slice %32 {offsets = [2, 0, 0], sizes = [1, 32, 32], strides = [1, 1, 1]} : vector<3x32x32xbf16> to vector<1x32x32xbf16>
    %54 = vector.shape_cast %53 : vector<1x32x32xbf16> to vector<32x32xbf16>
    %cst_22 = arith.constant dense<0.000000e+00> : vector<96x32xf32>
    %55 = tpu.matmul %30, %54, %cst_22 {dimension_numbers = #tpu.dot_dimension_numbers<[1], [0], [0], [1], [0, 0, 1, 1], [], []>} : vector<96x32xbf16>, vector<32x32xbf16>, vector<96x32xf32> -> vector<96x32xf32>
    %56 = vector.extract_strided_slice %34 {offsets = [2, 0], sizes = [1, 32], strides = [1, 1]} : vector<3x32xf32> to vector<1x32xf32>
    %57 = vector.shape_cast %56 : vector<1x32xf32> to vector<32xf32>
    %58 = vector.shape_cast %57 : vector<32xf32> to vector<1x32xf32>
    %59 = vector.broadcast %58 : vector<1x32xf32> to vector<96x32xf32>
    %60 = arith.addf %55, %59 : vector<96x32xf32>
    %61 = vector.shape_cast %44 : vector<96x32xf32> to vector<6x16x32xf32>
    %62 = vector.shape_cast %52 : vector<96x32xf32> to vector<6x16x32xf32>
    %63 = vector.shape_cast %60 : vector<96x32xf32> to vector<6x16x32xf32>
    %c0_23 = arith.constant 0 : index
    %c0_24 = arith.constant 0 : index
    %c0_25 = arith.constant 0 : index
    %c0_26 = arith.constant 0 : index
    %64 = vector.load %arg7[%c0_23, %c0_24, %c0_25, %c0_26] : memref<1x4x8x32xbf16, #tpu.memory_space<vmem>>, vector<1x4x8x32xbf16>
    %65 = vector.shape_cast %64 : vector<1x4x8x32xbf16> to vector<4x8x32xbf16>
    %66 = vector.extract_strided_slice %61 {offsets = [0, 0, 0], sizes = [6, 16, 8], strides = [1, 1, 1]} : vector<6x16x32xf32> to vector<6x16x8xf32>
    %67 = arith.truncf %66 : vector<6x16x8xf32> to vector<6x16x8xbf16>
    %68 = vector.extract_strided_slice %62 {offsets = [0, 0, 0], sizes = [6, 16, 8], strides = [1, 1, 1]} : vector<6x16x32xf32> to vector<6x16x8xf32>
    %69 = arith.truncf %68 : vector<6x16x8xf32> to vector<6x16x8xbf16>
    %70 = vector.extract_strided_slice %63 {offsets = [0, 0, 0], sizes = [6, 16, 8], strides = [1, 1, 1]} : vector<6x16x32xf32> to vector<6x16x8xf32>
    %71 = arith.truncf %70 : vector<6x16x8xf32> to vector<6x16x8xbf16>
    "tpu.trace_start"() <{level = 10 : i32, message = "bqd,bkd->bqk"}> : () -> ()
    %cst_27 = arith.constant dense<0.000000e+00> : vector<6x16x16xf32>
    %72 = tpu.matmul %67, %69, %cst_27 {dimension_numbers = #tpu.dot_dimension_numbers<[2], [2], [1], [1], [0, 0, 0, 1, 1, 1], [0], [0]>} : vector<6x16x8xbf16>, vector<6x16x8xbf16>, vector<6x16x16xf32> -> vector<6x16x16xf32>
    "tpu.trace_stop"() : () -> ()
    %cst_28 = arith.constant dense<0xFF800000> : vector<6x16xf32>
    %73 = vector.multi_reduction <maximumf>, %72, %cst_28 [2] : vector<6x16x16xf32> to vector<6x16xf32>
    %74 = vector.shape_cast %73 : vector<6x16xf32> to vector<6x16x1xf32>
    %75 = vector.broadcast %74 : vector<6x16x1xf32> to vector<6x16x16xf32>
    %76 = arith.subf %72, %75 : vector<6x16x16xf32>
    %77 = math.exp %76 : vector<6x16x16xf32>
    %cst_29 = arith.constant dense<0.000000e+00> : vector<6x16xf32>
    %78 = vector.multi_reduction <add>, %77, %cst_29 [2] : vector<6x16x16xf32> to vector<6x16xf32>
    %79 = vector.shape_cast %78 : vector<6x16xf32> to vector<6x16x1xf32>
    %80 = tpu.reciprocal %79 {approx = true} : vector<6x16x1xf32> -> vector<6x16x1xf32>
    %81 = vector.broadcast %80 : vector<6x16x1xf32> to vector<6x16x16xf32>
    %82 = arith.mulf %77, %81 : vector<6x16x16xf32>
    %83 = arith.truncf %82 : vector<6x16x16xf32> to vector<6x16x16xbf16>
    "tpu.trace_start"() <{level = 10 : i32, message = "bqk,bkd->bqd"}> : () -> ()
    %cst_30 = arith.constant dense<0.000000e+00> : vector<6x16x8xf32>
    %84 = tpu.matmul %83, %71, %cst_30 {dimension_numbers = #tpu.dot_dimension_numbers<[2], [1], [1], [2], [0, 0, 0, 1, 1, 2], [0], [0]>} : vector<6x16x16xbf16>, vector<6x16x8xbf16>, vector<6x16x8xf32> -> vector<6x16x8xf32>
    "tpu.trace_stop"() : () -> ()
    %85 = vector.shape_cast %84 : vector<6x16x8xf32> to vector<96x8xf32>
    %86 = arith.truncf %85 : vector<96x8xf32> to vector<96x8xbf16>
    %87 = vector.extract_strided_slice %65 {offsets = [0, 0, 0], sizes = [1, 8, 32], strides = [1, 1, 1]} : vector<4x8x32xbf16> to vector<1x8x32xbf16>
    %88 = vector.shape_cast %87 : vector<1x8x32xbf16> to vector<8x32xbf16>
    %cst_31 = arith.constant dense<0.000000e+00> : vector<96x32xf32>
    %89 = tpu.matmul %86, %88, %cst_31 {dimension_numbers = #tpu.dot_dimension_numbers<[1], [0], [0], [1], [0, 0, 1, 1], [], []>} : vector<96x8xbf16>, vector<8x32xbf16>, vector<96x32xf32> -> vector<96x32xf32>
    %90 = vector.extract_strided_slice %61 {offsets = [0, 0, 8], sizes = [6, 16, 8], strides = [1, 1, 1]} : vector<6x16x32xf32> to vector<6x16x8xf32>
    %91 = arith.truncf %90 : vector<6x16x8xf32> to vector<6x16x8xbf16>
    %92 = vector.extract_strided_slice %62 {offsets = [0, 0, 8], sizes = [6, 16, 8], strides = [1, 1, 1]} : vector<6x16x32xf32> to vector<6x16x8xf32>
    %93 = arith.truncf %92 : vector<6x16x8xf32> to vector<6x16x8xbf16>
    %94 = vector.extract_strided_slice %63 {offsets = [0, 0, 8], sizes = [6, 16, 8], strides = [1, 1, 1]} : vector<6x16x32xf32> to vector<6x16x8xf32>
    %95 = arith.truncf %94 : vector<6x16x8xf32> to vector<6x16x8xbf16>
    "tpu.trace_start"() <{level = 10 : i32, message = "bqd,bkd->bqk"}> : () -> ()
    %cst_32 = arith.constant dense<0.000000e+00> : vector<6x16x16xf32>
    %96 = tpu.matmul %91, %93, %cst_32 {dimension_numbers = #tpu.dot_dimension_numbers<[2], [2], [1], [1], [0, 0, 0, 1, 1, 1], [0], [0]>} : vector<6x16x8xbf16>, vector<6x16x8xbf16>, vector<6x16x16xf32> -> vector<6x16x16xf32>
    "tpu.trace_stop"() : () -> ()
    %cst_33 = arith.constant dense<0xFF800000> : vector<6x16xf32>
    %97 = vector.multi_reduction <maximumf>, %96, %cst_33 [2] : vector<6x16x16xf32> to vector<6x16xf32>
    %98 = vector.shape_cast %97 : vector<6x16xf32> to vector<6x16x1xf32>
    %99 = vector.broadcast %98 : vector<6x16x1xf32> to vector<6x16x16xf32>
    %100 = arith.subf %96, %99 : vector<6x16x16xf32>
    %101 = math.exp %100 : vector<6x16x16xf32>
    %cst_34 = arith.constant dense<0.000000e+00> : vector<6x16xf32>
    %102 = vector.multi_reduction <add>, %101, %cst_34 [2] : vector<6x16x16xf32> to vector<6x16xf32>
    %103 = vector.shape_cast %102 : vector<6x16xf32> to vector<6x16x1xf32>
    %104 = tpu.reciprocal %103 {approx = true} : vector<6x16x1xf32> -> vector<6x16x1xf32>
    %105 = vector.broadcast %104 : vector<6x16x1xf32> to vector<6x16x16xf32>
    %106 = arith.mulf %101, %105 : vector<6x16x16xf32>
    %107 = arith.truncf %106 : vector<6x16x16xf32> to vector<6x16x16xbf16>
    "tpu.trace_start"() <{level = 10 : i32, message = "bqk,bkd->bqd"}> : () -> ()
    %cst_35 = arith.constant dense<0.000000e+00> : vector<6x16x8xf32>
    %108 = tpu.matmul %107, %95, %cst_35 {dimension_numbers = #tpu.dot_dimension_numbers<[2], [1], [1], [2], [0, 0, 0, 1, 1, 2], [0], [0]>} : vector<6x16x16xbf16>, vector<6x16x8xbf16>, vector<6x16x8xf32> -> vector<6x16x8xf32>
    "tpu.trace_stop"() : () -> ()
    %109 = vector.shape_cast %108 : vector<6x16x8xf32> to vector<96x8xf32>
    %110 = arith.truncf %109 : vector<96x8xf32> to vector<96x8xbf16>
    %111 = vector.extract_strided_slice %65 {offsets = [1, 0, 0], sizes = [1, 8, 32], strides = [1, 1, 1]} : vector<4x8x32xbf16> to vector<1x8x32xbf16>
    %112 = vector.shape_cast %111 : vector<1x8x32xbf16> to vector<8x32xbf16>
    %cst_36 = arith.constant dense<0.000000e+00> : vector<96x32xf32>
    %113 = tpu.matmul %110, %112, %cst_36 {dimension_numbers = #tpu.dot_dimension_numbers<[1], [0], [0], [1], [0, 0, 1, 1], [], []>} : vector<96x8xbf16>, vector<8x32xbf16>, vector<96x32xf32> -> vector<96x32xf32>
    %114 = arith.addf %89, %113 : vector<96x32xf32>
    %115 = vector.extract_strided_slice %61 {offsets = [0, 0, 16], sizes = [6, 16, 8], strides = [1, 1, 1]} : vector<6x16x32xf32> to vector<6x16x8xf32>
    %116 = arith.truncf %115 : vector<6x16x8xf32> to vector<6x16x8xbf16>
    %117 = vector.extract_strided_slice %62 {offsets = [0, 0, 16], sizes = [6, 16, 8], strides = [1, 1, 1]} : vector<6x16x32xf32> to vector<6x16x8xf32>
    %118 = arith.truncf %117 : vector<6x16x8xf32> to vector<6x16x8xbf16>
    %119 = vector.extract_strided_slice %63 {offsets = [0, 0, 16], sizes = [6, 16, 8], strides = [1, 1, 1]} : vector<6x16x32xf32> to vector<6x16x8xf32>
    %120 = arith.truncf %119 : vector<6x16x8xf32> to vector<6x16x8xbf16>
    "tpu.trace_start"() <{level = 10 : i32, message = "bqd,bkd->bqk"}> : () -> ()
    %cst_37 = arith.constant dense<0.000000e+00> : vector<6x16x16xf32>
    %121 = tpu.matmul %116, %118, %cst_37 {dimension_numbers = #tpu.dot_dimension_numbers<[2], [2], [1], [1], [0, 0, 0, 1, 1, 1], [0], [0]>} : vector<6x16x8xbf16>, vector<6x16x8xbf16>, vector<6x16x16xf32> -> vector<6x16x16xf32>
    "tpu.trace_stop"() : () -> ()
    %cst_38 = arith.constant dense<0xFF800000> : vector<6x16xf32>
    %122 = vector.multi_reduction <maximumf>, %121, %cst_38 [2] : vector<6x16x16xf32> to vector<6x16xf32>
    %123 = vector.shape_cast %122 : vector<6x16xf32> to vector<6x16x1xf32>
    %124 = vector.broadcast %123 : vector<6x16x1xf32> to vector<6x16x16xf32>
    %125 = arith.subf %121, %124 : vector<6x16x16xf32>
    %126 = math.exp %125 : vector<6x16x16xf32>
    %cst_39 = arith.constant dense<0.000000e+00> : vector<6x16xf32>
    %127 = vector.multi_reduction <add>, %126, %cst_39 [2] : vector<6x16x16xf32> to vector<6x16xf32>
    %128 = vector.shape_cast %127 : vector<6x16xf32> to vector<6x16x1xf32>
    %129 = tpu.reciprocal %128 {approx = true} : vector<6x16x1xf32> -> vector<6x16x1xf32>
    %130 = vector.broadcast %129 : vector<6x16x1xf32> to vector<6x16x16xf32>
    %131 = arith.mulf %126, %130 : vector<6x16x16xf32>
    %132 = arith.truncf %131 : vector<6x16x16xf32> to vector<6x16x16xbf16>
    "tpu.trace_start"() <{level = 10 : i32, message = "bqk,bkd->bqd"}> : () -> ()
    %cst_40 = arith.constant dense<0.000000e+00> : vector<6x16x8xf32>
    %133 = tpu.matmul %132, %120, %cst_40 {dimension_numbers = #tpu.dot_dimension_numbers<[2], [1], [1], [2], [0, 0, 0, 1, 1, 2], [0], [0]>} : vector<6x16x16xbf16>, vector<6x16x8xbf16>, vector<6x16x8xf32> -> vector<6x16x8xf32>
    "tpu.trace_stop"() : () -> ()
    %134 = vector.shape_cast %133 : vector<6x16x8xf32> to vector<96x8xf32>
    %135 = arith.truncf %134 : vector<96x8xf32> to vector<96x8xbf16>
    %136 = vector.extract_strided_slice %65 {offsets = [2, 0, 0], sizes = [1, 8, 32], strides = [1, 1, 1]} : vector<4x8x32xbf16> to vector<1x8x32xbf16>
    %137 = vector.shape_cast %136 : vector<1x8x32xbf16> to vector<8x32xbf16>
    %cst_41 = arith.constant dense<0.000000e+00> : vector<96x32xf32>
    %138 = tpu.matmul %135, %137, %cst_41 {dimension_numbers = #tpu.dot_dimension_numbers<[1], [0], [0], [1], [0, 0, 1, 1], [], []>} : vector<96x8xbf16>, vector<8x32xbf16>, vector<96x32xf32> -> vector<96x32xf32>
    %139 = arith.addf %114, %138 : vector<96x32xf32>
    %140 = vector.extract_strided_slice %61 {offsets = [0, 0, 24], sizes = [6, 16, 8], strides = [1, 1, 1]} : vector<6x16x32xf32> to vector<6x16x8xf32>
    %141 = arith.truncf %140 : vector<6x16x8xf32> to vector<6x16x8xbf16>
    %142 = vector.extract_strided_slice %62 {offsets = [0, 0, 24], sizes = [6, 16, 8], strides = [1, 1, 1]} : vector<6x16x32xf32> to vector<6x16x8xf32>
    %143 = arith.truncf %142 : vector<6x16x8xf32> to vector<6x16x8xbf16>
    %144 = vector.extract_strided_slice %63 {offsets = [0, 0, 24], sizes = [6, 16, 8], strides = [1, 1, 1]} : vector<6x16x32xf32> to vector<6x16x8xf32>
    %145 = arith.truncf %144 : vector<6x16x8xf32> to vector<6x16x8xbf16>
    "tpu.trace_start"() <{level = 10 : i32, message = "bqd,bkd->bqk"}> : () -> ()
    %cst_42 = arith.constant dense<0.000000e+00> : vector<6x16x16xf32>
    %146 = tpu.matmul %141, %143, %cst_42 {dimension_numbers = #tpu.dot_dimension_numbers<[2], [2], [1], [1], [0, 0, 0, 1, 1, 1], [0], [0]>} : vector<6x16x8xbf16>, vector<6x16x8xbf16>, vector<6x16x16xf32> -> vector<6x16x16xf32>
    "tpu.trace_stop"() : () -> ()
    %cst_43 = arith.constant dense<0xFF800000> : vector<6x16xf32>
    %147 = vector.multi_reduction <maximumf>, %146, %cst_43 [2] : vector<6x16x16xf32> to vector<6x16xf32>
    %148 = vector.shape_cast %147 : vector<6x16xf32> to vector<6x16x1xf32>
    %149 = vector.broadcast %148 : vector<6x16x1xf32> to vector<6x16x16xf32>
    %150 = arith.subf %146, %149 : vector<6x16x16xf32>
    %151 = math.exp %150 : vector<6x16x16xf32>
    %cst_44 = arith.constant dense<0.000000e+00> : vector<6x16xf32>
    %152 = vector.multi_reduction <add>, %151, %cst_44 [2] : vector<6x16x16xf32> to vector<6x16xf32>
    %153 = vector.shape_cast %152 : vector<6x16xf32> to vector<6x16x1xf32>
    %154 = tpu.reciprocal %153 {approx = true} : vector<6x16x1xf32> -> vector<6x16x1xf32>
    %155 = vector.broadcast %154 : vector<6x16x1xf32> to vector<6x16x16xf32>
    %156 = arith.mulf %151, %155 : vector<6x16x16xf32>
    %157 = arith.truncf %156 : vector<6x16x16xf32> to vector<6x16x16xbf16>
    "tpu.trace_start"() <{level = 10 : i32, message = "bqk,bkd->bqd"}> : () -> ()
    %cst_45 = arith.constant dense<0.000000e+00> : vector<6x16x8xf32>
    %158 = tpu.matmul %157, %145, %cst_45 {dimension_numbers = #tpu.dot_dimension_numbers<[2], [1], [1], [2], [0, 0, 0, 1, 1, 2], [0], [0]>} : vector<6x16x16xbf16>, vector<6x16x8xbf16>, vector<6x16x8xf32> -> vector<6x16x8xf32>
    "tpu.trace_stop"() : () -> ()
    %159 = vector.shape_cast %158 : vector<6x16x8xf32> to vector<96x8xf32>
    %160 = arith.truncf %159 : vector<96x8xf32> to vector<96x8xbf16>
    %161 = vector.extract_strided_slice %65 {offsets = [3, 0, 0], sizes = [1, 8, 32], strides = [1, 1, 1]} : vector<4x8x32xbf16> to vector<1x8x32xbf16>
    %162 = vector.shape_cast %161 : vector<1x8x32xbf16> to vector<8x32xbf16>
    %cst_46 = arith.constant dense<0.000000e+00> : vector<96x32xf32>
    %163 = tpu.matmul %160, %162, %cst_46 {dimension_numbers = #tpu.dot_dimension_numbers<[1], [0], [0], [1], [0, 0, 1, 1], [], []>} : vector<96x8xbf16>, vector<8x32xbf16>, vector<96x32xf32> -> vector<96x32xf32>
    %164 = arith.addf %139, %163 : vector<96x32xf32>
    %165 = arith.addf %3, %164 : vector<96x32xf32>
    %c0_47 = arith.constant 0 : index
    %c0_48 = arith.constant 0 : index
    %c0_49 = arith.constant 0 : index
    %166 = vector.load %arg8[%c0_47, %c0_48, %c0_49] : memref<1x1x32xf32, #tpu.memory_space<vmem>>, vector<1x1x32xf32>
    %167 = vector.shape_cast %166 : vector<1x1x32xf32> to vector<1x32xf32>
    %168 = vector.broadcast %167 : vector<1x32xf32> to vector<96x32xf32>
    %169 = arith.addf %165, %168 : vector<96x32xf32>
    %c0_50 = arith.constant 0 : index
    %c0_51 = arith.constant 0 : index
    %c0_52 = arith.constant 0 : index
    %170 = vector.load %arg9[%c0_50, %c0_51, %c0_52] : memref<1x1x32xf32, #tpu.memory_space<vmem>>, vector<1x1x32xf32>
    %171 = vector.shape_cast %170 : vector<1x1x32xf32> to vector<1x32xf32>
    %c0_53 = arith.constant 0 : index
    %c0_54 = arith.constant 0 : index
    %c0_55 = arith.constant 0 : index
    %172 = vector.load %arg10[%c0_53, %c0_54, %c0_55] : memref<1x1x32xf32, #tpu.memory_space<vmem>>, vector<1x1x32xf32>
    %173 = vector.shape_cast %172 : vector<1x1x32xf32> to vector<1x32xf32>
    %cst_56 = arith.constant dense<0.000000e+00> : vector<96xf32>
    %174 = vector.multi_reduction <add>, %169, %cst_56 [1] : vector<96x32xf32> to vector<96xf32>
    %175 = vector.shape_cast %174 : vector<96xf32> to vector<96x1xf32>
    %cst_57 = arith.constant 3.200000e+01 : f32
    %176 = vector.broadcast %cst_57 : f32 to vector<96x1xf32>
    %177 = arith.divf %175, %176 : vector<96x1xf32>
    %178 = vector.broadcast %177 : vector<96x1xf32> to vector<96x32xf32>
    %179 = arith.subf %169, %178 : vector<96x32xf32>
    %180 = arith.mulf %179, %179 : vector<96x32xf32>
    %cst_58 = arith.constant dense<0.000000e+00> : vector<96xf32>
    %181 = vector.multi_reduction <add>, %180, %cst_58 [1] : vector<96x32xf32> to vector<96xf32>
    %182 = vector.shape_cast %181 : vector<96xf32> to vector<96x1xf32>
    %cst_59 = arith.constant 3.200000e+01 : f32
    %183 = vector.broadcast %cst_59 : f32 to vector<96x1xf32>
    %184 = arith.divf %182, %183 : vector<96x1xf32>
    %185 = vector.broadcast %177 : vector<96x1xf32> to vector<96x32xf32>
    %186 = arith.subf %169, %185 : vector<96x32xf32>
    %cst_60 = arith.constant 9.99999974E-6 : f32
    %187 = vector.broadcast %cst_60 : f32 to vector<96x1xf32>
    %188 = arith.addf %184, %187 : vector<96x1xf32>
    %189 = math.rsqrt %188 : vector<96x1xf32>
    %190 = vector.broadcast %189 : vector<96x1xf32> to vector<96x32xf32>
    %191 = arith.mulf %186, %190 : vector<96x32xf32>
    %192 = vector.broadcast %171 : vector<1x32xf32> to vector<96x32xf32>
    %193 = arith.mulf %191, %192 : vector<96x32xf32>
    %194 = vector.broadcast %173 : vector<1x32xf32> to vector<96x32xf32>
    %195 = arith.addf %193, %194 : vector<96x32xf32>
    %196 = arith.truncf %195 : vector<96x32xf32> to vector<96x32xbf16>
    %c0_61 = arith.constant 0 : index
    %c0_62 = arith.constant 0 : index
    %c0_63 = arith.constant 0 : index
    %197 = vector.load %arg11[%c0_61, %c0_62, %c0_63] : memref<1x32x128xbf16, #tpu.memory_space<vmem>>, vector<1x32x128xbf16>
    %198 = vector.shape_cast %197 : vector<1x32x128xbf16> to vector<32x128xbf16>
    %cst_64 = arith.constant dense<0.000000e+00> : vector<96x128xf32>
    %199 = tpu.matmul %196, %198, %cst_64 {dimension_numbers = #tpu.dot_dimension_numbers<[1], [0], [0], [1], [0, 0, 1, 1], [], []>} : vector<96x32xbf16>, vector<32x128xbf16>, vector<96x128xf32> -> vector<96x128xf32>
    %c0_65 = arith.constant 0 : index
    %c0_66 = arith.constant 0 : index
    %c0_67 = arith.constant 0 : index
    %200 = vector.load %arg12[%c0_65, %c0_66, %c0_67] : memref<1x1x128xf32, #tpu.memory_space<vmem>>, vector<1x1x128xf32>
    %201 = vector.shape_cast %200 : vector<1x1x128xf32> to vector<1x128xf32>
    %202 = vector.broadcast %201 : vector<1x128xf32> to vector<96x128xf32>
    %203 = arith.addf %199, %202 : vector<96x128xf32>
    %204 = arith.mulf %203, %203 : vector<96x128xf32>
    %205 = arith.mulf %203, %204 : vector<96x128xf32>
    %cst_68 = arith.constant 4.471500e-02 : f32
    %206 = vector.broadcast %cst_68 : f32 to vector<96x128xf32>
    %207 = arith.mulf %206, %205 : vector<96x128xf32>
    %208 = arith.addf %203, %207 : vector<96x128xf32>
    %cst_69 = arith.constant 0.797884583 : f32
    %209 = vector.broadcast %cst_69 : f32 to vector<96x128xf32>
    %210 = arith.mulf %209, %208 : vector<96x128xf32>
    %211 = math.tanh %210 : vector<96x128xf32>
    %cst_70 = arith.constant 1.000000e+00 : f32
    %212 = vector.broadcast %cst_70 : f32 to vector<96x128xf32>
    %213 = arith.addf %212, %211 : vector<96x128xf32>
    %cst_71 = arith.constant 5.000000e-01 : f32
    %214 = vector.broadcast %cst_71 : f32 to vector<96x128xf32>
    %215 = arith.mulf %214, %213 : vector<96x128xf32>
    %216 = arith.mulf %203, %215 : vector<96x128xf32>
    %217 = arith.truncf %216 : vector<96x128xf32> to vector<96x128xbf16>
    %c0_72 = arith.constant 0 : index
    %c0_73 = arith.constant 0 : index
    %c0_74 = arith.constant 0 : index
    %218 = vector.load %arg13[%c0_72, %c0_73, %c0_74] : memref<1x128x32xbf16, #tpu.memory_space<vmem>>, vector<1x128x32xbf16>
    %219 = vector.shape_cast %218 : vector<1x128x32xbf16> to vector<128x32xbf16>
    %cst_75 = arith.constant dense<0.000000e+00> : vector<96x32xf32>
    %220 = tpu.matmul %217, %219, %cst_75 {dimension_numbers = #tpu.dot_dimension_numbers<[1], [0], [0], [1], [0, 0, 1, 1], [], []>} : vector<96x128xbf16>, vector<128x32xbf16>, vector<96x32xf32> -> vector<96x32xf32>
    %c0_76 = arith.constant 0 : index
    %c0_77 = arith.constant 0 : index
    %c0_78 = arith.constant 0 : index
    %221 = vector.load %arg14[%c0_76, %c0_77, %c0_78] : memref<1x1x32xf32, #tpu.memory_space<vmem>>, vector<1x1x32xf32>
    %222 = vector.shape_cast %221 : vector<1x1x32xf32> to vector<1x32xf32>
    %223 = vector.broadcast %222 : vector<1x32xf32> to vector<96x32xf32>
    %224 = arith.addf %220, %223 : vector<96x32xf32>
    %225 = arith.addf %169, %224 : vector<96x32xf32>
    %226 = vector.shape_cast %225 : vector<96x32xf32> to vector<2x3x16x32xf32>
    %c3_i32 = arith.constant 3 : i32
    %227 = arith.muli %arg1, %c3_i32 : i32
    %c0_i32_79 = arith.constant 0 : i32
    %228 = arith.addi %227, %c0_i32_79 : i32
    %229 = arith.index_cast %228 : i32 to index
    %230 = memref.load %arg16[%229] : memref<6xf32, #tpu.memory_space<smem>>
    %c3_i32_80 = arith.constant 3 : i32
    %231 = arith.muli %arg1, %c3_i32_80 : i32
    %c0_i32_81 = arith.constant 0 : i32
    %232 = arith.addi %231, %c0_i32_81 : i32
    %c3_i32_82 = arith.constant 3 : i32
    %233 = arith.muli %232, %c3_i32_82 : i32
    %c0_i32_83 = arith.constant 0 : i32
    %234 = arith.addi %233, %c0_i32_83 : i32
    %235 = arith.index_cast %234 : i32 to index
    %236 = memref.load %arg15[%235] : memref<18xf32, #tpu.memory_space<smem>>
    %237 = vector.extract_strided_slice %226 {offsets = [0, 0, 0, 0], sizes = [2, 1, 16, 32], strides = [1, 1, 1, 1]} : vector<2x3x16x32xf32> to vector<2x1x16x32xf32>
    %238 = vector.shape_cast %237 : vector<2x1x16x32xf32> to vector<2x16x32xf32>
    %239 = vector.broadcast %236 : f32 to vector<2x16x32xf32>
    %240 = arith.mulf %239, %238 : vector<2x16x32xf32>
    %241 = vector.broadcast %230 : f32 to vector<2x16x32xf32>
    %242 = arith.addf %241, %240 : vector<2x16x32xf32>
    %c3_i32_84 = arith.constant 3 : i32
    %243 = arith.muli %arg1, %c3_i32_84 : i32
    %c0_i32_85 = arith.constant 0 : i32
    %244 = arith.addi %243, %c0_i32_85 : i32
    %c3_i32_86 = arith.constant 3 : i32
    %245 = arith.muli %244, %c3_i32_86 : i32
    %c1_i32 = arith.constant 1 : i32
    %246 = arith.addi %245, %c1_i32 : i32
    %247 = arith.index_cast %246 : i32 to index
    %248 = memref.load %arg15[%247] : memref<18xf32, #tpu.memory_space<smem>>
    %249 = vector.extract_strided_slice %226 {offsets = [0, 1, 0, 0], sizes = [2, 1, 16, 32], strides = [1, 1, 1, 1]} : vector<2x3x16x32xf32> to vector<2x1x16x32xf32>
    %250 = vector.shape_cast %249 : vector<2x1x16x32xf32> to vector<2x16x32xf32>
    %251 = vector.broadcast %248 : f32 to vector<2x16x32xf32>
    %252 = arith.mulf %251, %250 : vector<2x16x32xf32>
    %253 = arith.addf %242, %252 : vector<2x16x32xf32>
    %c3_i32_87 = arith.constant 3 : i32
    %254 = arith.muli %arg1, %c3_i32_87 : i32
    %c0_i32_88 = arith.constant 0 : i32
    %255 = arith.addi %254, %c0_i32_88 : i32
    %c3_i32_89 = arith.constant 3 : i32
    %256 = arith.muli %255, %c3_i32_89 : i32
    %c2_i32 = arith.constant 2 : i32
    %257 = arith.addi %256, %c2_i32 : i32
    %258 = arith.index_cast %257 : i32 to index
    %259 = memref.load %arg15[%258] : memref<18xf32, #tpu.memory_space<smem>>
    %260 = vector.extract_strided_slice %226 {offsets = [0, 2, 0, 0], sizes = [2, 1, 16, 32], strides = [1, 1, 1, 1]} : vector<2x3x16x32xf32> to vector<2x1x16x32xf32>
    %261 = vector.shape_cast %260 : vector<2x1x16x32xf32> to vector<2x16x32xf32>
    %262 = vector.broadcast %259 : f32 to vector<2x16x32xf32>
    %263 = arith.mulf %262, %261 : vector<2x16x32xf32>
    %264 = arith.addf %253, %263 : vector<2x16x32xf32>
    %c3_i32_90 = arith.constant 3 : i32
    %265 = arith.muli %arg1, %c3_i32_90 : i32
    %c1_i32_91 = arith.constant 1 : i32
    %266 = arith.addi %265, %c1_i32_91 : i32
    %267 = arith.index_cast %266 : i32 to index
    %268 = memref.load %arg16[%267] : memref<6xf32, #tpu.memory_space<smem>>
    %c3_i32_92 = arith.constant 3 : i32
    %269 = arith.muli %arg1, %c3_i32_92 : i32
    %c1_i32_93 = arith.constant 1 : i32
    %270 = arith.addi %269, %c1_i32_93 : i32
    %c3_i32_94 = arith.constant 3 : i32
    %271 = arith.muli %270, %c3_i32_94 : i32
    %c0_i32_95 = arith.constant 0 : i32
    %272 = arith.addi %271, %c0_i32_95 : i32
    %273 = arith.index_cast %272 : i32 to index
    %274 = memref.load %arg15[%273] : memref<18xf32, #tpu.memory_space<smem>>
    %275 = vector.extract_strided_slice %226 {offsets = [0, 0, 0, 0], sizes = [2, 1, 16, 32], strides = [1, 1, 1, 1]} : vector<2x3x16x32xf32> to vector<2x1x16x32xf32>
    %276 = vector.shape_cast %275 : vector<2x1x16x32xf32> to vector<2x16x32xf32>
    %277 = vector.broadcast %274 : f32 to vector<2x16x32xf32>
    %278 = arith.mulf %277, %276 : vector<2x16x32xf32>
    %279 = vector.broadcast %268 : f32 to vector<2x16x32xf32>
    %280 = arith.addf %279, %278 : vector<2x16x32xf32>
    %c3_i32_96 = arith.constant 3 : i32
    %281 = arith.muli %arg1, %c3_i32_96 : i32
    %c1_i32_97 = arith.constant 1 : i32
    %282 = arith.addi %281, %c1_i32_97 : i32
    %c3_i32_98 = arith.constant 3 : i32
    %283 = arith.muli %282, %c3_i32_98 : i32
    %c1_i32_99 = arith.constant 1 : i32
    %284 = arith.addi %283, %c1_i32_99 : i32
    %285 = arith.index_cast %284 : i32 to index
    %286 = memref.load %arg15[%285] : memref<18xf32, #tpu.memory_space<smem>>
    %287 = vector.extract_strided_slice %226 {offsets = [0, 1, 0, 0], sizes = [2, 1, 16, 32], strides = [1, 1, 1, 1]} : vector<2x3x16x32xf32> to vector<2x1x16x32xf32>
    %288 = vector.shape_cast %287 : vector<2x1x16x32xf32> to vector<2x16x32xf32>
    %289 = vector.broadcast %286 : f32 to vector<2x16x32xf32>
    %290 = arith.mulf %289, %288 : vector<2x16x32xf32>
    %291 = arith.addf %280, %290 : vector<2x16x32xf32>
    %c3_i32_100 = arith.constant 3 : i32
    %292 = arith.muli %arg1, %c3_i32_100 : i32
    %c1_i32_101 = arith.constant 1 : i32
    %293 = arith.addi %292, %c1_i32_101 : i32
    %c3_i32_102 = arith.constant 3 : i32
    %294 = arith.muli %293, %c3_i32_102 : i32
    %c2_i32_103 = arith.constant 2 : i32
    %295 = arith.addi %294, %c2_i32_103 : i32
    %296 = arith.index_cast %295 : i32 to index
    %297 = memref.load %arg15[%296] : memref<18xf32, #tpu.memory_space<smem>>
    %298 = vector.extract_strided_slice %226 {offsets = [0, 2, 0, 0], sizes = [2, 1, 16, 32], strides = [1, 1, 1, 1]} : vector<2x3x16x32xf32> to vector<2x1x16x32xf32>
    %299 = vector.shape_cast %298 : vector<2x1x16x32xf32> to vector<2x16x32xf32>
    %300 = vector.broadcast %297 : f32 to vector<2x16x32xf32>
    %301 = arith.mulf %300, %299 : vector<2x16x32xf32>
    %302 = arith.addf %291, %301 : vector<2x16x32xf32>
    %c3_i32_104 = arith.constant 3 : i32
    %303 = arith.muli %arg1, %c3_i32_104 : i32
    %c2_i32_105 = arith.constant 2 : i32
    %304 = arith.addi %303, %c2_i32_105 : i32
    %305 = arith.index_cast %304 : i32 to index
    %306 = memref.load %arg16[%305] : memref<6xf32, #tpu.memory_space<smem>>
    %c3_i32_106 = arith.constant 3 : i32
    %307 = arith.muli %arg1, %c3_i32_106 : i32
    %c2_i32_107 = arith.constant 2 : i32
    %308 = arith.addi %307, %c2_i32_107 : i32
    %c3_i32_108 = arith.constant 3 : i32
    %309 = arith.muli %308, %c3_i32_108 : i32
    %c0_i32_109 = arith.constant 0 : i32
    %310 = arith.addi %309, %c0_i32_109 : i32
    %311 = arith.index_cast %310 : i32 to index
    %312 = memref.load %arg15[%311] : memref<18xf32, #tpu.memory_space<smem>>
    %313 = vector.extract_strided_slice %226 {offsets = [0, 0, 0, 0], sizes = [2, 1, 16, 32], strides = [1, 1, 1, 1]} : vector<2x3x16x32xf32> to vector<2x1x16x32xf32>
    %314 = vector.shape_cast %313 : vector<2x1x16x32xf32> to vector<2x16x32xf32>
    %315 = vector.broadcast %312 : f32 to vector<2x16x32xf32>
    %316 = arith.mulf %315, %314 : vector<2x16x32xf32>
    %317 = vector.broadcast %306 : f32 to vector<2x16x32xf32>
    %318 = arith.addf %317, %316 : vector<2x16x32xf32>
    %c3_i32_110 = arith.constant 3 : i32
    %319 = arith.muli %arg1, %c3_i32_110 : i32
    %c2_i32_111 = arith.constant 2 : i32
    %320 = arith.addi %319, %c2_i32_111 : i32
    %c3_i32_112 = arith.constant 3 : i32
    %321 = arith.muli %320, %c3_i32_112 : i32
    %c1_i32_113 = arith.constant 1 : i32
    %322 = arith.addi %321, %c1_i32_113 : i32
    %323 = arith.index_cast %322 : i32 to index
    %324 = memref.load %arg15[%323] : memref<18xf32, #tpu.memory_space<smem>>
    %325 = vector.extract_strided_slice %226 {offsets = [0, 1, 0, 0], sizes = [2, 1, 16, 32], strides = [1, 1, 1, 1]} : vector<2x3x16x32xf32> to vector<2x1x16x32xf32>
    %326 = vector.shape_cast %325 : vector<2x1x16x32xf32> to vector<2x16x32xf32>
    %327 = vector.broadcast %324 : f32 to vector<2x16x32xf32>
    %328 = arith.mulf %327, %326 : vector<2x16x32xf32>
    %329 = arith.addf %318, %328 : vector<2x16x32xf32>
    %c3_i32_114 = arith.constant 3 : i32
    %330 = arith.muli %arg1, %c3_i32_114 : i32
    %c2_i32_115 = arith.constant 2 : i32
    %331 = arith.addi %330, %c2_i32_115 : i32
    %c3_i32_116 = arith.constant 3 : i32
    %332 = arith.muli %331, %c3_i32_116 : i32
    %c2_i32_117 = arith.constant 2 : i32
    %333 = arith.addi %332, %c2_i32_117 : i32
    %334 = arith.index_cast %333 : i32 to index
    %335 = memref.load %arg15[%334] : memref<18xf32, #tpu.memory_space<smem>>
    %336 = vector.extract_strided_slice %226 {offsets = [0, 2, 0, 0], sizes = [2, 1, 16, 32], strides = [1, 1, 1, 1]} : vector<2x3x16x32xf32> to vector<2x1x16x32xf32>
    %337 = vector.shape_cast %336 : vector<2x1x16x32xf32> to vector<2x16x32xf32>
    %338 = vector.broadcast %335 : f32 to vector<2x16x32xf32>
    %339 = arith.mulf %338, %337 : vector<2x16x32xf32>
    %340 = arith.addf %329, %339 : vector<2x16x32xf32>
    %341 = vector.shape_cast %264 : vector<2x16x32xf32> to vector<2x1x16x32xf32>
    %342 = vector.shape_cast %302 : vector<2x16x32xf32> to vector<2x1x16x32xf32>
    %343 = vector.shape_cast %340 : vector<2x16x32xf32> to vector<2x1x16x32xf32>
    %344 = tpu.concatenate %341, %342, %343 in 1 : vector<2x1x16x32xf32>, vector<2x1x16x32xf32>, vector<2x1x16x32xf32> -> vector<2x3x16x32xf32>
    %345 = vector.shape_cast %344 : vector<2x3x16x32xf32> to vector<96x32xf32>
    %c0_118 = arith.constant 0 : index
    %c0_119 = arith.constant 0 : index
    %346 = vector.load %arg18[%c0_118, %c0_119] : memref<96x32xf32, #tpu.memory_space<vmem>>, vector<96x32xf32>
    tpu.vector_store %arg18[%c0_118, %c0_119], %345 {strides = array<i32>} : memref<96x32xf32, #tpu.memory_space<vmem>>, vector<96x32xf32>,
    %c1_i32_120 = arith.constant 1 : i32
    %347 = arith.cmpi eq, %arg1, %c1_i32_120 : i32
    %348 = arith.extui %347 : i1 to i32
    %c0_i32_121 = arith.constant 0 : i32
    %349 = arith.cmpi ne, %348, %c0_i32_121 : i32
    scf.if %349 {
      %c0_122 = arith.constant 0 : index
      %c0_123 = arith.constant 0 : index
      %c0_124 = arith.constant 0 : index
      %c0_125 = arith.constant 0 : index
      %350 = vector.load %arg17[%c0_122, %c0_123, %c0_124, %c0_125] : memref<2x3x16x32xf32, #tpu.memory_space<vmem>>, vector<2x3x16x32xf32>
      tpu.vector_store %arg17[%c0_122, %c0_123, %c0_124, %c0_125], %344 {strides = array<i32>} : memref<2x3x16x32xf32, #tpu.memory_space<vmem>>, vector<2x3x16x32xf32>,
    } else {
    }
    return
  }
  func.func @transform_0(%arg0: i32, %arg1: i32) -> (i32, i32, i32, i32) {
    %c0_i32 = arith.constant 0 : i32
    %c0_i32_0 = arith.constant 0 : i32
    %c0_i32_1 = arith.constant 0 : i32
    %c0_i32_2 = arith.constant 0 : i32
    return %arg0, %c0_i32, %c0_i32_0, %c0_i32_1 : i32, i32, i32, i32
  }
  func.func @transform_1(%arg0: i32, %arg1: i32) -> (i32, i32, i32) {
    %c0_i32 = arith.constant 0 : i32
    %c0_i32_0 = arith.constant 0 : i32
    %c0_i32_1 = arith.constant 0 : i32
    return %arg1, %c0_i32, %c0_i32_0 : i32, i32, i32
  }
  func.func @transform_2(%arg0: i32, %arg1: i32) -> (i32, i32, i32) {
    %c0_i32 = arith.constant 0 : i32
    %c0_i32_0 = arith.constant 0 : i32
    %c0_i32_1 = arith.constant 0 : i32
    return %arg1, %c0_i32, %c0_i32_0 : i32, i32, i32
  }
  func.func @transform_3(%arg0: i32, %arg1: i32) -> (i32, i32, i32, i32) {
    %c0_i32 = arith.constant 0 : i32
    %c0_i32_0 = arith.constant 0 : i32
    %c0_i32_1 = arith.constant 0 : i32
    %c0_i32_2 = arith.constant 0 : i32
    return %arg1, %c0_i32, %c0_i32_0, %c0_i32_1 : i32, i32, i32, i32
  }
  func.func @transform_4(%arg0: i32, %arg1: i32) -> (i32, i32, i32) {
    %c0_i32 = arith.constant 0 : i32
    %c0_i32_0 = arith.constant 0 : i32
    %c0_i32_1 = arith.constant 0 : i32
    return %arg1, %c0_i32, %c0_i32_0 : i32, i32, i32
  }
  func.func @transform_5(%arg0: i32, %arg1: i32) -> (i32, i32, i32, i32) {
    %c0_i32 = arith.constant 0 : i32
    %c0_i32_0 = arith.constant 0 : i32
    %c0_i32_1 = arith.constant 0 : i32
    %c0_i32_2 = arith.constant 0 : i32
    return %arg1, %c0_i32, %c0_i32_0, %c0_i32_1 : i32, i32, i32, i32
  }
  func.func @transform_6(%arg0: i32, %arg1: i32) -> (i32, i32, i32) {
    %c0_i32 = arith.constant 0 : i32
    %c0_i32_0 = arith.constant 0 : i32
    %c0_i32_1 = arith.constant 0 : i32
    return %arg1, %c0_i32, %c0_i32_0 : i32, i32, i32
  }
  func.func @transform_7(%arg0: i32, %arg1: i32) -> (i32, i32, i32) {
    %c0_i32 = arith.constant 0 : i32
    %c0_i32_0 = arith.constant 0 : i32
    %c0_i32_1 = arith.constant 0 : i32
    return %arg1, %c0_i32, %c0_i32_0 : i32, i32, i32
  }
  func.func @transform_8(%arg0: i32, %arg1: i32) -> (i32, i32, i32) {
    %c0_i32 = arith.constant 0 : i32
    %c0_i32_0 = arith.constant 0 : i32
    %c0_i32_1 = arith.constant 0 : i32
    return %arg1, %c0_i32, %c0_i32_0 : i32, i32, i32
  }
  func.func @transform_9(%arg0: i32, %arg1: i32) -> (i32, i32, i32) {
    %c0_i32 = arith.constant 0 : i32
    %c0_i32_0 = arith.constant 0 : i32
    %c0_i32_1 = arith.constant 0 : i32
    return %arg1, %c0_i32, %c0_i32_0 : i32, i32, i32
  }
  func.func @transform_10(%arg0: i32, %arg1: i32) -> (i32, i32, i32) {
    %c0_i32 = arith.constant 0 : i32
    %c0_i32_0 = arith.constant 0 : i32
    %c0_i32_1 = arith.constant 0 : i32
    return %arg1, %c0_i32, %c0_i32_0 : i32, i32, i32
  }
  func.func @transform_11(%arg0: i32, %arg1: i32) -> (i32, i32, i32) {
    %c0_i32 = arith.constant 0 : i32
    %c0_i32_0 = arith.constant 0 : i32
    %c0_i32_1 = arith.constant 0 : i32
    return %arg1, %c0_i32, %c0_i32_0 : i32, i32, i32
  }
  func.func @transform_12(%arg0: i32, %arg1: i32) -> (i32, i32, i32) {
    %c0_i32 = arith.constant 0 : i32
    %c0_i32_0 = arith.constant 0 : i32
    %c0_i32_1 = arith.constant 0 : i32
    return %arg1, %c0_i32, %c0_i32_0 : i32, i32, i32
  }
  func.func @transform_13(%arg0: i32, %arg1: i32) -> i32 {
    %c0_i32 = arith.constant 0 : i32
    %c0_i32_0 = arith.constant 0 : i32
    return %c0_i32 : i32
  }
  func.func @transform_14(%arg0: i32, %arg1: i32) -> i32 {
    %c0_i32 = arith.constant 0 : i32
    %c0_i32_0 = arith.constant 0 : i32
    return %c0_i32 : i32
  }
  func.func @transform_15(%arg0: i32, %arg1: i32) -> (i32, i32, i32, i32) {
    %c0_i32 = arith.constant 0 : i32
    %c0_i32_0 = arith.constant 0 : i32
    %c0_i32_1 = arith.constant 0 : i32
    %c0_i32_2 = arith.constant 0 : i32
    return %arg0, %c0_i32, %c0_i32_0, %c0_i32_1 : i32, i32, i32, i32
  }
}

</mosaic_0001>

<llo_original>
// kernel: tpu_custom_call.1
$region0: #{tpu_custom_call.1}
  #allocation0 [shape = 'u32[]', space=smem, size = 0x4, offset = 0x4, fixed_abs, tag = 'smem constant byte address 0x4 - core index']
  #allocation1 [shape = 'u32[72,128]{1,0:T(1,128)}', space=vmem, size = 0x9000, scoped, tag = 'internal scratch']
  #allocation2 [shape = 'f32[96,32]{1,0:T(8,128)}', space=vmem, size = 0xc000, scoped, tag = 'scratch operand']
  %s0 = inlined_call_operand.vmem [shape: f32[2,3,16,32], index: 0, kind: input, shape index: {}]
  %s1 = inlined_call_operand.vmem [shape: f32[2,1,32], index: 1, kind: input, shape index: {}]
  %s2 = inlined_call_operand.vmem [shape: f32[2,1,32], index: 2, kind: input, shape index: {}]
  %s3 = inlined_call_operand.hbm [shape: bf16[2,3,32,32], index: 3, kind: input, shape index: {}]
  %s4 = inlined_call_operand.vmem [shape: f32[2,3,32], index: 4, kind: input, shape index: {}]
  %s5 = inlined_call_operand.vmem [shape: bf16[2,4,8,32], index: 5, kind: input, shape index: {}]
  %s6 = inlined_call_operand.vmem [shape: f32[2,1,32], index: 6, kind: input, shape index: {}]
  %s7 = inlined_call_operand.vmem [shape: f32[2,1,32], index: 7, kind: input, shape index: {}]
  %s8 = inlined_call_operand.vmem [shape: f32[2,1,32], index: 8, kind: input, shape index: {}]
  %s9 = inlined_call_operand.vmem [shape: bf16[2,32,128], index: 9, kind: input, shape index: {}]
  %s10 = inlined_call_operand.vmem [shape: f32[2,1,128], index: 10, kind: input, shape index: {}]
  %s11 = inlined_call_operand.vmem [shape: bf16[2,128,32], index: 11, kind: input, shape index: {}]
  %s12 = inlined_call_operand.vmem [shape: f32[2,1,32], index: 12, kind: input, shape index: {}]
  %s13 = inlined_call_operand.vmem [shape: f32[18], index: 13, kind: input, shape index: {}]
  %s14 = inlined_call_operand.vmem [shape: f32[6], index: 14, kind: input, shape index: {}]
  %s15 = inlined_call_operand.hbm [shape: f32[2,3,16,32], index: 15, kind: output, shape index: {}]
  %s16 = sld [smem:[#allocation0]]
  $region113: #{tpu_custom_call.1} parent=0
    _
  %s18 = ssub.s32 1, %s16
  %s19 = scalar_select 0, %s18, %s16
  $region1: #{tpu_custom_call.1} parent=0
    #allocation3 [shape = 'u8[49152]{0}', space=vmem, size = 0xc000, scoped, tag = 'input window, operand 3']
    #allocation4 [shape = 's32[2]{0}', space=sflag, size = 0x8, scoped, tag = 'scoped memory for tpu_custom_call.1']
    #allocation5 [shape = 's32[2]{0}', space=sflag, size = 0x8, scoped, tag = 'scoped memory for tpu_custom_call.1']
    #allocation6 [shape = 's32[2]{0}', space=sflag, size = 0x8, scoped, tag = 'scoped memory for tpu_custom_call.1']
    #allocation7 [shape = 'u8[512]{0}', space=smem, size = 0x200, scoped, tag = 'input window, operand 13, single buffered']
    #allocation8 [shape = 'u8[512]{0}', space=smem, size = 0x200, scoped, tag = 'input window, operand 14, single buffered']
    #allocation9 [shape = 's32[1]{0}', space=sflag, size = 0x4, scoped, tag = 'scoped memory for tpu_custom_call.1']
    #allocation10 [shape = 'u8[49152]{0}', space=vmem, size = 0xc000, scoped, tag = 'output window, operand 0, single buffered']
    %20 = vsyncpa [#allocation4], 0
    %s21 = scalar_lea.sflag [#allocation4], 1
    %22 = vsyncpa %s21, 0
    %23 = vsyncpa [#allocation6], 0
    %24 = vsyncpa [#allocation9], 0
    %25 = vsyncpa [#allocation5], 0
    loop: start=0, step=1, limit=4
    $region2: #{tpu_custom_call.1} parent=1 // loop_pre_header
      _
    $region3: #{tpu_custom_call.1} parent=1 // loop_header
      %s27 = sphi 0, %s31
      %p28 = scmp.ge.s32.totalorder %s27, 4
      %s34 = sphi 0, %s46
      %s35 = sphi 0, %s42
      %s36 = sphi 0, %s34
      %s37 = sphi 0, %s35
      %s38 = sphi 0, %s36
      %s39 = sphi 0, %s37
      %s49 = sphi 0, %s51
      %s52 = sphi 0, %s49
      %s53 = sphi 0, %s52
      %s69 = sphi 0, %s53
      %s75 = sphi 0, %s77
      %s78 = sphi 0, %s75
      %s79 = sphi 0, %s78
      %s95 = sphi 0, %s79
      %s101 = sphi 0, %s103
      %s104 = sphi 0, %s101
      %s105 = sphi 0, %s104
      %s121 = sphi 0, %s105
      %s127 = sphi 0, %s129
      %s130 = sphi 0, %s127
      %s131 = sphi 0, %s130
      %s147 = sphi 0, %s131
      %s153 = sphi 0, %s155
      %s156 = sphi 0, %s153
      %s157 = sphi 0, %s156
      %s173 = sphi 0, %s157
      %s179 = sphi 0, %s181
      %s182 = sphi 0, %s179
      %s183 = sphi 0, %s182
      %s199 = sphi 0, %s183
      %s205 = sphi 0, %s207
      %s208 = sphi 0, %s205
      %s209 = sphi 0, %s208
      %s225 = sphi 0, %s209
      %s231 = sphi 0, %s233
      %s234 = sphi 0, %s231
      %s235 = sphi 0, %s234
      %s251 = sphi 0, %s235
      %s257 = sphi 0, %s259
      %s260 = sphi 0, %s257
      %s261 = sphi 0, %s260
      %s277 = sphi 0, %s261
      %s283 = sphi 0, %s285
      %s286 = sphi 0, %s283
      %s287 = sphi 0, %s286
      %s303 = sphi 0, %s287
      %s309 = sphi 0, %s311
      %s312 = sphi 0, %s309
      %s313 = sphi 0, %s312
      %s329 = sphi 0, %s313
      %s335 = sphi 0, %s337
      %s338 = sphi 0, %s335
      %s339 = sphi 0, %s338
      %s355 = sphi 0, %s339
      %s361 = sphi 0, %s363
      %s364 = sphi 0, %s361
      %s365 = sphi 0, %s364
      %s381 = sphi 0, %s365
      %s385 = sphi 0, %s385
      %s387 = sphi 0, %s385
      %s388 = sphi 0, %s387
      %s402 = sphi 0, %s388
      %s406 = sphi 0, %s406
      %s408 = sphi 0, %s406
      %s409 = sphi 0, %s408
      %s423 = sphi 0, %s409
      %s429 = sphi 0, %s431
      %s432 = sphi 0, %s429
      %s433 = sphi 0, %s432
      %s449 = sphi 0, %s433
    $region4: #{tpu_custom_call.1} parent=1 // loop_header_branch
      %30 = sbr.rel (%p28) target = $region8
    $region5: #{tpu_custom_call.1} parent=1 // loop_body
      %s32 = ssub.s32 %s27, 1
      %s33 = ssub.s32 %s27, 2
      %s40 = sadd.s32 1, %s35
      %p41 = scmp.ge.s32.totalorder %s40, 2
      %s42 = scalar_select %p41, 0, %s40
      %s43 = sadd.s32 1, %s34
      %s44 = scalar_select %p41, %s43, %s34
      %p45 = scmp.ge.s32.totalorder %s44, 1
      %s46 = scalar_select %p45, 0, %s44
      %s47 = ssub.s32 %s34, %s46
      %p48 = scmp.eq.s32.totalorder %s47, 0
      %s50 = sadd.s32 %s49, 1
      %s51 = scalar_select %p48, %s49, %s50
      %p54 = pneg %p48
      %p55 = scmp.eq.s32.totalorder %s27, 1
      %p56 = por %p54, %p55
      %p57 = scmp.ne.s32.totalorder %s49, %s52
      %p58 = scmp.eq.s32.totalorder %s27, 0
      %p59 = por %p57, %p58
      %p60 = scmp.ne.s32.totalorder %s49, %s52
      %p61 = scmp.eq.s32.totalorder %s32, 1
      %p62 = por %p60, %p61
      %p63 = scmp.ne.s32.totalorder %s52, %s53
      %p64 = scmp.eq.s32.totalorder %s32, 0
      %p65 = por %p63, %p64
      %p66 = scmp.ne.s32.totalorder %s52, %s53
      %p67 = scmp.eq.s32.totalorder %s33, 1
      %p68 = por %p66, %p67
      %p70 = scmp.ne.s32.totalorder %s53, %s69
      %p71 = scmp.eq.s32.totalorder %s33, 0
      %p72 = por %p70, %p71
      %s73 = ssub.s32 %s35, %s42
      %p74 = scmp.eq.s32.totalorder %s73, 0
      %s76 = sadd.s32 %s75, 1
      %s77 = scalar_select %p74, %s75, %s76
      %p80 = pneg %p74
      %p81 = scmp.eq.s32.totalorder %s27, 1
      %p82 = por %p80, %p81
      %p83 = scmp.ne.s32.totalorder %s75, %s78
      %p84 = scmp.eq.s32.totalorder %s27, 0
      %p85 = por %p83, %p84
      %p86 = scmp.ne.s32.totalorder %s75, %s78
      %p87 = scmp.eq.s32.totalorder %s32, 1
      %p88 = por %p86, %p87
      %p89 = scmp.ne.s32.totalorder %s78, %s79
      %p90 = scmp.eq.s32.totalorder %s32, 0
      %p91 = por %p89, %p90
      %p92 = scmp.ne.s32.totalorder %s78, %s79
      %p93 = scmp.eq.s32.totalorder %s33, 1
      %p94 = por %p92, %p93
      %p96 = scmp.ne.s32.totalorder %s79, %s95
      %p97 = scmp.eq.s32.totalorder %s33, 0
      %p98 = por %p96, %p97
      %s99 = ssub.s32 %s35, %s42
      %p100 = scmp.eq.s32.totalorder %s99, 0
      %s102 = sadd.s32 %s101, 1
      %s103 = scalar_select %p100, %s101, %s102
      %p106 = pneg %p100
      %p107 = scmp.eq.s32.totalorder %s27, 1
      %p108 = por %p106, %p107
      %p109 = scmp.ne.s32.totalorder %s101, %s104
      %p110 = scmp.eq.s32.totalorder %s27, 0
      %p111 = por %p109, %p110
      %p112 = scmp.ne.s32.totalorder %s101, %s104
      %p113 = scmp.eq.s32.totalorder %s32, 1
      %p114 = por %p112, %p113
      %p115 = scmp.ne.s32.totalorder %s104, %s105
      %p116 = scmp.eq.s32.totalorder %s32, 0
      %p117 = por %p115, %p116
      %p118 = scmp.ne.s32.totalorder %s104, %s105
      %p119 = scmp.eq.s32.totalorder %s33, 1
      %p120 = por %p118, %p119
      %p122 = scmp.ne.s32.totalorder %s105, %s121
      %p123 = scmp.eq.s32.totalorder %s33, 0
      %p124 = por %p122, %p123
      %s125 = ssub.s32 %s35, %s42
      %p126 = scmp.eq.s32.totalorder %s125, 0
      %s128 = sadd.s32 %s127, 1
      %s129 = scalar_select %p126, %s127, %s128
      %p132 = pneg %p126
      %p133 = scmp.eq.s32.totalorder %s27, 1
      %p134 = por %p132, %p133
      %p135 = scmp.ne.s32.totalorder %s127, %s130
      %p136 = scmp.eq.s32.totalorder %s27, 0
      %p137 = por %p135, %p136
      %p138 = scmp.ne.s32.totalorder %s127, %s130
      %p139 = scmp.eq.s32.totalorder %s32, 1
      %p140 = por %p138, %p139
      %p141 = scmp.ne.s32.totalorder %s130, %s131
      %p142 = scmp.eq.s32.totalorder %s32, 0
      %p143 = por %p141, %p142
      %p144 = scmp.ne.s32.totalorder %s130, %s131
      %p145 = scmp.eq.s32.totalorder %s33, 1
      %p146 = por %p144, %p145
      %p148 = scmp.ne.s32.totalorder %s131, %s147
      %p149 = scmp.eq.s32.totalorder %s33, 0
      %p150 = por %p148, %p149
      %s151 = ssub.s32 %s35, %s42
      %p152 = scmp.eq.s32.totalorder %s151, 0
      %s154 = sadd.s32 %s153, 1
      %s155 = scalar_select %p152, %s153, %s154
      %p158 = pneg %p152
      %p159 = scmp.eq.s32.totalorder %s27, 1
      %p160 = por %p158, %p159
      %p161 = scmp.ne.s32.totalorder %s153, %s156
      %p162 = scmp.eq.s32.totalorder %s27, 0
      %p163 = por %p161, %p162
      %p164 = scmp.ne.s32.totalorder %s153, %s156
      %p165 = scmp.eq.s32.totalorder %s32, 1
      %p166 = por %p164, %p165
      %p167 = scmp.ne.s32.totalorder %s156, %s157
      %p168 = scmp.eq.s32.totalorder %s32, 0
      %p169 = por %p167, %p168
      %p170 = scmp.ne.s32.totalorder %s156, %s157
      %p171 = scmp.eq.s32.totalorder %s33, 1
      %p172 = por %p170, %p171
      %p174 = scmp.ne.s32.totalorder %s157, %s173
      %p175 = scmp.eq.s32.totalorder %s33, 0
      %p176 = por %p174, %p175
      %s177 = ssub.s32 %s35, %s42
      %p178 = scmp.eq.s32.totalorder %s177, 0
      %s180 = sadd.s32 %s179, 1
      %s181 = scalar_select %p178, %s179, %s180
      %p184 = pneg %p178
      %p185 = scmp.eq.s32.totalorder %s27, 1
      %p186 = por %p184, %p185
      %p187 = scmp.ne.s32.totalorder %s179, %s182
      %p188 = scmp.eq.s32.totalorder %s27, 0
      %p189 = por %p187, %p188
      %p190 = scmp.ne.s32.totalorder %s179, %s182
      %p191 = scmp.eq.s32.totalorder %s32, 1
      %p192 = por %p190, %p191
      %p193 = scmp.ne.s32.totalorder %s182, %s183
      %p194 = scmp.eq.s32.totalorder %s32, 0
      %p195 = por %p193, %p194
      %p196 = scmp.ne.s32.totalorder %s182, %s183
      %p197 = scmp.eq.s32.totalorder %s33, 1
      %p198 = por %p196, %p197
      %p200 = scmp.ne.s32.totalorder %s183, %s199
      %p201 = scmp.eq.s32.totalorder %s33, 0
      %p202 = por %p200, %p201
      %s203 = ssub.s32 %s35, %s42
      %p204 = scmp.eq.s32.totalorder %s203, 0
      %s206 = sadd.s32 %s205, 1
      %s207 = scalar_select %p204, %s205, %s206
      %p210 = pneg %p204
      %p211 = scmp.eq.s32.totalorder %s27, 1
      %p212 = por %p210, %p211
      %p213 = scmp.ne.s32.totalorder %s205, %s208
      %p214 = scmp.eq.s32.totalorder %s27, 0
      %p215 = por %p213, %p214
      %p216 = scmp.ne.s32.totalorder %s205, %s208
      %p217 = scmp.eq.s32.totalorder %s32, 1
      %p218 = por %p216, %p217
      %p219 = scmp.ne.s32.totalorder %s208, %s209
      %p220 = scmp.eq.s32.totalorder %s32, 0
      %p221 = por %p219, %p220
      %p222 = scmp.ne.s32.totalorder %s208, %s209
      %p223 = scmp.eq.s32.totalorder %s33, 1
      %p224 = por %p222, %p223
      %p226 = scmp.ne.s32.totalorder %s209, %s225
      %p227 = scmp.eq.s32.totalorder %s33, 0
      %p228 = por %p226, %p227
      %s229 = ssub.s32 %s35, %s42
      %p230 = scmp.eq.s32.totalorder %s229, 0
      %s232 = sadd.s32 %s231, 1
      %s233 = scalar_select %p230, %s231, %s232
      %p236 = pneg %p230
      %p237 = scmp.eq.s32.totalorder %s27, 1
      %p238 = por %p236, %p237
      %p239 = scmp.ne.s32.totalorder %s231, %s234
      %p240 = scmp.eq.s32.totalorder %s27, 0
      %p241 = por %p239, %p240
      %p242 = scmp.ne.s32.totalorder %s231, %s234
      %p243 = scmp.eq.s32.totalorder %s32, 1
      %p244 = por %p242, %p243
      %p245 = scmp.ne.s32.totalorder %s234, %s235
      %p246 = scmp.eq.s32.totalorder %s32, 0
      %p247 = por %p245, %p246
      %p248 = scmp.ne.s32.totalorder %s234, %s235
      %p249 = scmp.eq.s32.totalorder %s33, 1
      %p250 = por %p248, %p249
      %p252 = scmp.ne.s32.totalorder %s235, %s251
      %p253 = scmp.eq.s32.totalorder %s33, 0
      %p254 = por %p252, %p253
      %s255 = ssub.s32 %s35, %s42
      %p256 = scmp.eq.s32.totalorder %s255, 0
      %s258 = sadd.s32 %s257, 1
      %s259 = scalar_select %p256, %s257, %s258
      %p262 = pneg %p256
      %p263 = scmp.eq.s32.totalorder %s27, 1
      %p264 = por %p262, %p263
      %p265 = scmp.ne.s32.totalorder %s257, %s260
      %p266 = scmp.eq.s32.totalorder %s27, 0
      %p267 = por %p265, %p266
      %p268 = scmp.ne.s32.totalorder %s257, %s260
      %p269 = scmp.eq.s32.totalorder %s32, 1
      %p270 = por %p268, %p269
      %p271 = scmp.ne.s32.totalorder %s260, %s261
      %p272 = scmp.eq.s32.totalorder %s32, 0
      %p273 = por %p271, %p272
      %p274 = scmp.ne.s32.totalorder %s260, %s261
      %p275 = scmp.eq.s32.totalorder %s33, 1
      %p276 = por %p274, %p275
      %p278 = scmp.ne.s32.totalorder %s261, %s277
      %p279 = scmp.eq.s32.totalorder %s33, 0
      %p280 = por %p278, %p279
      %s281 = ssub.s32 %s35, %s42
      %p282 = scmp.eq.s32.totalorder %s281, 0
      %s284 = sadd.s32 %s283, 1
      %s285 = scalar_select %p282, %s283, %s284
      %p288 = pneg %p282
      %p289 = scmp.eq.s32.totalorder %s27, 1
      %p290 = por %p288, %p289
      %p291 = scmp.ne.s32.totalorder %s283, %s286
      %p292 = scmp.eq.s32.totalorder %s27, 0
      %p293 = por %p291, %p292
      %p294 = scmp.ne.s32.totalorder %s283, %s286
      %p295 = scmp.eq.s32.totalorder %s32, 1
      %p296 = por %p294, %p295
      %p297 = scmp.ne.s32.totalorder %s286, %s287
      %p298 = scmp.eq.s32.totalorder %s32, 0
      %p299 = por %p297, %p298
      %p300 = scmp.ne.s32.totalorder %s286, %s287
      %p301 = scmp.eq.s32.totalorder %s33, 1
      %p302 = por %p300, %p301
      %p304 = scmp.ne.s32.totalorder %s287, %s303
      %p305 = scmp.eq.s32.totalorder %s33, 0
      %p306 = por %p304, %p305
      %s307 = ssub.s32 %s35, %s42
      %p308 = scmp.eq.s32.totalorder %s307, 0
      %s310 = sadd.s32 %s309, 1
      %s311 = scalar_select %p308, %s309, %s310
      %p314 = pneg %p308
      %p315 = scmp.eq.s32.totalorder %s27, 1
      %p316 = por %p314, %p315
      %p317 = scmp.ne.s32.totalorder %s309, %s312
      %p318 = scmp.eq.s32.totalorder %s27, 0
      %p319 = por %p317, %p318
      %p320 = scmp.ne.s32.totalorder %s309, %s312
      %p321 = scmp.eq.s32.totalorder %s32, 1
      %p322 = por %p320, %p321
      %p323 = scmp.ne.s32.totalorder %s312, %s313
      %p324 = scmp.eq.s32.totalorder %s32, 0
      %p325 = por %p323, %p324
      %p326 = scmp.ne.s32.totalorder %s312, %s313
      %p327 = scmp.eq.s32.totalorder %s33, 1
      %p328 = por %p326, %p327
      %p330 = scmp.ne.s32.totalorder %s313, %s329
      %p331 = scmp.eq.s32.totalorder %s33, 0
      %p332 = por %p330, %p331
      %s333 = ssub.s32 %s35, %s42
      %p334 = scmp.eq.s32.totalorder %s333, 0
      %s336 = sadd.s32 %s335, 1
      %s337 = scalar_select %p334, %s335, %s336
      %p340 = pneg %p334
      %p341 = scmp.eq.s32.totalorder %s27, 1
      %p342 = por %p340, %p341
      %p343 = scmp.ne.s32.totalorder %s335, %s338
      %p344 = scmp.eq.s32.totalorder %s27, 0
      %p345 = por %p343, %p344
      %p346 = scmp.ne.s32.totalorder %s335, %s338
      %p347 = scmp.eq.s32.totalorder %s32, 1
      %p348 = por %p346, %p347
      %p349 = scmp.ne.s32.totalorder %s338, %s339
      %p350 = scmp.eq.s32.totalorder %s32, 0
      %p351 = por %p349, %p350
      %p352 = scmp.ne.s32.totalorder %s338, %s339
      %p353 = scmp.eq.s32.totalorder %s33, 1
      %p354 = por %p352, %p353
      %p356 = scmp.ne.s32.totalorder %s339, %s355
      %p357 = scmp.eq.s32.totalorder %s33, 0
      %p358 = por %p356, %p357
      %s359 = ssub.s32 %s35, %s42
      %p360 = scmp.eq.s32.totalorder %s359, 0
      %s362 = sadd.s32 %s361, 1
      %s363 = scalar_select %p360, %s361, %s362
      %p366 = pneg %p360
      %p367 = scmp.eq.s32.totalorder %s27, 1
      %p368 = por %p366, %p367
      %p369 = scmp.ne.s32.totalorder %s361, %s364
      %p370 = scmp.eq.s32.totalorder %s27, 0
      %p371 = por %p369, %p370
      %p372 = scmp.ne.s32.totalorder %s361, %s364
      %p373 = scmp.eq.s32.totalorder %s32, 1
      %p374 = por %p372, %p373
      %p375 = scmp.ne.s32.totalorder %s364, %s365
      %p376 = scmp.eq.s32.totalorder %s32, 0
      %p377 = por %p375, %p376
      %p378 = scmp.ne.s32.totalorder %s364, %s365
      %p379 = scmp.eq.s32.totalorder %s33, 1
      %p380 = por %p378, %p379
      %p382 = scmp.ne.s32.totalorder %s365, %s381
      %p383 = scmp.eq.s32.totalorder %s33, 0
      %p384 = por %p382, %p383
      %s386 = sadd.s32 %s385, 1
      %p389 = scmp.eq.s32.totalorder %s27, 1
      %p390 = scmp.ne.s32.totalorder %s385, %s387
      %p391 = scmp.eq.s32.totalorder %s27, 0
      %p392 = por %p390, %p391
      %p393 = scmp.ne.s32.totalorder %s385, %s387
      %p394 = scmp.eq.s32.totalorder %s32, 1
      %p395 = por %p393, %p394
      %p396 = scmp.ne.s32.totalorder %s387, %s388
      %p397 = scmp.eq.s32.totalorder %s32, 0
      %p398 = por %p396, %p397
      %p399 = scmp.ne.s32.totalorder %s387, %s388
      %p400 = scmp.eq.s32.totalorder %s33, 1
      %p401 = por %p399, %p400
      %p403 = scmp.ne.s32.totalorder %s388, %s402
      %p404 = scmp.eq.s32.totalorder %s33, 0
      %p405 = por %p403, %p404
      %s407 = sadd.s32 %s406, 1
      %p410 = scmp.eq.s32.totalorder %s27, 1
      %p411 = scmp.ne.s32.totalorder %s406, %s408
      %p412 = scmp.eq.s32.totalorder %s27, 0
      %p413 = por %p411, %p412
      %p414 = scmp.ne.s32.totalorder %s406, %s408
      %p415 = scmp.eq.s32.totalorder %s32, 1
      %p416 = por %p414, %p415
      %p417 = scmp.ne.s32.totalorder %s408, %s409
      %p418 = scmp.eq.s32.totalorder %s32, 0
      %p419 = por %p417, %p418
      %p420 = scmp.ne.s32.totalorder %s408, %s409
      %p421 = scmp.eq.s32.totalorder %s33, 1
      %p422 = por %p420, %p421
      %p424 = scmp.ne.s32.totalorder %s409, %s423
      %p425 = scmp.eq.s32.totalorder %s33, 0
      %p426 = por %p424, %p425
      %s427 = ssub.s32 %s34, %s46
      %p428 = scmp.eq.s32.totalorder %s427, 0
      %s430 = sadd.s32 %s429, 1
      %s431 = scalar_select %p428, %s429, %s430
      %p434 = pneg %p428
      %p435 = scmp.eq.s32.totalorder %s27, 1
      %p436 = por %p434, %p435
      %p437 = scmp.ne.s32.totalorder %s429, %s432
      %p438 = scmp.eq.s32.totalorder %s27, 0
      %p439 = por %p437, %p438
      %p440 = scmp.ne.s32.totalorder %s429, %s432
      %p441 = scmp.eq.s32.totalorder %s32, 1
      %p442 = por %p440, %p441
      %p443 = scmp.ne.s32.totalorder %s432, %s433
      %p444 = scmp.eq.s32.totalorder %s32, 0
      %p445 = por %p443, %p444
      %p446 = scmp.ne.s32.totalorder %s432, %s433
      %p447 = scmp.eq.s32.totalorder %s33, 1
      %p448 = por %p446, %p447
      %p450 = scmp.ne.s32.totalorder %s433, %s449
      %p451 = scmp.eq.s32.totalorder %s33, 0
      %p452 = por %p450, %p451
      %p453 = scmp.le.s32.totalorder 1, %s27
      %p454 = scmp.lt.s32.totalorder %s27, 3
      %p455 = pnand %p453, %p454
      %p456 = pneg %p455
      // Predicated region
      $region9: #{tpu_custom_call.1} parent=5 // pred_check
        _
      $region10: #{tpu_custom_call.1} parent=5 // pred_check_branch
        %458 = sbr.rel (%p455) target = $region12
      $region11: #{tpu_custom_call.1} parent=5 // pred_region
        %s459 = ssub.s32 %s27, 1
        // Predicated region
        $region13: #{tpu_custom_call.1} parent=11 // pred_check
          %p460 = pneg %p65
        $region14: #{tpu_custom_call.1} parent=11 // pred_check_branch
          %462 = sbr.rel (%p460) target = $region16
        $region15: #{tpu_custom_call.1} parent=11 // pred_region
          %s463 = smul.u32 2, %s36
          %p464 = scmp.lt.s32.totalorder %s463, 1
          %s465 = scalar_select %p464, %s463, 1
          %s466 = smul.addr %s465, 6
          %s467 = smul.addr %s466, 8
          %s468 = scalar_lea.vmem %s0, %s467
          %s469 = smul.u32 2, %s36
        $region16: #{tpu_custom_call.1} parent=11 // pred_fallthru
          _
        // Predicated region
        $region17: #{tpu_custom_call.1} parent=11 // pred_check
          %p470 = pneg %p398
        $region18: #{tpu_custom_call.1} parent=11 // pred_check_branch
          %472 = sbr.rel (%p470) target = $region20
        $region19: #{tpu_custom_call.1} parent=11 // pred_region
          %474 = vsyncadd [#allocation6], 0
          %s476 = sshll.u32 %s13, 4
          %s477 = int_to_ptr.vmem [resolvable:$true] %s476
          %479 = dma.vmem_to_smem %s477, 16, [#allocation7], [#allocation6]
        $region20: #{tpu_custom_call.1} parent=11 // pred_fallthru
          _
        // Predicated region
        $region21: #{tpu_custom_call.1} parent=11 // pred_check
          %p480 = pneg %p419
        $region22: #{tpu_custom_call.1} parent=11 // pred_check_branch
          %482 = sbr.rel (%p480) target = $region24
        $region23: #{tpu_custom_call.1} parent=11 // pred_region
          %484 = vsyncadd [#allocation9], 0
          %s486 = sshll.u32 %s14, 4
          %s487 = int_to_ptr.vmem [resolvable:$true] %s486
          %489 = dma.vmem_to_smem %s487, 16, [#allocation8], [#allocation9]
        $region24: #{tpu_custom_call.1} parent=11 // pred_fallthru
          _
      $region12: #{tpu_custom_call.1} parent=5 // pred_fallthru
        _
      %p490 = scmp.lt.s32.totalorder %s27, 2
      // Predicated region
      $region25: #{tpu_custom_call.1} parent=5 // pred_check
        %p491 = pneg %p490
      $region26: #{tpu_custom_call.1} parent=5 // pred_check_branch
        %493 = sbr.rel (%p491) target = $region28
      $region27: #{tpu_custom_call.1} parent=5 // pred_region
        // Predicated region
        $region29: #{tpu_custom_call.1} parent=27 // pred_check
          %p494 = pneg %p85
        $region30: #{tpu_custom_call.1} parent=27 // pred_check_branch
          %496 = sbr.rel (%p494) target = $region32
        $region31: #{tpu_custom_call.1} parent=27 // pred_region
          %p497 = scmp.lt.s32.totalorder %s35, 1
          %s498 = scalar_select %p497, %s35, 1
          %s499 = scalar_lea.vmem %s1, %s498
        $region32: #{tpu_custom_call.1} parent=27 // pred_fallthru
          _
        // Predicated region
        $region33: #{tpu_custom_call.1} parent=27 // pred_check
          %p500 = pneg %p111
        $region34: #{tpu_custom_call.1} parent=27 // pred_check_branch
          %502 = sbr.rel (%p500) target = $region36
        $region35: #{tpu_custom_call.1} parent=27 // pred_region
          %p503 = scmp.lt.s32.totalorder %s35, 1
          %s504 = scalar_select %p503, %s35, 1
          %s505 = scalar_lea.vmem %s2, %s504
        $region36: #{tpu_custom_call.1} parent=27 // pred_fallthru
          _
        // Predicated region
        $region37: #{tpu_custom_call.1} parent=27 // pred_check
          %p506 = pneg %p137
        $region38: #{tpu_custom_call.1} parent=27 // pred_check_branch
          %508 = sbr.rel (%p506) target = $region40
        $region39: #{tpu_custom_call.1} parent=27 // pred_region
          %s509 = sand.u32 %s127, 1
          %s510 = scalar_lea.sflag [#allocation4], %s509
          %s511 = sand.u32 %s127, 1
          %s512 = smul.addr %s511, 48
          %s513 = scalar_lea.vmem [#allocation3], %s512
          %515 = vsyncadd %s510, 0
          %s516 = smul.addr %s35, 12
          %s517 = smul.addr %s516, 4
          %s518 = scalar_lea.hbm %s3, %s517
          %s519 = sshll.u32 %s518, 4
          %s520 = int_to_ptr.hbm [resolvable:$true] %s519
          %s521 = sshll.u32 %s513, 4
          %s522 = int_to_ptr.vmem [resolvable:$true] %s521
          %527 = dma.hbm_to_vmem [thread:$0]  %s520, 768, %s522, %s510, 64, 64, 4
        $region40: #{tpu_custom_call.1} parent=27 // pred_fallthru
          _
        // Predicated region
        $region41: #{tpu_custom_call.1} parent=27 // pred_check
          %p528 = pneg %p163
        $region42: #{tpu_custom_call.1} parent=27 // pred_check_branch
          %530 = sbr.rel (%p528) target = $region44
        $region43: #{tpu_custom_call.1} parent=27 // pred_region
          %p531 = scmp.lt.s32.totalorder %s35, 1
          %s532 = scalar_select %p531, %s35, 1
          %s533 = smul.addr %s532, 4
          %s534 = scalar_lea.vmem %s4, %s533
        $region44: #{tpu_custom_call.1} parent=27 // pred_fallthru
          _
        // Predicated region
        $region45: #{tpu_custom_call.1} parent=27 // pred_check
          %p535 = pneg %p189
        $region46: #{tpu_custom_call.1} parent=27 // pred_check_branch
          %537 = sbr.rel (%p535) target = $region48
        $region47: #{tpu_custom_call.1} parent=27 // pred_region
          %p538 = scmp.lt.s32.totalorder %s35, 1
          %s539 = scalar_select %p538, %s35, 1
          %s540 = smul.addr %s539, 4
          %s541 = smul.addr %s540, 4
          %s542 = scalar_lea.vmem %s5, %s541
        $region48: #{tpu_custom_call.1} parent=27 // pred_fallthru
          _
        // Predicated region
        $region49: #{tpu_custom_call.1} parent=27 // pred_check
          %p543 = pneg %p215
        $region50: #{tpu_custom_call.1} parent=27 // pred_check_branch
          %545 = sbr.rel (%p543) target = $region52
        $region51: #{tpu_custom_call.1} parent=27 // pred_region
          %p546 = scmp.lt.s32.totalorder %s35, 1
          %s547 = scalar_select %p546, %s35, 1
          %s548 = scalar_lea.vmem %s6, %s547
        $region52: #{tpu_custom_call.1} parent=27 // pred_fallthru
          _
        // Predicated region
        $region53: #{tpu_custom_call.1} parent=27 // pred_check
          %p549 = pneg %p241
        $region54: #{tpu_custom_call.1} parent=27 // pred_check_branch
          %551 = sbr.rel (%p549) target = $region56
        $region55: #{tpu_custom_call.1} parent=27 // pred_region
          %p552 = scmp.lt.s32.totalorder %s35, 1
          %s553 = scalar_select %p552, %s35, 1
          %s554 = scalar_lea.vmem %s7, %s553
        $region56: #{tpu_custom_call.1} parent=27 // pred_fallthru
          _
        // Predicated region
        $region57: #{tpu_custom_call.1} parent=27 // pred_check
          %p555 = pneg %p267
        $region58: #{tpu_custom_call.1} parent=27 // pred_check_branch
          %557 = sbr.rel (%p555) target = $region60
        $region59: #{tpu_custom_call.1} parent=27 // pred_region
          %p558 = scmp.lt.s32.totalorder %s35, 1
          %s559 = scalar_select %p558, %s35, 1
          %s560 = scalar_lea.vmem %s8, %s559
        $region60: #{tpu_custom_call.1} parent=27 // pred_fallthru
          _
        // Predicated region
        $region61: #{tpu_custom_call.1} parent=27 // pred_check
          %p561 = pneg %p293
        $region62: #{tpu_custom_call.1} parent=27 // pred_check_branch
          %563 = sbr.rel (%p561) target = $region64
        $region63: #{tpu_custom_call.1} parent=27 // pred_region
          %p564 = scmp.lt.s32.totalorder %s35, 1
          %s565 = scalar_select %p564, %s35, 1
          %s566 = smul.addr %s565, 4
          %s567 = smul.addr %s566, 4
          %s568 = scalar_lea.vmem %s9, %s567
        $region64: #{tpu_custom_call.1} parent=27 // pred_fallthru
          _
        // Predicated region
        $region65: #{tpu_custom_call.1} parent=27 // pred_check
          %p569 = pneg %p319
        $region66: #{tpu_custom_call.1} parent=27 // pred_check_branch
          %571 = sbr.rel (%p569) target = $region68
        $region67: #{tpu_custom_call.1} parent=27 // pred_region
          %p572 = scmp.lt.s32.totalorder %s35, 1
          %s573 = scalar_select %p572, %s35, 1
          %s574 = scalar_lea.vmem %s10, %s573
        $region68: #{tpu_custom_call.1} parent=27 // pred_fallthru
          _
        // Predicated region
        $region69: #{tpu_custom_call.1} parent=27 // pred_check
          %p575 = pneg %p345
        $region70: #{tpu_custom_call.1} parent=27 // pred_check_branch
          %577 = sbr.rel (%p575) target = $region72
        $region71: #{tpu_custom_call.1} parent=27 // pred_region
          %p578 = scmp.lt.s32.totalorder %s35, 1
          %s579 = scalar_select %p578, %s35, 1
          %s580 = smul.addr %s579, 16
          %s581 = smul.addr %s580, 4
          %s582 = scalar_lea.vmem %s11, %s581
        $region72: #{tpu_custom_call.1} parent=27 // pred_fallthru
          _
        // Predicated region
        $region73: #{tpu_custom_call.1} parent=27 // pred_check
          %p583 = pneg %p371
        $region74: #{tpu_custom_call.1} parent=27 // pred_check_branch
          %585 = sbr.rel (%p583) target = $region76
        $region75: #{tpu_custom_call.1} parent=27 // pred_region
          %p586 = scmp.lt.s32.totalorder %s35, 1
          %s587 = scalar_select %p586, %s35, 1
          %s588 = scalar_lea.vmem %s12, %s587
        $region76: #{tpu_custom_call.1} parent=27 // pred_fallthru
          _
      $region28: #{tpu_custom_call.1} parent=5 // pred_fallthru
        _
      %p589 = scmp.le.s32.totalorder 1, %s27
      %p590 = scmp.lt.s32.totalorder %s27, 3
      %p591 = pnand %p589, %p590
      %p592 = pneg %p591
      // Predicated region
      $region77: #{tpu_custom_call.1} parent=5 // pred_check
        _
      $region78: #{tpu_custom_call.1} parent=5 // pred_check_branch
        %594 = sbr.rel (%p591) target = $region80
      $region79: #{tpu_custom_call.1} parent=5 // pred_region
        %s595 = ssub.s32 %s27, 1
        %s596 = sand.u32 %s130, 1
        %s597 = scalar_lea.sflag [#allocation4], %s596
        %s598 = sand.u32 %s130, 1
        %s599 = smul.addr %s598, 48
        %s600 = scalar_lea.vmem [#allocation3], %s599
        // Predicated region
        $region81: #{tpu_custom_call.1} parent=79 // pred_check
          %p601 = pneg %p143
        $region82: #{tpu_custom_call.1} parent=79 // pred_check_branch
          %603 = sbr.rel (%p601) target = $region84
        $region83: #{tpu_custom_call.1} parent=79 // pred_region
          %605 = dma.done %s597, 768
        $region84: #{tpu_custom_call.1} parent=79 // pred_fallthru
          _
        // Predicated region
        $region85: #{tpu_custom_call.1} parent=79 // pred_check
          %p606 = pneg %p398
        $region86: #{tpu_custom_call.1} parent=79 // pred_check_branch
          %608 = sbr.rel (%p606) target = $region88
        $region87: #{tpu_custom_call.1} parent=79 // pred_region
          %610 = dma.done [#allocation6], 16
        $region88: #{tpu_custom_call.1} parent=79 // pred_fallthru
          _
        // Predicated region
        $region89: #{tpu_custom_call.1} parent=79 // pred_check
          %p611 = pneg %p419
        $region90: #{tpu_custom_call.1} parent=79 // pred_check_branch
          %613 = sbr.rel (%p611) target = $region92
        $region91: #{tpu_custom_call.1} parent=79 // pred_region
          %615 = dma.done [#allocation9], 16
        $region92: #{tpu_custom_call.1} parent=79 // pred_fallthru
          _
        %616 = sfence
        %s617 = smul.u32 2, %s36
        %p618 = scmp.lt.s32.totalorder %s617, 1
        %s619 = scalar_select %p618, %s617, 1
        %s620 = smul.addr %s619, 6
        %s621 = smul.addr %s620, 8
        %s622 = scalar_lea.vmem %s0, %s621
        %p623 = pneg %p65
        %p624 = pneg %p62
        %p625 = scmp.lt.s32.totalorder %s37, 1
        %s626 = scalar_select %p625, %s37, 1
        %s627 = scalar_lea.vmem %s1, %s626
        %p628 = pneg %p91
        %p629 = pneg %p88
        %p630 = scmp.lt.s32.totalorder %s37, 1
        %s631 = scalar_select %p630, %s37, 1
        %s632 = scalar_lea.vmem %s2, %s631
        %p633 = pneg %p117
        %p634 = pneg %p114
        %s635 = sand.u32 %s130, 1
        %s636 = scalar_lea.sflag [#allocation4], %s635
        %s637 = sand.u32 %s130, 1
        %s638 = smul.addr %s637, 48
        %s639 = scalar_lea.vmem [#allocation3], %s638
        %p640 = pneg %p143
        %p641 = pneg %p140
        %p642 = scmp.lt.s32.totalorder %s37, 1
        %s643 = scalar_select %p642, %s37, 1
        %s644 = smul.addr %s643, 4
        %s645 = scalar_lea.vmem %s4, %s644
        %p646 = pneg %p169
        %p647 = pneg %p166
        %p648 = scmp.lt.s32.totalorder %s37, 1
        %s649 = scalar_select %p648, %s37, 1
        %s650 = smul.addr %s649, 4
        %s651 = smul.addr %s650, 4
        %s652 = scalar_lea.vmem %s5, %s651
        %p653 = pneg %p195
        %p654 = pneg %p192
        %p655 = scmp.lt.s32.totalorder %s37, 1
        %s656 = scalar_select %p655, %s37, 1
        %s657 = scalar_lea.vmem %s6, %s656
        %p658 = pneg %p221
        %p659 = pneg %p218
        %p660 = scmp.lt.s32.totalorder %s37, 1
        %s661 = scalar_select %p660, %s37, 1
        %s662 = scalar_lea.vmem %s7, %s661
        %p663 = pneg %p247
        %p664 = pneg %p244
        %p665 = scmp.lt.s32.totalorder %s37, 1
        %s666 = scalar_select %p665, %s37, 1
        %s667 = scalar_lea.vmem %s8, %s666
        %p668 = pneg %p273
        %p669 = pneg %p270
        %p670 = scmp.lt.s32.totalorder %s37, 1
        %s671 = scalar_select %p670, %s37, 1
        %s672 = smul.addr %s671, 4
        %s673 = smul.addr %s672, 4
        %s674 = scalar_lea.vmem %s9, %s673
        %p675 = pneg %p299
        %p676 = pneg %p296
        %p677 = scmp.lt.s32.totalorder %s37, 1
        %s678 = scalar_select %p677, %s37, 1
        %s679 = scalar_lea.vmem %s10, %s678
        %p680 = pneg %p325
        %p681 = pneg %p322
        %p682 = scmp.lt.s32.totalorder %s37, 1
        %s683 = scalar_select %p682, %s37, 1
        %s684 = smul.addr %s683, 16
        %s685 = smul.addr %s684, 4
        %s686 = scalar_lea.vmem %s11, %s685
        %p687 = pneg %p351
        %p688 = pneg %p348
        %p689 = scmp.lt.s32.totalorder %s37, 1
        %s690 = scalar_select %p689, %s37, 1
        %s691 = scalar_lea.vmem %s12, %s690
        %p692 = pneg %p377
        %p693 = pneg %p374
        %p694 = pneg %p398
        %p695 = pneg %p395
        %p696 = pneg %p419
        %p697 = pneg %p416
        %p698 = pneg %p445
        %p699 = pneg %p442
        %s700 = smul.u32 2, %s36
        %p701 = scmp.lt.s32.totalorder %s700, 1
        %s702 = scalar_select %p701, %s700, 1
        %s703 = smul.addr %s702, 6
        %s704 = smul.addr %s703, 8
        %s705 = scalar_lea.vmem %s0, %s704
        %s706 = smul.u32 2, %s36
        %p707 = scmp.lt.s32.totalorder %s37, 1
        %s708 = scalar_select %p707, %s37, 1
        %s709 = scalar_lea.vmem %s1, %s708
        %p710 = scmp.lt.s32.totalorder %s37, 1
        %s711 = scalar_select %p710, %s37, 1
        %s712 = scalar_lea.vmem %s2, %s711
        %p713 = scmp.lt.s32.totalorder %s37, 1
        %s714 = scalar_select %p713, %s37, 1
        %s715 = smul.addr %s714, 4
        %s716 = scalar_lea.vmem %s4, %s715
        %p717 = scmp.lt.s32.totalorder %s37, 1
        %s718 = scalar_select %p717, %s37, 1
        %s719 = smul.addr %s718, 4
        %s720 = smul.addr %s719, 4
        %s721 = scalar_lea.vmem %s5, %s720
        %p722 = scmp.lt.s32.totalorder %s37, 1
        %s723 = scalar_select %p722, %s37, 1
        %s724 = scalar_lea.vmem %s6, %s723
        %p725 = scmp.lt.s32.totalorder %s37, 1
        %s726 = scalar_select %p725, %s37, 1
        %s727 = scalar_lea.vmem %s7, %s726
        %p728 = scmp.lt.s32.totalorder %s37, 1
        %s729 = scalar_select %p728, %s37, 1
        %s730 = scalar_lea.vmem %s8, %s729
        %p731 = scmp.lt.s32.totalorder %s37, 1
        %s732 = scalar_select %p731, %s37, 1
        %s733 = smul.addr %s732, 4
        %s734 = smul.addr %s733, 4
        %s735 = scalar_lea.vmem %s9, %s734
        %p736 = scmp.lt.s32.totalorder %s37, 1
        %s737 = scalar_select %p736, %s37, 1
        %s738 = scalar_lea.vmem %s10, %s737
        %p739 = scmp.lt.s32.totalorder %s37, 1
        %s740 = scalar_select %p739, %s37, 1
        %s741 = smul.addr %s740, 16
        %s742 = smul.addr %s741, 4
        %s743 = scalar_lea.vmem %s11, %s742
        %p744 = scmp.lt.s32.totalorder %s37, 1
        %s745 = scalar_select %p744, %s37, 1
        %s746 = scalar_lea.vmem %s12, %s745
        %s747 = smul.u32 2, %s36
        %p749 = scmp.eq.s32.totalorder %s37, 0
        // Predicated region
        $region93: #{tpu_custom_call.1} parent=79 // pred_check
          %p750 = pneg %p749
        $region94: #{tpu_custom_call.1} parent=79 // pred_check_branch
          %752 = sbr.rel (%p750) target = $region96
        $region95: #{tpu_custom_call.1} parent=79 // pred_region
          %v753 = vld [vmem:[%s705] sm:$0xff]
          %v754 = vld [vmem:[%s705 + $0x8] sm:$0xff]
          %v755 = vld [vmem:[%s705 + $0x10] sm:$0xff]
          %v756 = vld [vmem:[%s705 + $0x18] sm:$0xff]
          %v757 = vld [vmem:[%s705 + $0x20] sm:$0xff]
          %v758 = vld [vmem:[%s705 + $0x28] sm:$0xff]
          %v759 = vld [vmem:[%s705 + $0x30] sm:$0xff]
          %v760 = vld [vmem:[%s705 + $0x38] sm:$0xff]
          %v761 = vld [vmem:[%s705 + $0x40] sm:$0xff]
          %v762 = vld [vmem:[%s705 + $0x48] sm:$0xff]
          %v763 = vld [vmem:[%s705 + $0x50] sm:$0xff]
          %v764 = vld [vmem:[%s705 + $0x58] sm:$0xff]
          %vm765 = vcmask 261120
          %766 = vst.msk [vmem:[#allocation2] sm:$0xff] %vm765, %v753
          %767 = vst.msk [vmem:[#allocation2 + $0x8] sm:$0xff] %vm765, %v754
          %768 = vst.msk [vmem:[#allocation2 + $0x10] sm:$0xff] %vm765, %v755
          %769 = vst.msk [vmem:[#allocation2 + $0x18] sm:$0xff] %vm765, %v756
          %770 = vst.msk [vmem:[#allocation2 + $0x20] sm:$0xff] %vm765, %v757
          %771 = vst.msk [vmem:[#allocation2 + $0x28] sm:$0xff] %vm765, %v758
          %772 = vst.msk [vmem:[#allocation2 + $0x30] sm:$0xff] %vm765, %v759
          %773 = vst.msk [vmem:[#allocation2 + $0x38] sm:$0xff] %vm765, %v760
          %774 = vst.msk [vmem:[#allocation2 + $0x40] sm:$0xff] %vm765, %v761
          %775 = vst.msk [vmem:[#allocation2 + $0x48] sm:$0xff] %vm765, %v762
          %776 = vst.msk [vmem:[#allocation2 + $0x50] sm:$0xff] %vm765, %v763
          %777 = vst.msk [vmem:[#allocation2 + $0x58] sm:$0xff] %vm765, %v764
        $region96: #{tpu_custom_call.1} parent=79 // pred_fallthru
          _
        %v778 = vld [vmem:[#allocation2] sm:$0xff]
        %v779 = vld [vmem:[#allocation2 + $0x8] sm:$0xff]
        %v780 = vld [vmem:[#allocation2 + $0x10] sm:$0xff]
        %v781 = vld [vmem:[#allocation2 + $0x18] sm:$0xff]
        %v782 = vld [vmem:[#allocation2 + $0x20] sm:$0xff]
        %v783 = vld [vmem:[#allocation2 + $0x28] sm:$0xff]
        %v784 = vld [vmem:[#allocation2 + $0x30] sm:$0xff]
        %v785 = vld [vmem:[#allocation2 + $0x38] sm:$0xff]
        %v786 = vld [vmem:[#allocation2 + $0x40] sm:$0xff]
        %v787 = vld [vmem:[#allocation2 + $0x48] sm:$0xff]
        %v788 = vld [vmem:[#allocation2 + $0x50] sm:$0xff]
        %v789 = vld [vmem:[#allocation2 + $0x58] sm:$0xff]
        %v790 = vld [vmem:[%s709] sm:$0x1]
        %v791 = vld [vmem:[%s712] sm:$0x1]
        %vm792 = vcmask 261120
        %v793 = vsel %vm792, %v778, 0.0
        %794 = vadd.xlane.f32.xlu0 %v793
        %v795 = vpop.xlane.xlu0 %794
        %v796 = vsel %vm792, %v779, 0.0
        %797 = vadd.xlane.f32.xlu0 %v796
        %v798 = vpop.xlane.xlu0 %797
        %v799 = vsel %vm792, %v780, 0.0
        %800 = vadd.xlane.f32.xlu0 %v799
        %v801 = vpop.xlane.xlu0 %800
        %v802 = vsel %vm792, %v781, 0.0
        %803 = vadd.xlane.f32.xlu0 %v802
        %v804 = vpop.xlane.xlu0 %803
        %v805 = vsel %vm792, %v782, 0.0
        %806 = vadd.xlane.f32.xlu0 %v805
        %v807 = vpop.xlane.xlu0 %806
        %v808 = vsel %vm792, %v783, 0.0
        %809 = vadd.xlane.f32.xlu0 %v808
        %v810 = vpop.xlane.xlu0 %809
        %v811 = vsel %vm792, %v784, 0.0
        %812 = vadd.xlane.f32.xlu0 %v811
        %v813 = vpop.xlane.xlu0 %812
        %v814 = vsel %vm792, %v785, 0.0
        %815 = vadd.xlane.f32.xlu0 %v814
        %v816 = vpop.xlane.xlu0 %815
        %v817 = vsel %vm792, %v786, 0.0
        %818 = vadd.xlane.f32.xlu0 %v817
        %v819 = vpop.xlane.xlu0 %818
        %v820 = vsel %vm792, %v787, 0.0
        %821 = vadd.xlane.f32.xlu0 %v820
        %v822 = vpop.xlane.xlu0 %821
        %v823 = vsel %vm792, %v788, 0.0
        %824 = vadd.xlane.f32.xlu0 %v823
        %v825 = vpop.xlane.xlu0 %824
        %v826 = vsel %vm792, %v789, 0.0
        %827 = vadd.xlane.f32.xlu0 %v826
        %v828 = vpop.xlane.xlu0 %827
        %v829 = vrcp.pop 32.0
        %v830 = vmul.f32 32.0, %v829
        %v831 = vsub.f32 1.0, %v830
        %v832 = vmul.f32 %v829, %v831
        %v833 = vadd.f32 %v829, %v832
        %vm834 = vweird.f32 %v829
        %v835 = vsel %vm834, %v829, %v833
        %v836 = vmul.f32 %v795, %v835
        %v837 = vmul.f32 %v798, %v835
        %v838 = vmul.f32 %v801, %v835
        %v839 = vmul.f32 %v804, %v835
        %v840 = vmul.f32 %v807, %v835
        %v841 = vmul.f32 %v810, %v835
        %v842 = vmul.f32 %v813, %v835
        %v843 = vmul.f32 %v816, %v835
        %v844 = vmul.f32 %v819, %v835
        %v845 = vmul.f32 %v822, %v835
        %v846 = vmul.f32 %v825, %v835
        %v847 = vmul.f32 %v828, %v835
        %v848 = vsub.f32 %v778, %v836
        %v849 = vsub.f32 %v779, %v837
        %v850 = vsub.f32 %v780, %v838
        %v851 = vsub.f32 %v781, %v839
        %v852 = vsub.f32 %v782, %v840
        %v853 = vsub.f32 %v783, %v841
        %v854 = vsub.f32 %v784, %v842
        %v855 = vsub.f32 %v785, %v843
        %v856 = vsub.f32 %v786, %v844
        %v857 = vsub.f32 %v787, %v845
        %v858 = vsub.f32 %v788, %v846
        %v859 = vsub.f32 %v789, %v847
        %v860 = vmul.f32 %v848, %v848
        %v861 = vmul.f32 %v849, %v849
        %v862 = vmul.f32 %v850, %v850
        %v863 = vmul.f32 %v851, %v851
        %v864 = vmul.f32 %v852, %v852
        %v865 = vmul.f32 %v853, %v853
        %v866 = vmul.f32 %v854, %v854
        %v867 = vmul.f32 %v855, %v855
        %v868 = vmul.f32 %v856, %v856
        %v869 = vmul.f32 %v857, %v857
        %v870 = vmul.f32 %v858, %v858
        %v871 = vmul.f32 %v859, %v859
        %v872 = vsel %vm792, %v860, 0.0
        %873 = vadd.xlane.f32.xlu0 %v872
        %v874 = vpop.xlane.xlu0 %873
        %v875 = vsel %vm792, %v861, 0.0
        %876 = vadd.xlane.f32.xlu0 %v875
        %v877 = vpop.xlane.xlu0 %876
        %v878 = vsel %vm792, %v862, 0.0
        %879 = vadd.xlane.f32.xlu0 %v878
        %v880 = vpop.xlane.xlu0 %879
        %v881 = vsel %vm792, %v863, 0.0
        %882 = vadd.xlane.f32.xlu0 %v881
        %v883 = vpop.xlane.xlu0 %882
        %v884 = vsel %vm792, %v864, 0.0
        %885 = vadd.xlane.f32.xlu0 %v884
        %v886 = vpop.xlane.xlu0 %885
        %v887 = vsel %vm792, %v865, 0.0
        %888 = vadd.xlane.f32.xlu0 %v887
        %v889 = vpop.xlane.xlu0 %888
        %v890 = vsel %vm792, %v866, 0.0
        %891 = vadd.xlane.f32.xlu0 %v890
        %v892 = vpop.xlane.xlu0 %891
        %v893 = vsel %vm792, %v867, 0.0
        %894 = vadd.xlane.f32.xlu0 %v893
        %v895 = vpop.xlane.xlu0 %894
        %v896 = vsel %vm792, %v868, 0.0
        %897 = vadd.xlane.f32.xlu0 %v896
        %v898 = vpop.xlane.xlu0 %897
        %v899 = vsel %vm792, %v869, 0.0
        %900 = vadd.xlane.f32.xlu0 %v899
        %v901 = vpop.xlane.xlu0 %900
        %v902 = vsel %vm792, %v870, 0.0
        %903 = vadd.xlane.f32.xlu0 %v902
        %v904 = vpop.xlane.xlu0 %903
        %v905 = vsel %vm792, %v871, 0.0
        %906 = vadd.xlane.f32.xlu0 %v905
        %v907 = vpop.xlane.xlu0 %906
        %v908 = vmul.f32 %v874, %v835
        %v909 = vmul.f32 %v877, %v835
        %v910 = vmul.f32 %v880, %v835
        %v911 = vmul.f32 %v883, %v835
        %v912 = vmul.f32 %v886, %v835
        %v913 = vmul.f32 %v889, %v835
        %v914 = vmul.f32 %v892, %v835
        %v915 = vmul.f32 %v895, %v835
        %v916 = vmul.f32 %v898, %v835
        %v917 = vmul.f32 %v901, %v835
        %v918 = vmul.f32 %v904, %v835
        %v919 = vmul.f32 %v907, %v835
        %v920 = vadd.f32 %v908, 1e-05
        %v921 = vadd.f32 %v909, 1e-05
        %v922 = vadd.f32 %v910, 1e-05
        %v923 = vadd.f32 %v911, 1e-05
        %v924 = vadd.f32 %v912, 1e-05
        %v925 = vadd.f32 %v913, 1e-05
        %v926 = vadd.f32 %v914, 1e-05
        %v927 = vadd.f32 %v915, 1e-05
        %v928 = vadd.f32 %v916, 1e-05
        %v929 = vadd.f32 %v917, 1e-05
        %v930 = vadd.f32 %v918, 1e-05
        %v931 = vadd.f32 %v919, 1e-05
        %v932 = vrsqrt.pop %v920
        %v933 = vmul.f32 %v932, %v920
        %v934 = vmul.f32 %v933, %v932
        %v935 = vmul.f32 0.5, %v934
        %v936 = vsub.f32 1.5, %v935
        %v937 = vmul.f32 %v932, %v936
        %vm938 = vweird.f32 %v920
        %vm939 = vweird.f32 %v932
        %vm940 = vmor %vm938, %vm939
        %v941 = vsel %vm940, %v932, %v937
        %v942 = vrsqrt.pop %v921
        %v943 = vmul.f32 %v942, %v921
        %v944 = vmul.f32 %v943, %v942
        %v945 = vmul.f32 0.5, %v944
        %v946 = vsub.f32 1.5, %v945
        %v947 = vmul.f32 %v942, %v946
        %vm948 = vweird.f32 %v921
        %vm949 = vweird.f32 %v942
        %vm950 = vmor %vm948, %vm949
        %v951 = vsel %vm950, %v942, %v947
        %v952 = vrsqrt.pop %v922
        %v953 = vmul.f32 %v952, %v922
        %v954 = vmul.f32 %v953, %v952
        %v955 = vmul.f32 0.5, %v954
        %v956 = vsub.f32 1.5, %v955
        %v957 = vmul.f32 %v952, %v956
        %vm958 = vweird.f32 %v922
        %vm959 = vweird.f32 %v952
        %vm960 = vmor %vm958, %vm959
        %v961 = vsel %vm960, %v952, %v957
        %v962 = vrsqrt.pop %v923
        %v963 = vmul.f32 %v962, %v923
        %v964 = vmul.f32 %v963, %v962
        %v965 = vmul.f32 0.5, %v964
        %v966 = vsub.f32 1.5, %v965
        %v967 = vmul.f32 %v962, %v966
        %vm968 = vweird.f32 %v923
        %vm969 = vweird.f32 %v962
        %vm970 = vmor %vm968, %vm969
        %v971 = vsel %vm970, %v962, %v967
        %v972 = vrsqrt.pop %v924
        %v973 = vmul.f32 %v972, %v924
        %v974 = vmul.f32 %v973, %v972
        %v975 = vmul.f32 0.5, %v974
        %v976 = vsub.f32 1.5, %v975
        %v977 = vmul.f32 %v972, %v976
        %vm978 = vweird.f32 %v924
        %vm979 = vweird.f32 %v972
        %vm980 = vmor %vm978, %vm979
        %v981 = vsel %vm980, %v972, %v977
        %v982 = vrsqrt.pop %v925
        %v983 = vmul.f32 %v982, %v925
        %v984 = vmul.f32 %v983, %v982
        %v985 = vmul.f32 0.5, %v984
        %v986 = vsub.f32 1.5, %v985
        %v987 = vmul.f32 %v982, %v986
        %vm988 = vweird.f32 %v925
        %vm989 = vweird.f32 %v982
        %vm990 = vmor %vm988, %vm989
        %v991 = vsel %vm990, %v982, %v987
        %v992 = vrsqrt.pop %v926
        %v993 = vmul.f32 %v992, %v926
        %v994 = vmul.f32 %v993, %v992
        %v995 = vmul.f32 0.5, %v994
        %v996 = vsub.f32 1.5, %v995
        %v997 = vmul.f32 %v992, %v996
        %vm998 = vweird.f32 %v926
        %vm999 = vweird.f32 %v992
        %vm1000 = vmor %vm998, %vm999
        %v1001 = vsel %vm1000, %v992, %v997
        %v1002 = vrsqrt.pop %v927
        %v1003 = vmul.f32 %v1002, %v927
        %v1004 = vmul.f32 %v1003, %v1002
        %v1005 = vmul.f32 0.5, %v1004
        %v1006 = vsub.f32 1.5, %v1005
        %v1007 = vmul.f32 %v1002, %v1006
        %vm1008 = vweird.f32 %v927
        %vm1009 = vweird.f32 %v1002
        %vm1010 = vmor %vm1008, %vm1009
        %v1011 = vsel %vm1010, %v1002, %v1007
        %v1012 = vrsqrt.pop %v928
        %v1013 = vmul.f32 %v1012, %v928
        %v1014 = vmul.f32 %v1013, %v1012
        %v1015 = vmul.f32 0.5, %v1014
        %v1016 = vsub.f32 1.5, %v1015
        %v1017 = vmul.f32 %v1012, %v1016
        %vm1018 = vweird.f32 %v928
        %vm1019 = vweird.f32 %v1012
        %vm1020 = vmor %vm1018, %vm1019
        %v1021 = vsel %vm1020, %v1012, %v1017
        %v1022 = vrsqrt.pop %v929
        %v1023 = vmul.f32 %v1022, %v929
        %v1024 = vmul.f32 %v1023, %v1022
        %v1025 = vmul.f32 0.5, %v1024
        %v1026 = vsub.f32 1.5, %v1025
        %v1027 = vmul.f32 %v1022, %v1026
        %vm1028 = vweird.f32 %v929
        %vm1029 = vweird.f32 %v1022
        %vm1030 = vmor %vm1028, %vm1029
        %v1031 = vsel %vm1030, %v1022, %v1027
        %v1032 = vrsqrt.pop %v930
        %v1033 = vmul.f32 %v1032, %v930
        %v1034 = vmul.f32 %v1033, %v1032
        %v1035 = vmul.f32 0.5, %v1034
        %v1036 = vsub.f32 1.5, %v1035
        %v1037 = vmul.f32 %v1032, %v1036
        %vm1038 = vweird.f32 %v930
        %vm1039 = vweird.f32 %v1032
        %vm1040 = vmor %vm1038, %vm1039
        %v1041 = vsel %vm1040, %v1032, %v1037
        %v1042 = vrsqrt.pop %v931
        %v1043 = vmul.f32 %v1042, %v931
        %v1044 = vmul.f32 %v1043, %v1042
        %v1045 = vmul.f32 0.5, %v1044
        %v1046 = vsub.f32 1.5, %v1045
        %v1047 = vmul.f32 %v1042, %v1046
        %vm1048 = vweird.f32 %v931
        %vm1049 = vweird.f32 %v1042
        %vm1050 = vmor %vm1048, %vm1049
        %v1051 = vsel %vm1050, %v1042, %v1047
        %v1052 = vmul.f32 %v848, %v941
        %v1053 = vmul.f32 %v849, %v951
        %v1054 = vmul.f32 %v850, %v961
        %v1055 = vmul.f32 %v851, %v971
        %v1056 = vmul.f32 %v852, %v981
        %v1057 = vmul.f32 %v853, %v991
        %v1058 = vmul.f32 %v854, %v1001
        %v1059 = vmul.f32 %v855, %v1011
        %v1060 = vmul.f32 %v856, %v1021
        %v1061 = vmul.f32 %v857, %v1031
        %v1062 = vmul.f32 %v858, %v1041
        %v1063 = vmul.f32 %v859, %v1051
        %v1065 = vperm.slane %v790, 0
        %v1067 = vmul.f32 %v1052, %v1065
        %v1068 = vmul.f32 %v1053, %v1065
        %v1069 = vmul.f32 %v1054, %v1065
        %v1070 = vmul.f32 %v1055, %v1065
        %v1071 = vmul.f32 %v1056, %v1065
        %v1072 = vmul.f32 %v1057, %v1065
        %v1073 = vmul.f32 %v1058, %v1065
        %v1074 = vmul.f32 %v1059, %v1065
        %v1075 = vmul.f32 %v1060, %v1065
        %v1076 = vmul.f32 %v1061, %v1065
        %v1077 = vmul.f32 %v1062, %v1065
        %v1078 = vmul.f32 %v1063, %v1065
        %v1080 = vperm.slane %v791, 0
        %v1082 = vadd.f32 %v1067, %v1080
        %v1083 = vadd.f32 %v1068, %v1080
        %v1084 = vadd.f32 %v1069, %v1080
        %v1085 = vadd.f32 %v1070, %v1080
        %v1086 = vadd.f32 %v1071, %v1080
        %v1087 = vadd.f32 %v1072, %v1080
        %v1088 = vadd.f32 %v1073, %v1080
        %v1089 = vadd.f32 %v1074, %v1080
        %v1090 = vadd.f32 %v1075, %v1080
        %v1091 = vadd.f32 %v1076, %v1080
        %v1092 = vadd.f32 %v1077, %v1080
        %v1093 = vadd.f32 %v1078, %v1080
        %v1094 = vpack.c.bf16 %v1083, %v1082
        %v1095 = vpack.c.bf16 %v1085, %v1084
        %v1096 = vpack.c.bf16 %v1087, %v1086
        %v1097 = vpack.c.bf16 %v1089, %v1088
        %v1098 = vpack.c.bf16 %v1091, %v1090
        %v1099 = vpack.c.bf16 %v1093, %v1092
        %v1100 = vld [vmem:[%s600] sm:$0xf]
        %v1101 = vld [vmem:[%s600 + $0x4] sm:$0xf]
        %v1102 = vld [vmem:[%s600 + $0x8] sm:$0xf]
        %v1103 = vld [vmem:[%s600 + $0xc] sm:$0xf]
        %v1104 = vld [vmem:[%s600 + $0x10] sm:$0xf]
        %v1105 = vld [vmem:[%s600 + $0x14] sm:$0xf]
        %v1106 = vld [vmem:[%s600 + $0x18] sm:$0xf]
        %v1107 = vld [vmem:[%s600 + $0x1c] sm:$0xf]
        %v1108 = vld [vmem:[%s600 + $0x20] sm:$0xf]
        %v1109 = vld [vmem:[%s600 + $0x24] sm:$0xf]
        %v1110 = vld [vmem:[%s600 + $0x28] sm:$0xf]
        %v1111 = vld [vmem:[%s600 + $0x2c] sm:$0xf]
        %v1112 = vld [vmem:[%s716] sm:$0x7]
        %v1113 = vperm.slane %v1112, 0
        %v1118 = vunpack.c.l.b16 %v1100
        %v1119 = vunpack.c.l.b16 %v1101
        %v1120 = vunpack.c.l.b16 %v1102
        %v1121 = vunpack.c.l.b16 %v1103
        %v1122 = vpack.c.b16 %v1119, %v1118
        %v1123 = vpack.c.b16 %v1121, %v1120
        %v1127 = vsel %vm792, %v1094, 0
        %v1130 = vsel %vm792, %v1095, 0
        %v1133 = vsel %vm792, %v1096, 0
        %v1136 = vsel %vm792, %v1097, 0
        %v1139 = vsel %vm792, %v1098, 0
        %v1142 = vsel %vm792, %v1099, 0
        %1144 = vmatpush.bf16.msra.mxu0 0
        %1145 = vmatpush.bf16.msra.mxu0 0
        %1146 = vmatpush.bf16.msra.mxu0 0
        %1147 = vmatpush.bf16.msra.mxu0 0
        %1148 = vmatpush.bf16.msra.mxu0 0
        %1149 = vmatpush.bf16.msra.mxu0 0
        %1150 = vmatpush.bf16.msra.mxu0 %v1123
        %1151 = vmatpush.bf16.msra.mxu0 %v1122
        %1152 = vmatmul.bf16.gmra.mxu0 %v1127
        %v1153 = vpop.f32.mrf.mxu0
        %v1154 = vadd.f32 %v1113, %v1153
        %v1155 = vpop.f32.mrf.mxu0
        %v1156 = vadd.f32 %v1113, %v1155
        %1157 = vmatmul.bf16.gmra.mxu0 %v1130
        %v1158 = vpop.f32.mrf.mxu0
        %v1159 = vadd.f32 %v1113, %v1158
        %v1160 = vpop.f32.mrf.mxu0
        %v1161 = vadd.f32 %v1113, %v1160
        %1162 = vmatmul.bf16.gmra.mxu0 %v1133
        %v1163 = vpop.f32.mrf.mxu0
        %v1164 = vadd.f32 %v1113, %v1163
        %v1165 = vpop.f32.mrf.mxu0
        %v1166 = vadd.f32 %v1113, %v1165
        %1167 = vmatmul.bf16.gmra.mxu0 %v1136
        %v1168 = vpop.f32.mrf.mxu0
        %v1169 = vadd.f32 %v1113, %v1168
        %v1170 = vpop.f32.mrf.mxu0
        %v1171 = vadd.f32 %v1113, %v1170
        %1172 = vmatmul.bf16.gmra.mxu0 %v1139
        %v1173 = vpop.f32.mrf.mxu0
        %v1174 = vadd.f32 %v1113, %v1173
        %v1175 = vpop.f32.mrf.mxu0
        %v1176 = vadd.f32 %v1113, %v1175
        %1177 = vmatmul.bf16.gmra.mxu0 %v1142
        %v1178 = vpop.f32.mrf.mxu0
        %v1179 = vadd.f32 %v1113, %v1178
        %v1180 = vpop.f32.mrf.mxu0
        %v1181 = vadd.f32 %v1113, %v1180
        %1182 = vdwg.mxu0
        %v1183 = vmul.f32 %v1154, 0.35355338
        %v1184 = vmul.f32 %v1156, 0.35355338
        %v1185 = vmul.f32 %v1159, 0.35355338
        %v1186 = vmul.f32 %v1161, 0.35355338
        %v1187 = vmul.f32 %v1164, 0.35355338
        %v1188 = vmul.f32 %v1166, 0.35355338
        %v1189 = vmul.f32 %v1169, 0.35355338
        %v1190 = vmul.f32 %v1171, 0.35355338
        %v1191 = vmul.f32 %v1174, 0.35355338
        %v1192 = vmul.f32 %v1176, 0.35355338
        %v1193 = vmul.f32 %v1179, 0.35355338
        %v1194 = vmul.f32 %v1181, 0.35355338
        %v1195 = vperm.slane %v1112, 1
        %v1200 = vunpack.c.l.b16 %v1104
        %v1201 = vunpack.c.l.b16 %v1105
        %v1202 = vunpack.c.l.b16 %v1106
        %v1203 = vunpack.c.l.b16 %v1107
        %v1204 = vpack.c.b16 %v1201, %v1200
        %v1205 = vpack.c.b16 %v1203, %v1202
        %1208 = vmatpush.bf16.msra.mxu0 0
        %1209 = vmatpush.bf16.msra.mxu0 0
        %1210 = vmatpush.bf16.msra.mxu0 0
        %1211 = vmatpush.bf16.msra.mxu0 0
        %1212 = vmatpush.bf16.msra.mxu0 0
        %1213 = vmatpush.bf16.msra.mxu0 0
        %1214 = vmatpush.bf16.msra.mxu0 %v1205
        %1215 = vmatpush.bf16.msra.mxu0 %v1204
        %1216 = vmatmul.bf16.gmra.mxu0 %v1127
        %v1217 = vpop.f32.mrf.mxu0
        %v1218 = vadd.f32 %v1195, %v1217
        %v1219 = vpop.f32.mrf.mxu0
        %v1220 = vadd.f32 %v1195, %v1219
        %1221 = vmatmul.bf16.gmra.mxu0 %v1130
        %v1222 = vpop.f32.mrf.mxu0
        %v1223 = vadd.f32 %v1195, %v1222
        %v1224 = vpop.f32.mrf.mxu0
        %v1225 = vadd.f32 %v1195, %v1224
        %1226 = vmatmul.bf16.gmra.mxu0 %v1133
        %v1227 = vpop.f32.mrf.mxu0
        %v1228 = vadd.f32 %v1195, %v1227
        %v1229 = vpop.f32.mrf.mxu0
        %v1230 = vadd.f32 %v1195, %v1229
        %1231 = vmatmul.bf16.gmra.mxu0 %v1136
        %v1232 = vpop.f32.mrf.mxu0
        %v1233 = vadd.f32 %v1195, %v1232
        %v1234 = vpop.f32.mrf.mxu0
        %v1235 = vadd.f32 %v1195, %v1234
        %1236 = vmatmul.bf16.gmra.mxu0 %v1139
        %v1237 = vpop.f32.mrf.mxu0
        %v1238 = vadd.f32 %v1195, %v1237
        %v1239 = vpop.f32.mrf.mxu0
        %v1240 = vadd.f32 %v1195, %v1239
        %1241 = vmatmul.bf16.gmra.mxu0 %v1142
        %v1242 = vpop.f32.mrf.mxu0
        %v1243 = vadd.f32 %v1195, %v1242
        %v1244 = vpop.f32.mrf.mxu0
        %v1245 = vadd.f32 %v1195, %v1244
        %1246 = vdwg.mxu0
        %v1247 = vperm.slane %v1112, 2
        %v1252 = vunpack.c.l.b16 %v1108
        %v1253 = vunpack.c.l.b16 %v1109
        %v1254 = vunpack.c.l.b16 %v1110
        %v1255 = vunpack.c.l.b16 %v1111
        %v1256 = vpack.c.b16 %v1253, %v1252
        %v1257 = vpack.c.b16 %v1255, %v1254
        %1260 = vmatpush.bf16.msra.mxu0 0
        %1261 = vmatpush.bf16.msra.mxu0 0
        %1262 = vmatpush.bf16.msra.mxu0 0
        %1263 = vmatpush.bf16.msra.mxu0 0
        %1264 = vmatpush.bf16.msra.mxu0 0
        %1265 = vmatpush.bf16.msra.mxu0 0
        %1266 = vmatpush.bf16.msra.mxu0 %v1257
        %1267 = vmatpush.bf16.msra.mxu0 %v1256
        %1268 = vmatmul.bf16.gmra.mxu0 %v1127
        %v1269 = vpop.f32.mrf.mxu0
        %v1270 = vadd.f32 %v1247, %v1269
        %v1271 = vpop.f32.mrf.mxu0
        %v1272 = vadd.f32 %v1247, %v1271
        %1273 = vmatmul.bf16.gmra.mxu0 %v1130
        %v1274 = vpop.f32.mrf.mxu0
        %v1275 = vadd.f32 %v1247, %v1274
        %v1276 = vpop.f32.mrf.mxu0
        %v1277 = vadd.f32 %v1247, %v1276
        %1278 = vmatmul.bf16.gmra.mxu0 %v1133
        %v1279 = vpop.f32.mrf.mxu0
        %v1280 = vadd.f32 %v1247, %v1279
        %v1281 = vpop.f32.mrf.mxu0
        %v1282 = vadd.f32 %v1247, %v1281
        %1283 = vmatmul.bf16.gmra.mxu0 %v1136
        %v1284 = vpop.f32.mrf.mxu0
        %v1285 = vadd.f32 %v1247, %v1284
        %v1286 = vpop.f32.mrf.mxu0
        %v1287 = vadd.f32 %v1247, %v1286
        %1288 = vmatmul.bf16.gmra.mxu0 %v1139
        %v1289 = vpop.f32.mrf.mxu0
        %v1290 = vadd.f32 %v1247, %v1289
        %v1291 = vpop.f32.mrf.mxu0
        %v1292 = vadd.f32 %v1247, %v1291
        %1293 = vmatmul.bf16.gmra.mxu0 %v1142
        %v1294 = vpop.f32.mrf.mxu0
        %v1295 = vadd.f32 %v1247, %v1294
        %v1296 = vpop.f32.mrf.mxu0
        %v1297 = vadd.f32 %v1247, %v1296
        %1298 = vdwg.mxu0
        %v1299 = vld [vmem:[%s721] sm:$0xf]
        %v1300 = vld [vmem:[%s721 + $0x4] sm:$0xf]
        %v1301 = vld [vmem:[%s721 + $0x8] sm:$0xf]
        %v1302 = vld [vmem:[%s721 + $0xc] sm:$0xf]
        %v1303 = vpack.c.bf16 %v1183, %v1183
        %v1304 = vpack.c.bf16 %v1184, %v1184
        %v1305 = vpack.c.bf16 %v1185, %v1185
        %v1306 = vpack.c.bf16 %v1186, %v1186
        %v1307 = vpack.c.bf16 %v1187, %v1187
        %v1308 = vpack.c.bf16 %v1188, %v1188
        %v1309 = vpack.c.bf16 %v1189, %v1189
        %v1310 = vpack.c.bf16 %v1190, %v1190
        %v1311 = vpack.c.bf16 %v1191, %v1191
        %v1312 = vpack.c.bf16 %v1192, %v1192
        %v1313 = vpack.c.bf16 %v1193, %v1193
        %v1314 = vpack.c.bf16 %v1194, %v1194
        %v1315 = vpack.c.bf16 %v1218, %v1218
        %v1316 = vpack.c.bf16 %v1220, %v1220
        %v1317 = vpack.c.bf16 %v1223, %v1223
        %v1318 = vpack.c.bf16 %v1225, %v1225
        %v1319 = vpack.c.bf16 %v1228, %v1228
        %v1320 = vpack.c.bf16 %v1230, %v1230
        %v1321 = vpack.c.bf16 %v1233, %v1233
        %v1322 = vpack.c.bf16 %v1235, %v1235
        %v1323 = vpack.c.bf16 %v1238, %v1238
        %v1324 = vpack.c.bf16 %v1240, %v1240
        %v1325 = vpack.c.bf16 %v1243, %v1243
        %v1326 = vpack.c.bf16 %v1245, %v1245
        %v1327 = vpack.c.bf16 %v1270, %v1270
        %v1328 = vpack.c.bf16 %v1272, %v1272
        %v1329 = vpack.c.bf16 %v1275, %v1275
        %v1330 = vpack.c.bf16 %v1277, %v1277
        %v1331 = vpack.c.bf16 %v1280, %v1280
        %v1332 = vpack.c.bf16 %v1282, %v1282
        %v1333 = vpack.c.bf16 %v1285, %v1285
        %v1334 = vpack.c.bf16 %v1287, %v1287
        %v1335 = vpack.c.bf16 %v1290, %v1290
        %v1336 = vpack.c.bf16 %v1292, %v1292
        %v1337 = vpack.c.bf16 %v1295, %v1295
        %v1338 = vpack.c.bf16 %v1297, %v1297
        %v1341 = vunpack.c.l.b16 %v1303
        %v1342 = vunpack.c.l.b16 %v1304
        %v1343 = vpack.c.b16 %v1342, %v1341
        %v1346 = vunpack.c.l.b16 %v1315
        %v1347 = vunpack.c.l.b16 %v1316
        %v1348 = vpack.c.b16 %v1347, %v1346
        %vm1349 = vcmask 64512
        %v1351 = vsel %vm1349, %v1343, 0
        %v1354 = vsel %vm1349, %v1348, 0
        %1356 = vmatpush.bf16.xpose.msra.mxu0 0
        %1357 = vmatpush.bf16.xpose.msra.mxu0 0
        %1358 = vmatpush.bf16.xpose.msra.mxu0 0
        %1359 = vmatpush.bf16.xpose.msra.mxu0 0
        %1360 = vmatpush.bf16.xpose.msra.mxu0 0
        %1361 = vmatpush.bf16.xpose.msra.mxu0 0
        %1362 = vmatpush.bf16.xpose.msra.mxu0 0
        %1363 = vmatpush.bf16.xpose.msra.mxu0 %v1354
        %1364 = vmatmul.bf16.gmra.mxu0 %v1351
        %v1365 = vpop.f32.mrf.mxu0
        %v1366 = vadd.f32 0.0, %v1365
        %v1367 = vpop.f32.mrf.mxu0
        %v1368 = vadd.f32 0.0, %v1367
        %1369 = vdwg.mxu0
        %v1372 = vunpack.c.l.b16 %v1305
        %v1373 = vunpack.c.l.b16 %v1306
        %v1374 = vpack.c.b16 %v1373, %v1372
        %v1377 = vunpack.c.l.b16 %v1317
        %v1378 = vunpack.c.l.b16 %v1318
        %v1379 = vpack.c.b16 %v1378, %v1377
        %v1381 = vsel %vm1349, %v1374, 0
        %v1384 = vsel %vm1349, %v1379, 0
        %1386 = vmatpush.bf16.xpose.msra.mxu0 0
        %1387 = vmatpush.bf16.xpose.msra.mxu0 0
        %1388 = vmatpush.bf16.xpose.msra.mxu0 0
        %1389 = vmatpush.bf16.xpose.msra.mxu0 0
        %1390 = vmatpush.bf16.xpose.msra.mxu0 0
        %1391 = vmatpush.bf16.xpose.msra.mxu0 0
        %1392 = vmatpush.bf16.xpose.msra.mxu0 0
        %1393 = vmatpush.bf16.xpose.msra.mxu0 %v1384
        %1394 = vmatmul.bf16.gmra.mxu0 %v1381
        %v1395 = vpop.f32.mrf.mxu0
        %v1396 = vadd.f32 0.0, %v1395
        %v1397 = vpop.f32.mrf.mxu0
        %v1398 = vadd.f32 0.0, %v1397
        %1399 = vdwg.mxu0
        %v1402 = vunpack.c.l.b16 %v1307
        %v1403 = vunpack.c.l.b16 %v1308
        %v1404 = vpack.c.b16 %v1403, %v1402
        %v1407 = vunpack.c.l.b16 %v1319
        %v1408 = vunpack.c.l.b16 %v1320
        %v1409 = vpack.c.b16 %v1408, %v1407
        %v1411 = vsel %vm1349, %v1404, 0
        %v1414 = vsel %vm1349, %v1409, 0
        %1416 = vmatpush.bf16.xpose.msra.mxu0 0
        %1417 = vmatpush.bf16.xpose.msra.mxu0 0
        %1418 = vmatpush.bf16.xpose.msra.mxu0 0
        %1419 = vmatpush.bf16.xpose.msra.mxu0 0
        %1420 = vmatpush.bf16.xpose.msra.mxu0 0
        %1421 = vmatpush.bf16.xpose.msra.mxu0 0
        %1422 = vmatpush.bf16.xpose.msra.mxu0 0
        %1423 = vmatpush.bf16.xpose.msra.mxu0 %v1414
        %1424 = vmatmul.bf16.gmra.mxu0 %v1411
        %v1425 = vpop.f32.mrf.mxu0
        %v1426 = vadd.f32 0.0, %v1425
        %v1427 = vpop.f32.mrf.mxu0
        %v1428 = vadd.f32 0.0, %v1427
        %1429 = vdwg.mxu0
        %v1432 = vunpack.c.l.b16 %v1309
        %v1433 = vunpack.c.l.b16 %v1310
        %v1434 = vpack.c.b16 %v1433, %v1432
        %v1437 = vunpack.c.l.b16 %v1321
        %v1438 = vunpack.c.l.b16 %v1322
        %v1439 = vpack.c.b16 %v1438, %v1437
        %v1441 = vsel %vm1349, %v1434, 0
        %v1444 = vsel %vm1349, %v1439, 0
        %1446 = vmatpush.bf16.xpose.msra.mxu0 0
        %1447 = vmatpush.bf16.xpose.msra.mxu0 0
        %1448 = vmatpush.bf16.xpose.msra.mxu0 0
        %1449 = vmatpush.bf16.xpose.msra.mxu0 0
        %1450 = vmatpush.bf16.xpose.msra.mxu0 0
        %1451 = vmatpush.bf16.xpose.msra.mxu0 0
        %1452 = vmatpush.bf16.xpose.msra.mxu0 0
        %1453 = vmatpush.bf16.xpose.msra.mxu0 %v1444
        %1454 = vmatmul.bf16.gmra.mxu0 %v1441
        %v1455 = vpop.f32.mrf.mxu0
        %v1456 = vadd.f32 0.0, %v1455
        %v1457 = vpop.f32.mrf.mxu0
        %v1458 = vadd.f32 0.0, %v1457
        %1459 = vdwg.mxu0
        %v1462 = vunpack.c.l.b16 %v1311
        %v1463 = vunpack.c.l.b16 %v1312
        %v1464 = vpack.c.b16 %v1463, %v1462
        %v1467 = vunpack.c.l.b16 %v1323
        %v1468 = vunpack.c.l.b16 %v1324
        %v1469 = vpack.c.b16 %v1468, %v1467
        %v1471 = vsel %vm1349, %v1464, 0
        %v1474 = vsel %vm1349, %v1469, 0
        %1476 = vmatpush.bf16.xpose.msra.mxu0 0
        %1477 = vmatpush.bf16.xpose.msra.mxu0 0
        %1478 = vmatpush.bf16.xpose.msra.mxu0 0
        %1479 = vmatpush.bf16.xpose.msra.mxu0 0
        %1480 = vmatpush.bf16.xpose.msra.mxu0 0
        %1481 = vmatpush.bf16.xpose.msra.mxu0 0
        %1482 = vmatpush.bf16.xpose.msra.mxu0 0
        %1483 = vmatpush.bf16.xpose.msra.mxu0 %v1474
        %1484 = vmatmul.bf16.gmra.mxu0 %v1471
        %v1485 = vpop.f32.mrf.mxu0
        %v1486 = vadd.f32 0.0, %v1485
        %v1487 = vpop.f32.mrf.mxu0
        %v1488 = vadd.f32 0.0, %v1487
        %1489 = vdwg.mxu0
        %v1492 = vunpack.c.l.b16 %v1313
        %v1493 = vunpack.c.l.b16 %v1314
        %v1494 = vpack.c.b16 %v1493, %v1492
        %v1497 = vunpack.c.l.b16 %v1325
        %v1498 = vunpack.c.l.b16 %v1326
        %v1499 = vpack.c.b16 %v1498, %v1497
        %v1501 = vsel %vm1349, %v1494, 0
        %v1504 = vsel %vm1349, %v1499, 0
        %1506 = vmatpush.bf16.xpose.msra.mxu0 0
        %1507 = vmatpush.bf16.xpose.msra.mxu0 0
        %1508 = vmatpush.bf16.xpose.msra.mxu0 0
        %1509 = vmatpush.bf16.xpose.msra.mxu0 0
        %1510 = vmatpush.bf16.xpose.msra.mxu0 0
        %1511 = vmatpush.bf16.xpose.msra.mxu0 0
        %1512 = vmatpush.bf16.xpose.msra.mxu0 0
        %1513 = vmatpush.bf16.xpose.msra.mxu0 %v1504
        %1514 = vmatmul.bf16.gmra.mxu0 %v1501
        %v1515 = vpop.f32.mrf.mxu0
        %v1516 = vadd.f32 0.0, %v1515
        %v1517 = vpop.f32.mrf.mxu0
        %v1518 = vadd.f32 0.0, %v1517
        %1519 = vdwg.mxu0
        %vm1520 = vcmask 130048
        %v1521 = vsel %vm1520, %v1366, -inf
        %1522 = vmax.xlane.f32.xlu0 %v1521
        %v1523 = vpop.xlane.xlu0 %1522
        %v1524 = vsel %vm1520, %v1368, -inf
        %1525 = vmax.xlane.f32.xlu0 %v1524
        %v1526 = vpop.xlane.xlu0 %1525
        %v1527 = vsel %vm1520, %v1396, -inf
        %1528 = vmax.xlane.f32.xlu0 %v1527
        %v1529 = vpop.xlane.xlu0 %1528
        %v1530 = vsel %vm1520, %v1398, -inf
        %1531 = vmax.xlane.f32.xlu0 %v1530
        %v1532 = vpop.xlane.xlu0 %1531
        %v1533 = vsel %vm1520, %v1426, -inf
        %1534 = vmax.xlane.f32.xlu0 %v1533
        %v1535 = vpop.xlane.xlu0 %1534
        %v1536 = vsel %vm1520, %v1428, -inf
        %1537 = vmax.xlane.f32.xlu0 %v1536
        %v1538 = vpop.xlane.xlu0 %1537
        %v1539 = vsel %vm1520, %v1456, -inf
        %1540 = vmax.xlane.f32.xlu0 %v1539
        %v1541 = vpop.xlane.xlu0 %1540
        %v1542 = vsel %vm1520, %v1458, -inf
        %1543 = vmax.xlane.f32.xlu0 %v1542
        %v1544 = vpop.xlane.xlu0 %1543
        %v1545 = vsel %vm1520, %v1486, -inf
        %1546 = vmax.xlane.f32.xlu0 %v1545
        %v1547 = vpop.xlane.xlu0 %1546
        %v1548 = vsel %vm1520, %v1488, -inf
        %1549 = vmax.xlane.f32.xlu0 %v1548
        %v1550 = vpop.xlane.xlu0 %1549
        %v1551 = vsel %vm1520, %v1516, -inf
        %1552 = vmax.xlane.f32.xlu0 %v1551
        %v1553 = vpop.xlane.xlu0 %1552
        %v1554 = vsel %vm1520, %v1518, -inf
        %1555 = vmax.xlane.f32.xlu0 %v1554
        %v1556 = vpop.xlane.xlu0 %1555
        %v1557 = vsub.f32 %v1366, %v1523
        %v1558 = vsub.f32 %v1368, %v1526
        %v1559 = vsub.f32 %v1396, %v1529
        %v1560 = vsub.f32 %v1398, %v1532
        %v1561 = vsub.f32 %v1426, %v1535
        %v1562 = vsub.f32 %v1428, %v1538
        %v1563 = vsub.f32 %v1456, %v1541
        %v1564 = vsub.f32 %v1458, %v1544
        %v1565 = vsub.f32 %v1486, %v1547
        %v1566 = vsub.f32 %v1488, %v1550
        %v1567 = vsub.f32 %v1516, %v1553
        %v1568 = vsub.f32 %v1518, %v1556
        %v1569 = vmul.f32 %v1557, 1.442695
        %v1570 = vpow.pop %v1569
        %v1571 = vmul.f32 %v1558, 1.442695
        %v1572 = vpow.pop %v1571
        %v1573 = vmul.f32 %v1559, 1.442695
        %v1574 = vpow.pop %v1573
        %v1575 = vmul.f32 %v1560, 1.442695
        %v1576 = vpow.pop %v1575
        %v1577 = vmul.f32 %v1561, 1.442695
        %v1578 = vpow.pop %v1577
        %v1579 = vmul.f32 %v1562, 1.442695
        %v1580 = vpow.pop %v1579
        %v1581 = vmul.f32 %v1563, 1.442695
        %v1582 = vpow.pop %v1581
        %v1583 = vmul.f32 %v1564, 1.442695
        %v1584 = vpow.pop %v1583
        %v1585 = vmul.f32 %v1565, 1.442695
        %v1586 = vpow.pop %v1585
        %v1587 = vmul.f32 %v1566, 1.442695
        %v1588 = vpow.pop %v1587
        %v1589 = vmul.f32 %v1567, 1.442695
        %v1590 = vpow.pop %v1589
        %v1591 = vmul.f32 %v1568, 1.442695
        %v1592 = vpow.pop %v1591
        %v1593 = vsel %vm1520, %v1570, 0.0
        %1594 = vadd.xlane.f32.xlu0 %v1593
        %v1595 = vpop.xlane.xlu0 %1594
        %v1596 = vsel %vm1520, %v1572, 0.0
        %1597 = vadd.xlane.f32.xlu0 %v1596
        %v1598 = vpop.xlane.xlu0 %1597
        %v1599 = vsel %vm1520, %v1574, 0.0
        %1600 = vadd.xlane.f32.xlu0 %v1599
        %v1601 = vpop.xlane.xlu0 %1600
        %v1602 = vsel %vm1520, %v1576, 0.0
        %1603 = vadd.xlane.f32.xlu0 %v1602
        %v1604 = vpop.xlane.xlu0 %1603
        %v1605 = vsel %vm1520, %v1578, 0.0
        %1606 = vadd.xlane.f32.xlu0 %v1605
        %v1607 = vpop.xlane.xlu0 %1606
        %v1608 = vsel %vm1520, %v1580, 0.0
        %1609 = vadd.xlane.f32.xlu0 %v1608
        %v1610 = vpop.xlane.xlu0 %1609
        %v1611 = vsel %vm1520, %v1582, 0.0
        %1612 = vadd.xlane.f32.xlu0 %v1611
        %v1613 = vpop.xlane.xlu0 %1612
        %v1614 = vsel %vm1520, %v1584, 0.0
        %1615 = vadd.xlane.f32.xlu0 %v1614
        %v1616 = vpop.xlane.xlu0 %1615
        %v1617 = vsel %vm1520, %v1586, 0.0
        %1618 = vadd.xlane.f32.xlu0 %v1617
        %v1619 = vpop.xlane.xlu0 %1618
        %v1620 = vsel %vm1520, %v1588, 0.0
        %1621 = vadd.xlane.f32.xlu0 %v1620
        %v1622 = vpop.xlane.xlu0 %1621
        %v1623 = vsel %vm1520, %v1590, 0.0
        %1624 = vadd.xlane.f32.xlu0 %v1623
        %v1625 = vpop.xlane.xlu0 %1624
        %v1626 = vsel %vm1520, %v1592, 0.0
        %1627 = vadd.xlane.f32.xlu0 %v1626
        %v1628 = vpop.xlane.xlu0 %1627
        %v1629 = vrcp.pop %v1595
        %v1630 = vrcp.pop %v1598
        %v1631 = vrcp.pop %v1601
        %v1632 = vrcp.pop %v1604
        %v1633 = vrcp.pop %v1607
        %v1634 = vrcp.pop %v1610
        %v1635 = vrcp.pop %v1613
        %v1636 = vrcp.pop %v1616
        %v1637 = vrcp.pop %v1619
        %v1638 = vrcp.pop %v1622
        %v1639 = vrcp.pop %v1625
        %v1640 = vrcp.pop %v1628
        %v1641 = vmul.f32 %v1570, %v1629
        %v1642 = vmul.f32 %v1572, %v1630
        %v1643 = vmul.f32 %v1574, %v1631
        %v1644 = vmul.f32 %v1576, %v1632
        %v1645 = vmul.f32 %v1578, %v1633
        %v1646 = vmul.f32 %v1580, %v1634
        %v1647 = vmul.f32 %v1582, %v1635
        %v1648 = vmul.f32 %v1584, %v1636
        %v1649 = vmul.f32 %v1586, %v1637
        %v1650 = vmul.f32 %v1588, %v1638
        %v1651 = vmul.f32 %v1590, %v1639
        %v1652 = vmul.f32 %v1592, %v1640
        %v1653 = vpack.c.bf16 %v1641, %v1641
        %v1654 = vpack.c.bf16 %v1642, %v1642
        %v1655 = vpack.c.bf16 %v1643, %v1643
        %v1656 = vpack.c.bf16 %v1644, %v1644
        %v1657 = vpack.c.bf16 %v1645, %v1645
        %v1658 = vpack.c.bf16 %v1646, %v1646
        %v1659 = vpack.c.bf16 %v1647, %v1647
        %v1660 = vpack.c.bf16 %v1648, %v1648
        %v1661 = vpack.c.bf16 %v1649, %v1649
        %v1662 = vpack.c.bf16 %v1650, %v1650
        %v1663 = vpack.c.bf16 %v1651, %v1651
        %v1664 = vpack.c.bf16 %v1652, %v1652
        %v1667 = vunpack.c.l.b16 %v1653
        %v1668 = vunpack.c.l.b16 %v1654
        %v1669 = vpack.c.b16 %v1668, %v1667
        %v1672 = vunpack.c.l.b16 %v1327
        %v1673 = vunpack.c.l.b16 %v1328
        %v1674 = vpack.c.b16 %v1673, %v1672
        %v1677 = vsel %vm1520, %v1669, 0
        %1679 = vmatpush.bf16.msra.mxu0 0
        %1680 = vmatpush.bf16.msra.mxu0 0
        %1681 = vmatpush.bf16.msra.mxu0 0
        %1682 = vmatpush.bf16.msra.mxu0 0
        %1683 = vmatpush.bf16.msra.mxu0 0
        %1684 = vmatpush.bf16.msra.mxu0 0
        %1685 = vmatpush.bf16.msra.mxu0 0
        %1686 = vmatpush.bf16.msra.mxu0 %v1674
        %1687 = vmatmul.bf16.gmra.mxu0 %v1677
        %v1688 = vpop.f32.mrf.mxu0
        %v1689 = vadd.f32 0.0, %v1688
        %v1690 = vpop.f32.mrf.mxu0
        %v1691 = vadd.f32 0.0, %v1690
        %1692 = vdwg.mxu0
        %v1695 = vunpack.c.l.b16 %v1655
        %v1696 = vunpack.c.l.b16 %v1656
        %v1697 = vpack.c.b16 %v1696, %v1695
        %v1700 = vunpack.c.l.b16 %v1329
        %v1701 = vunpack.c.l.b16 %v1330
        %v1702 = vpack.c.b16 %v1701, %v1700
        %v1705 = vsel %vm1520, %v1697, 0
        %1707 = vmatpush.bf16.msra.mxu0 0
        %1708 = vmatpush.bf16.msra.mxu0 0
        %1709 = vmatpush.bf16.msra.mxu0 0
        %1710 = vmatpush.bf16.msra.mxu0 0
        %1711 = vmatpush.bf16.msra.mxu0 0
        %1712 = vmatpush.bf16.msra.mxu0 0
        %1713 = vmatpush.bf16.msra.mxu0 0
        %1714 = vmatpush.bf16.msra.mxu0 %v1702
        %1715 = vmatmul.bf16.gmra.mxu0 %v1705
        %v1716 = vpop.f32.mrf.mxu0
        %v1717 = vadd.f32 0.0, %v1716
        %v1718 = vpop.f32.mrf.mxu0
        %v1719 = vadd.f32 0.0, %v1718
        %1720 = vdwg.mxu0
        %v1723 = vunpack.c.l.b16 %v1657
        %v1724 = vunpack.c.l.b16 %v1658
        %v1725 = vpack.c.b16 %v1724, %v1723
        %v1728 = vunpack.c.l.b16 %v1331
        %v1729 = vunpack.c.l.b16 %v1332
        %v1730 = vpack.c.b16 %v1729, %v1728
        %v1733 = vsel %vm1520, %v1725, 0
        %1735 = vmatpush.bf16.msra.mxu0 0
        %1736 = vmatpush.bf16.msra.mxu0 0
        %1737 = vmatpush.bf16.msra.mxu0 0
        %1738 = vmatpush.bf16.msra.mxu0 0
        %1739 = vmatpush.bf16.msra.mxu0 0
        %1740 = vmatpush.bf16.msra.mxu0 0
        %1741 = vmatpush.bf16.msra.mxu0 0
        %1742 = vmatpush.bf16.msra.mxu0 %v1730
        %1743 = vmatmul.bf16.gmra.mxu0 %v1733
        %v1744 = vpop.f32.mrf.mxu0
        %v1745 = vadd.f32 0.0, %v1744
        %v1746 = vpop.f32.mrf.mxu0
        %v1747 = vadd.f32 0.0, %v1746
        %1748 = vdwg.mxu0
        %v1751 = vunpack.c.l.b16 %v1659
        %v1752 = vunpack.c.l.b16 %v1660
        %v1753 = vpack.c.b16 %v1752, %v1751
        %v1756 = vunpack.c.l.b16 %v1333
        %v1757 = vunpack.c.l.b16 %v1334
        %v1758 = vpack.c.b16 %v1757, %v1756
        %v1761 = vsel %vm1520, %v1753, 0
        %1763 = vmatpush.bf16.msra.mxu0 0
        %1764 = vmatpush.bf16.msra.mxu0 0
        %1765 = vmatpush.bf16.msra.mxu0 0
        %1766 = vmatpush.bf16.msra.mxu0 0
        %1767 = vmatpush.bf16.msra.mxu0 0
        %1768 = vmatpush.bf16.msra.mxu0 0
        %1769 = vmatpush.bf16.msra.mxu0 0
        %1770 = vmatpush.bf16.msra.mxu0 %v1758
        %1771 = vmatmul.bf16.gmra.mxu0 %v1761
        %v1772 = vpop.f32.mrf.mxu0
        %v1773 = vadd.f32 0.0, %v1772
        %v1774 = vpop.f32.mrf.mxu0
        %v1775 = vadd.f32 0.0, %v1774
        %1776 = vdwg.mxu0
        %v1779 = vunpack.c.l.b16 %v1661
        %v1780 = vunpack.c.l.b16 %v1662
        %v1781 = vpack.c.b16 %v1780, %v1779
        %v1784 = vunpack.c.l.b16 %v1335
        %v1785 = vunpack.c.l.b16 %v1336
        %v1786 = vpack.c.b16 %v1785, %v1784
        %v1789 = vsel %vm1520, %v1781, 0
        %1791 = vmatpush.bf16.msra.mxu0 0
        %1792 = vmatpush.bf16.msra.mxu0 0
        %1793 = vmatpush.bf16.msra.mxu0 0
        %1794 = vmatpush.bf16.msra.mxu0 0
        %1795 = vmatpush.bf16.msra.mxu0 0
        %1796 = vmatpush.bf16.msra.mxu0 0
        %1797 = vmatpush.bf16.msra.mxu0 0
        %1798 = vmatpush.bf16.msra.mxu0 %v1786
        %1799 = vmatmul.bf16.gmra.mxu0 %v1789
        %v1800 = vpop.f32.mrf.mxu0
        %v1801 = vadd.f32 0.0, %v1800
        %v1802 = vpop.f32.mrf.mxu0
        %v1803 = vadd.f32 0.0, %v1802
        %1804 = vdwg.mxu0
        %v1807 = vunpack.c.l.b16 %v1663
        %v1808 = vunpack.c.l.b16 %v1664
        %v1809 = vpack.c.b16 %v1808, %v1807
        %v1812 = vunpack.c.l.b16 %v1337
        %v1813 = vunpack.c.l.b16 %v1338
        %v1814 = vpack.c.b16 %v1813, %v1812
        %v1817 = vsel %vm1520, %v1809, 0
        %1819 = vmatpush.bf16.msra.mxu0 0
        %1820 = vmatpush.bf16.msra.mxu0 0
        %1821 = vmatpush.bf16.msra.mxu0 0
        %1822 = vmatpush.bf16.msra.mxu0 0
        %1823 = vmatpush.bf16.msra.mxu0 0
        %1824 = vmatpush.bf16.msra.mxu0 0
        %1825 = vmatpush.bf16.msra.mxu0 0
        %1826 = vmatpush.bf16.msra.mxu0 %v1814
        %1827 = vmatmul.bf16.gmra.mxu0 %v1817
        %v1828 = vpop.f32.mrf.mxu0
        %v1829 = vadd.f32 0.0, %v1828
        %v1830 = vpop.f32.mrf.mxu0
        %v1831 = vadd.f32 0.0, %v1830
        %1832 = vdwg.mxu0
        %v1833 = vpack.c.bf16 %v1691, %v1689
        %v1834 = vpack.c.bf16 %v1719, %v1717
        %v1835 = vpack.c.bf16 %v1747, %v1745
        %v1836 = vpack.c.bf16 %v1775, %v1773
        %v1837 = vpack.c.bf16 %v1803, %v1801
        %v1838 = vpack.c.bf16 %v1831, %v1829
        %1839 = vrot.lane.b32.xlu0 %v1343, 120
        %v1840 = vpop.permute.xlu0 %1839
        %1841 = vrot.lane.b32.xlu0 %v1348, 120
        %v1842 = vpop.permute.xlu0 %1841
        %v1844 = vsel %vm1349, %v1840, 0
        %v1847 = vsel %vm1349, %v1842, 0
        %1849 = vmatpush.bf16.xpose.msra.mxu0 0
        %1850 = vmatpush.bf16.xpose.msra.mxu0 0
        %1851 = vmatpush.bf16.xpose.msra.mxu0 0
        %1852 = vmatpush.bf16.xpose.msra.mxu0 0
        %1853 = vmatpush.bf16.xpose.msra.mxu0 0
        %1854 = vmatpush.bf16.xpose.msra.mxu0 0
        %1855 = vmatpush.bf16.xpose.msra.mxu0 0
        %1856 = vmatpush.bf16.xpose.msra.mxu0 %v1847
        %1857 = vmatmul.bf16.gmra.mxu0 %v1844
        %v1858 = vpop.f32.mrf.mxu0
        %v1859 = vadd.f32 0.0, %v1858
        %v1860 = vpop.f32.mrf.mxu0
        %v1861 = vadd.f32 0.0, %v1860
        %1862 = vdwg.mxu0
        %1863 = vrot.lane.b32.xlu0 %v1374, 120
        %v1864 = vpop.permute.xlu0 %1863
        %1865 = vrot.lane.b32.xlu0 %v1379, 120
        %v1866 = vpop.permute.xlu0 %1865
        %v1868 = vsel %vm1349, %v1864, 0
        %v1871 = vsel %vm1349, %v1866, 0
        %1873 = vmatpush.bf16.xpose.msra.mxu0 0
        %1874 = vmatpush.bf16.xpose.msra.mxu0 0
        %1875 = vmatpush.bf16.xpose.msra.mxu0 0
        %1876 = vmatpush.bf16.xpose.msra.mxu0 0
        %1877 = vmatpush.bf16.xpose.msra.mxu0 0
        %1878 = vmatpush.bf16.xpose.msra.mxu0 0
        %1879 = vmatpush.bf16.xpose.msra.mxu0 0
        %1880 = vmatpush.bf16.xpose.msra.mxu0 %v1871
        %1881 = vmatmul.bf16.gmra.mxu0 %v1868
        %v1882 = vpop.f32.mrf.mxu0
        %v1883 = vadd.f32 0.0, %v1882
        %v1884 = vpop.f32.mrf.mxu0
        %v1885 = vadd.f32 0.0, %v1884
        %1886 = vdwg.mxu0
        %1887 = vrot.lane.b32.xlu0 %v1404, 120
        %v1888 = vpop.permute.xlu0 %1887
        %1889 = vrot.lane.b32.xlu0 %v1409, 120
        %v1890 = vpop.permute.xlu0 %1889
        %v1892 = vsel %vm1349, %v1888, 0
        %v1895 = vsel %vm1349, %v1890, 0
        %1897 = vmatpush.bf16.xpose.msra.mxu0 0
        %1898 = vmatpush.bf16.xpose.msra.mxu0 0
        %1899 = vmatpush.bf16.xpose.msra.mxu0 0
        %1900 = vmatpush.bf16.xpose.msra.mxu0 0
        %1901 = vmatpush.bf16.xpose.msra.mxu0 0
        %1902 = vmatpush.bf16.xpose.msra.mxu0 0
        %1903 = vmatpush.bf16.xpose.msra.mxu0 0
        %1904 = vmatpush.bf16.xpose.msra.mxu0 %v1895
        %1905 = vmatmul.bf16.gmra.mxu0 %v1892
        %v1906 = vpop.f32.mrf.mxu0
        %v1907 = vadd.f32 0.0, %v1906
        %v1908 = vpop.f32.mrf.mxu0
        %v1909 = vadd.f32 0.0, %v1908
        %1910 = vdwg.mxu0
        %1911 = vrot.lane.b32.xlu0 %v1434, 120
        %v1912 = vpop.permute.xlu0 %1911
        %1913 = vrot.lane.b32.xlu0 %v1439, 120
        %v1914 = vpop.permute.xlu0 %1913
        %v1916 = vsel %vm1349, %v1912, 0
        %v1919 = vsel %vm1349, %v1914, 0
        %1921 = vmatpush.bf16.xpose.msra.mxu0 0
        %1922 = vmatpush.bf16.xpose.msra.mxu0 0
        %1923 = vmatpush.bf16.xpose.msra.mxu0 0
        %1924 = vmatpush.bf16.xpose.msra.mxu0 0
        %1925 = vmatpush.bf16.xpose.msra.mxu0 0
        %1926 = vmatpush.bf16.xpose.msra.mxu0 0
        %1927 = vmatpush.bf16.xpose.msra.mxu0 0
        %1928 = vmatpush.bf16.xpose.msra.mxu0 %v1919
        %1929 = vmatmul.bf16.gmra.mxu0 %v1916
        %v1930 = vpop.f32.mrf.mxu0
        %v1931 = vadd.f32 0.0, %v1930
        %v1932 = vpop.f32.mrf.mxu0
        %v1933 = vadd.f32 0.0, %v1932
        %1934 = vdwg.mxu0
        %1935 = vrot.lane.b32.xlu0 %v1464, 120
        %v1936 = vpop.permute.xlu0 %1935
        %1937 = vrot.lane.b32.xlu0 %v1469, 120
        %v1938 = vpop.permute.xlu0 %1937
        %v1940 = vsel %vm1349, %v1936, 0
        %v1943 = vsel %vm1349, %v1938, 0
        %1945 = vmatpush.bf16.xpose.msra.mxu0 0
        %1946 = vmatpush.bf16.xpose.msra.mxu0 0
        %1947 = vmatpush.bf16.xpose.msra.mxu0 0
        %1948 = vmatpush.bf16.xpose.msra.mxu0 0
        %1949 = vmatpush.bf16.xpose.msra.mxu0 0
        %1950 = vmatpush.bf16.xpose.msra.mxu0 0
        %1951 = vmatpush.bf16.xpose.msra.mxu0 0
        %1952 = vmatpush.bf16.xpose.msra.mxu0 %v1943
        %1953 = vmatmul.bf16.gmra.mxu0 %v1940
        %v1954 = vpop.f32.mrf.mxu0
        %v1955 = vadd.f32 0.0, %v1954
        %v1956 = vpop.f32.mrf.mxu0
        %v1957 = vadd.f32 0.0, %v1956
        %1958 = vdwg.mxu0
        %1959 = vrot.lane.b32.xlu0 %v1494, 120
        %v1960 = vpop.permute.xlu0 %1959
        %1961 = vrot.lane.b32.xlu0 %v1499, 120
        %v1962 = vpop.permute.xlu0 %1961
        %v1964 = vsel %vm1349, %v1960, 0
        %v1967 = vsel %vm1349, %v1962, 0
        %1969 = vmatpush.bf16.xpose.msra.mxu0 0
        %1970 = vmatpush.bf16.xpose.msra.mxu0 0
        %1971 = vmatpush.bf16.xpose.msra.mxu0 0
        %1972 = vmatpush.bf16.xpose.msra.mxu0 0
        %1973 = vmatpush.bf16.xpose.msra.mxu0 0
        %1974 = vmatpush.bf16.xpose.msra.mxu0 0
        %1975 = vmatpush.bf16.xpose.msra.mxu0 0
        %1976 = vmatpush.bf16.xpose.msra.mxu0 %v1967
        %1977 = vmatmul.bf16.gmra.mxu0 %v1964
        %v1978 = vpop.f32.mrf.mxu0
        %v1979 = vadd.f32 0.0, %v1978
        %v1980 = vpop.f32.mrf.mxu0
        %v1981 = vadd.f32 0.0, %v1980
        %1982 = vdwg.mxu0
        %v1983 = vsel %vm1520, %v1859, -inf
        %1984 = vmax.xlane.f32.xlu0 %v1983
        %v1985 = vpop.xlane.xlu0 %1984
        %v1986 = vsel %vm1520, %v1861, -inf
        %1987 = vmax.xlane.f32.xlu0 %v1986
        %v1988 = vpop.xlane.xlu0 %1987
        %v1989 = vsel %vm1520, %v1883, -inf
        %1990 = vmax.xlane.f32.xlu0 %v1989
        %v1991 = vpop.xlane.xlu0 %1990
        %v1992 = vsel %vm1520, %v1885, -inf
        %1993 = vmax.xlane.f32.xlu0 %v1992
        %v1994 = vpop.xlane.xlu0 %1993
        %v1995 = vsel %vm1520, %v1907, -inf
        %1996 = vmax.xlane.f32.xlu0 %v1995
        %v1997 = vpop.xlane.xlu0 %1996
        %v1998 = vsel %vm1520, %v1909, -inf
        %1999 = vmax.xlane.f32.xlu0 %v1998
        %v2000 = vpop.xlane.xlu0 %1999
        %v2001 = vsel %vm1520, %v1931, -inf
        %2002 = vmax.xlane.f32.xlu0 %v2001
        %v2003 = vpop.xlane.xlu0 %2002
        %v2004 = vsel %vm1520, %v1933, -inf
        %2005 = vmax.xlane.f32.xlu0 %v2004
        %v2006 = vpop.xlane.xlu0 %2005
        %v2007 = vsel %vm1520, %v1955, -inf
        %2008 = vmax.xlane.f32.xlu0 %v2007
        %v2009 = vpop.xlane.xlu0 %2008
        %v2010 = vsel %vm1520, %v1957, -inf
        %2011 = vmax.xlane.f32.xlu0 %v2010
        %v2012 = vpop.xlane.xlu0 %2011
        %v2013 = vsel %vm1520, %v1979, -inf
        %2014 = vmax.xlane.f32.xlu0 %v2013
        %v2015 = vpop.xlane.xlu0 %2014
        %v2016 = vsel %vm1520, %v1981, -inf
        %2017 = vmax.xlane.f32.xlu0 %v2016
        %v2018 = vpop.xlane.xlu0 %2017
        %v2019 = vsub.f32 %v1859, %v1985
        %v2020 = vsub.f32 %v1861, %v1988
        %v2021 = vsub.f32 %v1883, %v1991
        %v2022 = vsub.f32 %v1885, %v1994
        %v2023 = vsub.f32 %v1907, %v1997
        %v2024 = vsub.f32 %v1909, %v2000
        %v2025 = vsub.f32 %v1931, %v2003
        %v2026 = vsub.f32 %v1933, %v2006
        %v2027 = vsub.f32 %v1955, %v2009
        %v2028 = vsub.f32 %v1957, %v2012
        %v2029 = vsub.f32 %v1979, %v2015
        %v2030 = vsub.f32 %v1981, %v2018
        %v2031 = vmul.f32 %v2019, 1.442695
        %v2032 = vpow.pop %v2031
        %v2033 = vmul.f32 %v2020, 1.442695
        %v2034 = vpow.pop %v2033
        %v2035 = vmul.f32 %v2021, 1.442695
        %v2036 = vpow.pop %v2035
        %v2037 = vmul.f32 %v2022, 1.442695
        %v2038 = vpow.pop %v2037
        %v2039 = vmul.f32 %v2023, 1.442695
        %v2040 = vpow.pop %v2039
        %v2041 = vmul.f32 %v2024, 1.442695
        %v2042 = vpow.pop %v2041
        %v2043 = vmul.f32 %v2025, 1.442695
        %v2044 = vpow.pop %v2043
        %v2045 = vmul.f32 %v2026, 1.442695
        %v2046 = vpow.pop %v2045
        %v2047 = vmul.f32 %v2027, 1.442695
        %v2048 = vpow.pop %v2047
        %v2049 = vmul.f32 %v2028, 1.442695
        %v2050 = vpow.pop %v2049
        %v2051 = vmul.f32 %v2029, 1.442695
        %v2052 = vpow.pop %v2051
        %v2053 = vmul.f32 %v2030, 1.442695
        %v2054 = vpow.pop %v2053
        %v2055 = vsel %vm1520, %v2032, 0.0
        %2056 = vadd.xlane.f32.xlu0 %v2055
        %v2057 = vpop.xlane.xlu0 %2056
        %v2058 = vsel %vm1520, %v2034, 0.0
        %2059 = vadd.xlane.f32.xlu0 %v2058
        %v2060 = vpop.xlane.xlu0 %2059
        %v2061 = vsel %vm1520, %v2036, 0.0
        %2062 = vadd.xlane.f32.xlu0 %v2061
        %v2063 = vpop.xlane.xlu0 %2062
        %v2064 = vsel %vm1520, %v2038, 0.0
        %2065 = vadd.xlane.f32.xlu0 %v2064
        %v2066 = vpop.xlane.xlu0 %2065
        %v2067 = vsel %vm1520, %v2040, 0.0
        %2068 = vadd.xlane.f32.xlu0 %v2067
        %v2069 = vpop.xlane.xlu0 %2068
        %v2070 = vsel %vm1520, %v2042, 0.0
        %2071 = vadd.xlane.f32.xlu0 %v2070
        %v2072 = vpop.xlane.xlu0 %2071
        %v2073 = vsel %vm1520, %v2044, 0.0
        %2074 = vadd.xlane.f32.xlu0 %v2073
        %v2075 = vpop.xlane.xlu0 %2074
        %v2076 = vsel %vm1520, %v2046, 0.0
        %2077 = vadd.xlane.f32.xlu0 %v2076
        %v2078 = vpop.xlane.xlu0 %2077
        %v2079 = vsel %vm1520, %v2048, 0.0
        %2080 = vadd.xlane.f32.xlu0 %v2079
        %v2081 = vpop.xlane.xlu0 %2080
        %v2082 = vsel %vm1520, %v2050, 0.0
        %2083 = vadd.xlane.f32.xlu0 %v2082
        %v2084 = vpop.xlane.xlu0 %2083
        %v2085 = vsel %vm1520, %v2052, 0.0
        %2086 = vadd.xlane.f32.xlu0 %v2085
        %v2087 = vpop.xlane.xlu0 %2086
        %v2088 = vsel %vm1520, %v2054, 0.0
        %2089 = vadd.xlane.f32.xlu0 %v2088
        %v2090 = vpop.xlane.xlu0 %2089
        %v2091 = vrcp.pop %v2057
        %v2092 = vrcp.pop %v2060
        %v2093 = vrcp.pop %v2063
        %v2094 = vrcp.pop %v2066
        %v2095 = vrcp.pop %v2069
        %v2096 = vrcp.pop %v2072
        %v2097 = vrcp.pop %v2075
        %v2098 = vrcp.pop %v2078
        %v2099 = vrcp.pop %v2081
        %v2100 = vrcp.pop %v2084
        %v2101 = vrcp.pop %v2087
        %v2102 = vrcp.pop %v2090
        %v2103 = vmul.f32 %v2032, %v2091
        %v2104 = vmul.f32 %v2034, %v2092
        %v2105 = vmul.f32 %v2036, %v2093
        %v2106 = vmul.f32 %v2038, %v2094
        %v2107 = vmul.f32 %v2040, %v2095
        %v2108 = vmul.f32 %v2042, %v2096
        %v2109 = vmul.f32 %v2044, %v2097
        %v2110 = vmul.f32 %v2046, %v2098
        %v2111 = vmul.f32 %v2048, %v2099
        %v2112 = vmul.f32 %v2050, %v2100
        %v2113 = vmul.f32 %v2052, %v2101
        %v2114 = vmul.f32 %v2054, %v2102
        %v2115 = vpack.c.bf16 %v2103, %v2103
        %v2116 = vpack.c.bf16 %v2104, %v2104
        %v2117 = vpack.c.bf16 %v2105, %v2105
        %v2118 = vpack.c.bf16 %v2106, %v2106
        %v2119 = vpack.c.bf16 %v2107, %v2107
        %v2120 = vpack.c.bf16 %v2108, %v2108
        %v2121 = vpack.c.bf16 %v2109, %v2109
        %v2122 = vpack.c.bf16 %v2110, %v2110
        %v2123 = vpack.c.bf16 %v2111, %v2111
        %v2124 = vpack.c.bf16 %v2112, %v2112
        %v2125 = vpack.c.bf16 %v2113, %v2113
        %v2126 = vpack.c.bf16 %v2114, %v2114
        %v2129 = vunpack.c.l.b16 %v2115
        %v2130 = vunpack.c.l.b16 %v2116
        %v2131 = vpack.c.b16 %v2130, %v2129
        %2132 = vrot.lane.b32.xlu0 %v1674, 120
        %v2133 = vpop.permute.xlu0 %2132
        %v2136 = vsel %vm1520, %v2131, 0
        %2138 = vmatpush.bf16.msra.mxu0 0
        %2139 = vmatpush.bf16.msra.mxu0 0
        %2140 = vmatpush.bf16.msra.mxu0 0
        %2141 = vmatpush.bf16.msra.mxu0 0
        %2142 = vmatpush.bf16.msra.mxu0 0
        %2143 = vmatpush.bf16.msra.mxu0 0
        %2144 = vmatpush.bf16.msra.mxu0 0
        %2145 = vmatpush.bf16.msra.mxu0 %v2133
        %2146 = vmatmul.bf16.gmra.mxu0 %v2136
        %v2147 = vpop.f32.mrf.mxu0
        %v2148 = vadd.f32 0.0, %v2147
        %v2149 = vpop.f32.mrf.mxu0
        %v2150 = vadd.f32 0.0, %v2149
        %2151 = vdwg.mxu0
        %v2154 = vunpack.c.l.b16 %v2117
        %v2155 = vunpack.c.l.b16 %v2118
        %v2156 = vpack.c.b16 %v2155, %v2154
        %2157 = vrot.lane.b32.xlu0 %v1702, 120
        %v2158 = vpop.permute.xlu0 %2157
        %v2161 = vsel %vm1520, %v2156, 0
        %2163 = vmatpush.bf16.msra.mxu0 0
        %2164 = vmatpush.bf16.msra.mxu0 0
        %2165 = vmatpush.bf16.msra.mxu0 0
        %2166 = vmatpush.bf16.msra.mxu0 0
        %2167 = vmatpush.bf16.msra.mxu0 0
        %2168 = vmatpush.bf16.msra.mxu0 0
        %2169 = vmatpush.bf16.msra.mxu0 0
        %2170 = vmatpush.bf16.msra.mxu0 %v2158
        %2171 = vmatmul.bf16.gmra.mxu0 %v2161
        %v2172 = vpop.f32.mrf.mxu0
        %v2173 = vadd.f32 0.0, %v2172
        %v2174 = vpop.f32.mrf.mxu0
        %v2175 = vadd.f32 0.0, %v2174
        %2176 = vdwg.mxu0
        %v2179 = vunpack.c.l.b16 %v2119
        %v2180 = vunpack.c.l.b16 %v2120
        %v2181 = vpack.c.b16 %v2180, %v2179
        %2182 = vrot.lane.b32.xlu0 %v1730, 120
        %v2183 = vpop.permute.xlu0 %2182
        %v2186 = vsel %vm1520, %v2181, 0
        %2188 = vmatpush.bf16.msra.mxu0 0
        %2189 = vmatpush.bf16.msra.mxu0 0
        %2190 = vmatpush.bf16.msra.mxu0 0
        %2191 = vmatpush.bf16.msra.mxu0 0
        %2192 = vmatpush.bf16.msra.mxu0 0
        %2193 = vmatpush.bf16.msra.mxu0 0
        %2194 = vmatpush.bf16.msra.mxu0 0
        %2195 = vmatpush.bf16.msra.mxu0 %v2183
        %2196 = vmatmul.bf16.gmra.mxu0 %v2186
        %v2197 = vpop.f32.mrf.mxu0
        %v2198 = vadd.f32 0.0, %v2197
        %v2199 = vpop.f32.mrf.mxu0
        %v2200 = vadd.f32 0.0, %v2199
        %2201 = vdwg.mxu0
        %v2204 = vunpack.c.l.b16 %v2121
        %v2205 = vunpack.c.l.b16 %v2122
        %v2206 = vpack.c.b16 %v2205, %v2204
        %2207 = vrot.lane.b32.xlu0 %v1758, 120
        %v2208 = vpop.permute.xlu0 %2207
        %v2211 = vsel %vm1520, %v2206, 0
        %2213 = vmatpush.bf16.msra.mxu0 0
        %2214 = vmatpush.bf16.msra.mxu0 0
        %2215 = vmatpush.bf16.msra.mxu0 0
        %2216 = vmatpush.bf16.msra.mxu0 0
        %2217 = vmatpush.bf16.msra.mxu0 0
        %2218 = vmatpush.bf16.msra.mxu0 0
        %2219 = vmatpush.bf16.msra.mxu0 0
        %2220 = vmatpush.bf16.msra.mxu0 %v2208
        %2221 = vmatmul.bf16.gmra.mxu0 %v2211
        %v2222 = vpop.f32.mrf.mxu0
        %v2223 = vadd.f32 0.0, %v2222
        %v2224 = vpop.f32.mrf.mxu0
        %v2225 = vadd.f32 0.0, %v2224
        %2226 = vdwg.mxu0
        %v2229 = vunpack.c.l.b16 %v2123
        %v2230 = vunpack.c.l.b16 %v2124
        %v2231 = vpack.c.b16 %v2230, %v2229
        %2232 = vrot.lane.b32.xlu0 %v1786, 120
        %v2233 = vpop.permute.xlu0 %2232
        %v2236 = vsel %vm1520, %v2231, 0
        %2238 = vmatpush.bf16.msra.mxu0 0
        %2239 = vmatpush.bf16.msra.mxu0 0
        %2240 = vmatpush.bf16.msra.mxu0 0
        %2241 = vmatpush.bf16.msra.mxu0 0
        %2242 = vmatpush.bf16.msra.mxu0 0
        %2243 = vmatpush.bf16.msra.mxu0 0
        %2244 = vmatpush.bf16.msra.mxu0 0
        %2245 = vmatpush.bf16.msra.mxu0 %v2233
        %2246 = vmatmul.bf16.gmra.mxu0 %v2236
        %v2247 = vpop.f32.mrf.mxu0
        %v2248 = vadd.f32 0.0, %v2247
        %v2249 = vpop.f32.mrf.mxu0
        %v2250 = vadd.f32 0.0, %v2249
        %2251 = vdwg.mxu0
        %v2254 = vunpack.c.l.b16 %v2125
        %v2255 = vunpack.c.l.b16 %v2126
        %v2256 = vpack.c.b16 %v2255, %v2254
        %2257 = vrot.lane.b32.xlu0 %v1814, 120
        %v2258 = vpop.permute.xlu0 %2257
        %v2261 = vsel %vm1520, %v2256, 0
        %2263 = vmatpush.bf16.msra.mxu0 0
        %2264 = vmatpush.bf16.msra.mxu0 0
        %2265 = vmatpush.bf16.msra.mxu0 0
        %2266 = vmatpush.bf16.msra.mxu0 0
        %2267 = vmatpush.bf16.msra.mxu0 0
        %2268 = vmatpush.bf16.msra.mxu0 0
        %2269 = vmatpush.bf16.msra.mxu0 0
        %2270 = vmatpush.bf16.msra.mxu0 %v2258
        %2271 = vmatmul.bf16.gmra.mxu0 %v2261
        %v2272 = vpop.f32.mrf.mxu0
        %v2273 = vadd.f32 0.0, %v2272
        %v2274 = vpop.f32.mrf.mxu0
        %v2275 = vadd.f32 0.0, %v2274
        %2276 = vdwg.mxu0
        %v2277 = vpack.c.bf16 %v2150, %v2148
        %v2278 = vpack.c.bf16 %v2175, %v2173
        %v2279 = vpack.c.bf16 %v2200, %v2198
        %v2280 = vpack.c.bf16 %v2225, %v2223
        %v2281 = vpack.c.bf16 %v2250, %v2248
        %v2282 = vpack.c.bf16 %v2275, %v2273
        %v2284 = vsel %vm1349, %v2277, 0
        %v2287 = vsel %vm1349, %v2278, 0
        %v2290 = vsel %vm1349, %v2279, 0
        %v2293 = vsel %vm1349, %v2280, 0
        %v2296 = vsel %vm1349, %v2281, 0
        %v2299 = vsel %vm1349, %v2282, 0
        %vm2301 = vcmask 1043456
        %v2303 = vsel %vm2301, %v1300, 0
        %2305 = vmatpush.bf16.msra.mxu0 0
        %2306 = vmatpush.bf16.msra.mxu0 0
        %2307 = vmatpush.bf16.msra.mxu0 0
        %2308 = vmatpush.bf16.msra.mxu0 0
        %2309 = vmatpush.bf16.msra.mxu0 0
        %2310 = vmatpush.bf16.msra.mxu0 0
        %2311 = vmatpush.bf16.msra.mxu0 0
        %2312 = vmatpush.bf16.msra.mxu0 %v2303
        %2313 = vmatmul.bf16.gmra.mxu0 %v2284
        %v2314 = vpop.f32.mrf.mxu0
        %v2315 = vadd.f32 0.0, %v2314
        %v2316 = vpop.f32.mrf.mxu0
        %v2317 = vadd.f32 0.0, %v2316
        %2318 = vmatmul.bf16.gmra.mxu0 %v2287
        %v2319 = vpop.f32.mrf.mxu0
        %v2320 = vadd.f32 0.0, %v2319
        %v2321 = vpop.f32.mrf.mxu0
        %v2322 = vadd.f32 0.0, %v2321
        %2323 = vmatmul.bf16.gmra.mxu0 %v2290
        %v2324 = vpop.f32.mrf.mxu0
        %v2325 = vadd.f32 0.0, %v2324
        %v2326 = vpop.f32.mrf.mxu0
        %v2327 = vadd.f32 0.0, %v2326
        %2328 = vmatmul.bf16.gmra.mxu0 %v2293
        %v2329 = vpop.f32.mrf.mxu0
        %v2330 = vadd.f32 0.0, %v2329
        %v2331 = vpop.f32.mrf.mxu0
        %v2332 = vadd.f32 0.0, %v2331
        %2333 = vmatmul.bf16.gmra.mxu0 %v2296
        %v2334 = vpop.f32.mrf.mxu0
        %v2335 = vadd.f32 0.0, %v2334
        %v2336 = vpop.f32.mrf.mxu0
        %v2337 = vadd.f32 0.0, %v2336
        %2338 = vmatmul.bf16.gmra.mxu0 %v2299
        %v2339 = vpop.f32.mrf.mxu0
        %v2340 = vadd.f32 0.0, %v2339
        %v2341 = vpop.f32.mrf.mxu0
        %v2342 = vadd.f32 0.0, %v2341
        %2343 = vdwg.mxu0
        %v2345 = vsel %vm1349, %v1833, 0
        %v2348 = vsel %vm1349, %v1834, 0
        %v2351 = vsel %vm1349, %v1835, 0
        %v2354 = vsel %vm1349, %v1836, 0
        %v2357 = vsel %vm1349, %v1837, 0
        %v2360 = vsel %vm1349, %v1838, 0
        %v2363 = vsel %vm2301, %v1299, 0
        %2365 = vmatpush.bf16.msra.mxu0 0
        %2366 = vmatpush.bf16.msra.mxu0 0
        %2367 = vmatpush.bf16.msra.mxu0 0
        %2368 = vmatpush.bf16.msra.mxu0 0
        %2369 = vmatpush.bf16.msra.mxu0 0
        %2370 = vmatpush.bf16.msra.mxu0 0
        %2371 = vmatpush.bf16.msra.mxu0 0
        %2372 = vmatpush.bf16.msra.mxu0 %v2363
        %2373 = vmatmul.bf16.gmra.mxu0 %v2345
        %v2374 = vpop.f32.mrf.mxu0
        %v2375 = vadd.f32 %v2315, %v2374
        %v2376 = vpop.f32.mrf.mxu0
        %v2377 = vadd.f32 %v2317, %v2376
        %2378 = vmatmul.bf16.gmra.mxu0 %v2348
        %v2379 = vpop.f32.mrf.mxu0
        %v2380 = vadd.f32 %v2320, %v2379
        %v2381 = vpop.f32.mrf.mxu0
        %v2382 = vadd.f32 %v2322, %v2381
        %2383 = vmatmul.bf16.gmra.mxu0 %v2351
        %v2384 = vpop.f32.mrf.mxu0
        %v2385 = vadd.f32 %v2325, %v2384
        %v2386 = vpop.f32.mrf.mxu0
        %v2387 = vadd.f32 %v2327, %v2386
        %2388 = vmatmul.bf16.gmra.mxu0 %v2354
        %v2389 = vpop.f32.mrf.mxu0
        %v2390 = vadd.f32 %v2330, %v2389
        %v2391 = vpop.f32.mrf.mxu0
        %v2392 = vadd.f32 %v2332, %v2391
        %2393 = vmatmul.bf16.gmra.mxu0 %v2357
        %v2394 = vpop.f32.mrf.mxu0
        %v2395 = vadd.f32 %v2335, %v2394
        %v2396 = vpop.f32.mrf.mxu0
        %v2397 = vadd.f32 %v2337, %v2396
        %2398 = vmatmul.bf16.gmra.mxu0 %v2360
        %v2399 = vpop.f32.mrf.mxu0
        %v2400 = vadd.f32 %v2340, %v2399
        %v2401 = vpop.f32.mrf.mxu0
        %v2402 = vadd.f32 %v2342, %v2401
        %2403 = vdwg.mxu0
        %2404 = vrot.lane.b32.xlu0 %v1343, 112
        %v2405 = vpop.permute.xlu0 %2404
        %2406 = vrot.lane.b32.xlu0 %v1348, 112
        %v2407 = vpop.permute.xlu0 %2406
        %v2409 = vsel %vm1349, %v2405, 0
        %v2412 = vsel %vm1349, %v2407, 0
        %2414 = vmatpush.bf16.xpose.msra.mxu0 0
        %2415 = vmatpush.bf16.xpose.msra.mxu0 0
        %2416 = vmatpush.bf16.xpose.msra.mxu0 0
        %2417 = vmatpush.bf16.xpose.msra.mxu0 0
        %2418 = vmatpush.bf16.xpose.msra.mxu0 0
        %2419 = vmatpush.bf16.xpose.msra.mxu0 0
        %2420 = vmatpush.bf16.xpose.msra.mxu0 0
        %2421 = vmatpush.bf16.xpose.msra.mxu0 %v2412
        %2422 = vmatmul.bf16.gmra.mxu0 %v2409
        %v2423 = vpop.f32.mrf.mxu0
        %v2424 = vadd.f32 0.0, %v2423
        %v2425 = vpop.f32.mrf.mxu0
        %v2426 = vadd.f32 0.0, %v2425
        %2427 = vdwg.mxu0
        %2428 = vrot.lane.b32.xlu0 %v1374, 112
        %v2429 = vpop.permute.xlu0 %2428
        %2430 = vrot.lane.b32.xlu0 %v1379, 112
        %v2431 = vpop.permute.xlu0 %2430
        %v2433 = vsel %vm1349, %v2429, 0
        %v2436 = vsel %vm1349, %v2431, 0
        %2438 = vmatpush.bf16.xpose.msra.mxu0 0
        %2439 = vmatpush.bf16.xpose.msra.mxu0 0
        %2440 = vmatpush.bf16.xpose.msra.mxu0 0
        %2441 = vmatpush.bf16.xpose.msra.mxu0 0
        %2442 = vmatpush.bf16.xpose.msra.mxu0 0
        %2443 = vmatpush.bf16.xpose.msra.mxu0 0
        %2444 = vmatpush.bf16.xpose.msra.mxu0 0
        %2445 = vmatpush.bf16.xpose.msra.mxu0 %v2436
        %2446 = vmatmul.bf16.gmra.mxu0 %v2433
        %v2447 = vpop.f32.mrf.mxu0
        %v2448 = vadd.f32 0.0, %v2447
        %v2449 = vpop.f32.mrf.mxu0
        %v2450 = vadd.f32 0.0, %v2449
        %2451 = vdwg.mxu0
        %2452 = vrot.lane.b32.xlu0 %v1404, 112
        %v2453 = vpop.permute.xlu0 %2452
        %2454 = vrot.lane.b32.xlu0 %v1409, 112
        %v2455 = vpop.permute.xlu0 %2454
        %v2457 = vsel %vm1349, %v2453, 0
        %v2460 = vsel %vm1349, %v2455, 0
        %2462 = vmatpush.bf16.xpose.msra.mxu0 0
        %2463 = vmatpush.bf16.xpose.msra.mxu0 0
        %2464 = vmatpush.bf16.xpose.msra.mxu0 0
        %2465 = vmatpush.bf16.xpose.msra.mxu0 0
        %2466 = vmatpush.bf16.xpose.msra.mxu0 0
        %2467 = vmatpush.bf16.xpose.msra.mxu0 0
        %2468 = vmatpush.bf16.xpose.msra.mxu0 0
        %2469 = vmatpush.bf16.xpose.msra.mxu0 %v2460
        %2470 = vmatmul.bf16.gmra.mxu0 %v2457
        %v2471 = vpop.f32.mrf.mxu0
        %v2472 = vadd.f32 0.0, %v2471
        %v2473 = vpop.f32.mrf.mxu0
        %v2474 = vadd.f32 0.0, %v2473
        %2475 = vdwg.mxu0
        %2476 = vrot.lane.b32.xlu0 %v1434, 112
        %v2477 = vpop.permute.xlu0 %2476
        %2478 = vrot.lane.b32.xlu0 %v1439, 112
        %v2479 = vpop.permute.xlu0 %2478
        %v2481 = vsel %vm1349, %v2477, 0
        %v2484 = vsel %vm1349, %v2479, 0
        %2486 = vmatpush.bf16.xpose.msra.mxu0 0
        %2487 = vmatpush.bf16.xpose.msra.mxu0 0
        %2488 = vmatpush.bf16.xpose.msra.mxu0 0
        %2489 = vmatpush.bf16.xpose.msra.mxu0 0
        %2490 = vmatpush.bf16.xpose.msra.mxu0 0
        %2491 = vmatpush.bf16.xpose.msra.mxu0 0
        %2492 = vmatpush.bf16.xpose.msra.mxu0 0
        %2493 = vmatpush.bf16.xpose.msra.mxu0 %v2484
        %2494 = vmatmul.bf16.gmra.mxu0 %v2481
        %v2495 = vpop.f32.mrf.mxu0
        %v2496 = vadd.f32 0.0, %v2495
        %v2497 = vpop.f32.mrf.mxu0
        %v2498 = vadd.f32 0.0, %v2497
        %2499 = vdwg.mxu0
        %2500 = vrot.lane.b32.xlu0 %v1464, 112
        %v2501 = vpop.permute.xlu0 %2500
        %2502 = vrot.lane.b32.xlu0 %v1469, 112
        %v2503 = vpop.permute.xlu0 %2502
        %v2505 = vsel %vm1349, %v2501, 0
        %v2508 = vsel %vm1349, %v2503, 0
        %2510 = vmatpush.bf16.xpose.msra.mxu0 0
        %2511 = vmatpush.bf16.xpose.msra.mxu0 0
        %2512 = vmatpush.bf16.xpose.msra.mxu0 0
        %2513 = vmatpush.bf16.xpose.msra.mxu0 0
        %2514 = vmatpush.bf16.xpose.msra.mxu0 0
        %2515 = vmatpush.bf16.xpose.msra.mxu0 0
        %2516 = vmatpush.bf16.xpose.msra.mxu0 0
        %2517 = vmatpush.bf16.xpose.msra.mxu0 %v2508
        %2518 = vmatmul.bf16.gmra.mxu0 %v2505
        %v2519 = vpop.f32.mrf.mxu0
        %v2520 = vadd.f32 0.0, %v2519
        %v2521 = vpop.f32.mrf.mxu0
        %v2522 = vadd.f32 0.0, %v2521
        %2523 = vdwg.mxu0
        %2524 = vrot.lane.b32.xlu0 %v1494, 112
        %v2525 = vpop.permute.xlu0 %2524
        %2526 = vrot.lane.b32.xlu0 %v1499, 112
        %v2527 = vpop.permute.xlu0 %2526
        %v2529 = vsel %vm1349, %v2525, 0
        %v2532 = vsel %vm1349, %v2527, 0
        %2534 = vmatpush.bf16.xpose.msra.mxu0 0
        %2535 = vmatpush.bf16.xpose.msra.mxu0 0
        %2536 = vmatpush.bf16.xpose.msra.mxu0 0
        %2537 = vmatpush.bf16.xpose.msra.mxu0 0
        %2538 = vmatpush.bf16.xpose.msra.mxu0 0
        %2539 = vmatpush.bf16.xpose.msra.mxu0 0
        %2540 = vmatpush.bf16.xpose.msra.mxu0 0
        %2541 = vmatpush.bf16.xpose.msra.mxu0 %v2532
        %2542 = vmatmul.bf16.gmra.mxu0 %v2529
        %v2543 = vpop.f32.mrf.mxu0
        %v2544 = vadd.f32 0.0, %v2543
        %v2545 = vpop.f32.mrf.mxu0
        %v2546 = vadd.f32 0.0, %v2545
        %2547 = vdwg.mxu0
        %v2548 = vsel %vm1520, %v2424, -inf
        %2549 = vmax.xlane.f32.xlu0 %v2548
        %v2550 = vpop.xlane.xlu0 %2549
        %v2551 = vsel %vm1520, %v2426, -inf
        %2552 = vmax.xlane.f32.xlu0 %v2551
        %v2553 = vpop.xlane.xlu0 %2552
        %v2554 = vsel %vm1520, %v2448, -inf
        %2555 = vmax.xlane.f32.xlu0 %v2554
        %v2556 = vpop.xlane.xlu0 %2555
        %v2557 = vsel %vm1520, %v2450, -inf
        %2558 = vmax.xlane.f32.xlu0 %v2557
        %v2559 = vpop.xlane.xlu0 %2558
        %v2560 = vsel %vm1520, %v2472, -inf
        %2561 = vmax.xlane.f32.xlu0 %v2560
        %v2562 = vpop.xlane.xlu0 %2561
        %v2563 = vsel %vm1520, %v2474, -inf
        %2564 = vmax.xlane.f32.xlu0 %v2563
        %v2565 = vpop.xlane.xlu0 %2564
        %v2566 = vsel %vm1520, %v2496, -inf
        %2567 = vmax.xlane.f32.xlu0 %v2566
        %v2568 = vpop.xlane.xlu0 %2567
        %v2569 = vsel %vm1520, %v2498, -inf
        %2570 = vmax.xlane.f32.xlu0 %v2569
        %v2571 = vpop.xlane.xlu0 %2570
        %v2572 = vsel %vm1520, %v2520, -inf
        %2573 = vmax.xlane.f32.xlu0 %v2572
        %v2574 = vpop.xlane.xlu0 %2573
        %v2575 = vsel %vm1520, %v2522, -inf
        %2576 = vmax.xlane.f32.xlu0 %v2575
        %v2577 = vpop.xlane.xlu0 %2576
        %v2578 = vsel %vm1520, %v2544, -inf
        %2579 = vmax.xlane.f32.xlu0 %v2578
        %v2580 = vpop.xlane.xlu0 %2579
        %v2581 = vsel %vm1520, %v2546, -inf
        %2582 = vmax.xlane.f32.xlu0 %v2581
        %v2583 = vpop.xlane.xlu0 %2582
        %v2584 = vsub.f32 %v2424, %v2550
        %v2585 = vsub.f32 %v2426, %v2553
        %v2586 = vsub.f32 %v2448, %v2556
        %v2587 = vsub.f32 %v2450, %v2559
        %v2588 = vsub.f32 %v2472, %v2562
        %v2589 = vsub.f32 %v2474, %v2565
        %v2590 = vsub.f32 %v2496, %v2568
        %v2591 = vsub.f32 %v2498, %v2571
        %v2592 = vsub.f32 %v2520, %v2574
        %v2593 = vsub.f32 %v2522, %v2577
        %v2594 = vsub.f32 %v2544, %v2580
        %v2595 = vsub.f32 %v2546, %v2583
        %v2596 = vmul.f32 %v2584, 1.442695
        %v2597 = vpow.pop %v2596
        %v2598 = vmul.f32 %v2585, 1.442695
        %v2599 = vpow.pop %v2598
        %v2600 = vmul.f32 %v2586, 1.442695
        %v2601 = vpow.pop %v2600
        %v2602 = vmul.f32 %v2587, 1.442695
        %v2603 = vpow.pop %v2602
        %v2604 = vmul.f32 %v2588, 1.442695
        %v2605 = vpow.pop %v2604
        %v2606 = vmul.f32 %v2589, 1.442695
        %v2607 = vpow.pop %v2606
        %v2608 = vmul.f32 %v2590, 1.442695
        %v2609 = vpow.pop %v2608
        %v2610 = vmul.f32 %v2591, 1.442695
        %v2611 = vpow.pop %v2610
        %v2612 = vmul.f32 %v2592, 1.442695
        %v2613 = vpow.pop %v2612
        %v2614 = vmul.f32 %v2593, 1.442695
        %v2615 = vpow.pop %v2614
        %v2616 = vmul.f32 %v2594, 1.442695
        %v2617 = vpow.pop %v2616
        %v2618 = vmul.f32 %v2595, 1.442695
        %v2619 = vpow.pop %v2618
        %v2620 = vsel %vm1520, %v2597, 0.0
        %2621 = vadd.xlane.f32.xlu0 %v2620
        %v2622 = vpop.xlane.xlu0 %2621
        %v2623 = vsel %vm1520, %v2599, 0.0
        %2624 = vadd.xlane.f32.xlu0 %v2623
        %v2625 = vpop.xlane.xlu0 %2624
        %v2626 = vsel %vm1520, %v2601, 0.0
        %2627 = vadd.xlane.f32.xlu0 %v2626
        %v2628 = vpop.xlane.xlu0 %2627
        %v2629 = vsel %vm1520, %v2603, 0.0
        %2630 = vadd.xlane.f32.xlu0 %v2629
        %v2631 = vpop.xlane.xlu0 %2630
        %v2632 = vsel %vm1520, %v2605, 0.0
        %2633 = vadd.xlane.f32.xlu0 %v2632
        %v2634 = vpop.xlane.xlu0 %2633
        %v2635 = vsel %vm1520, %v2607, 0.0
        %2636 = vadd.xlane.f32.xlu0 %v2635
        %v2637 = vpop.xlane.xlu0 %2636
        %v2638 = vsel %vm1520, %v2609, 0.0
        %2639 = vadd.xlane.f32.xlu0 %v2638
        %v2640 = vpop.xlane.xlu0 %2639
        %v2641 = vsel %vm1520, %v2611, 0.0
        %2642 = vadd.xlane.f32.xlu0 %v2641
        %v2643 = vpop.xlane.xlu0 %2642
        %v2644 = vsel %vm1520, %v2613, 0.0
        %2645 = vadd.xlane.f32.xlu0 %v2644
        %v2646 = vpop.xlane.xlu0 %2645
        %v2647 = vsel %vm1520, %v2615, 0.0
        %2648 = vadd.xlane.f32.xlu0 %v2647
        %v2649 = vpop.xlane.xlu0 %2648
        %v2650 = vsel %vm1520, %v2617, 0.0
        %2651 = vadd.xlane.f32.xlu0 %v2650
        %v2652 = vpop.xlane.xlu0 %2651
        %v2653 = vsel %vm1520, %v2619, 0.0
        %2654 = vadd.xlane.f32.xlu0 %v2653
        %v2655 = vpop.xlane.xlu0 %2654
        %v2656 = vrcp.pop %v2622
        %v2657 = vrcp.pop %v2625
        %v2658 = vrcp.pop %v2628
        %v2659 = vrcp.pop %v2631
        %v2660 = vrcp.pop %v2634
        %v2661 = vrcp.pop %v2637
        %v2662 = vrcp.pop %v2640
        %v2663 = vrcp.pop %v2643
        %v2664 = vrcp.pop %v2646
        %v2665 = vrcp.pop %v2649
        %v2666 = vrcp.pop %v2652
        %v2667 = vrcp.pop %v2655
        %v2668 = vmul.f32 %v2597, %v2656
        %v2669 = vmul.f32 %v2599, %v2657
        %v2670 = vmul.f32 %v2601, %v2658
        %v2671 = vmul.f32 %v2603, %v2659
        %v2672 = vmul.f32 %v2605, %v2660
        %v2673 = vmul.f32 %v2607, %v2661
        %v2674 = vmul.f32 %v2609, %v2662
        %v2675 = vmul.f32 %v2611, %v2663
        %v2676 = vmul.f32 %v2613, %v2664
        %v2677 = vmul.f32 %v2615, %v2665
        %v2678 = vmul.f32 %v2617, %v2666
        %v2679 = vmul.f32 %v2619, %v2667
        %v2680 = vpack.c.bf16 %v2668, %v2668
        %v2681 = vpack.c.bf16 %v2669, %v2669
        %v2682 = vpack.c.bf16 %v2670, %v2670
        %v2683 = vpack.c.bf16 %v2671, %v2671
        %v2684 = vpack.c.bf16 %v2672, %v2672
        %v2685 = vpack.c.bf16 %v2673, %v2673
        %v2686 = vpack.c.bf16 %v2674, %v2674
        %v2687 = vpack.c.bf16 %v2675, %v2675
        %v2688 = vpack.c.bf16 %v2676, %v2676
        %v2689 = vpack.c.bf16 %v2677, %v2677
        %v2690 = vpack.c.bf16 %v2678, %v2678
        %v2691 = vpack.c.bf16 %v2679, %v2679
        %v2694 = vunpack.c.l.b16 %v2680
        %v2695 = vunpack.c.l.b16 %v2681
        %v2696 = vpack.c.b16 %v2695, %v2694
        %2697 = vrot.lane.b32.xlu0 %v1674, 112
        %v2698 = vpop.permute.xlu0 %2697
        %v2701 = vsel %vm1520, %v2696, 0
        %2703 = vmatpush.bf16.msra.mxu0 0
        %2704 = vmatpush.bf16.msra.mxu0 0
        %2705 = vmatpush.bf16.msra.mxu0 0
        %2706 = vmatpush.bf16.msra.mxu0 0
        %2707 = vmatpush.bf16.msra.mxu0 0
        %2708 = vmatpush.bf16.msra.mxu0 0
        %2709 = vmatpush.bf16.msra.mxu0 0
        %2710 = vmatpush.bf16.msra.mxu0 %v2698
        %2711 = vmatmul.bf16.gmra.mxu0 %v2701
        %v2712 = vpop.f32.mrf.mxu0
        %v2713 = vadd.f32 0.0, %v2712
        %v2714 = vpop.f32.mrf.mxu0
        %v2715 = vadd.f32 0.0, %v2714
        %2716 = vdwg.mxu0
        %v2719 = vunpack.c.l.b16 %v2682
        %v2720 = vunpack.c.l.b16 %v2683
        %v2721 = vpack.c.b16 %v2720, %v2719
        %2722 = vrot.lane.b32.xlu0 %v1702, 112
        %v2723 = vpop.permute.xlu0 %2722
        %v2726 = vsel %vm1520, %v2721, 0
        %2728 = vmatpush.bf16.msra.mxu0 0
        %2729 = vmatpush.bf16.msra.mxu0 0
        %2730 = vmatpush.bf16.msra.mxu0 0
        %2731 = vmatpush.bf16.msra.mxu0 0
        %2732 = vmatpush.bf16.msra.mxu0 0
        %2733 = vmatpush.bf16.msra.mxu0 0
        %2734 = vmatpush.bf16.msra.mxu0 0
        %2735 = vmatpush.bf16.msra.mxu0 %v2723
        %2736 = vmatmul.bf16.gmra.mxu0 %v2726
        %v2737 = vpop.f32.mrf.mxu0
        %v2738 = vadd.f32 0.0, %v2737
        %v2739 = vpop.f32.mrf.mxu0
        %v2740 = vadd.f32 0.0, %v2739
        %2741 = vdwg.mxu0
        %v2744 = vunpack.c.l.b16 %v2684
        %v2745 = vunpack.c.l.b16 %v2685
        %v2746 = vpack.c.b16 %v2745, %v2744
        %2747 = vrot.lane.b32.xlu0 %v1730, 112
        %v2748 = vpop.permute.xlu0 %2747
        %v2751 = vsel %vm1520, %v2746, 0
        %2753 = vmatpush.bf16.msra.mxu0 0
        %2754 = vmatpush.bf16.msra.mxu0 0
        %2755 = vmatpush.bf16.msra.mxu0 0
        %2756 = vmatpush.bf16.msra.mxu0 0
        %2757 = vmatpush.bf16.msra.mxu0 0
        %2758 = vmatpush.bf16.msra.mxu0 0
        %2759 = vmatpush.bf16.msra.mxu0 0
        %2760 = vmatpush.bf16.msra.mxu0 %v2748
        %2761 = vmatmul.bf16.gmra.mxu0 %v2751
        %v2762 = vpop.f32.mrf.mxu0
        %v2763 = vadd.f32 0.0, %v2762
        %v2764 = vpop.f32.mrf.mxu0
        %v2765 = vadd.f32 0.0, %v2764
        %2766 = vdwg.mxu0
        %v2769 = vunpack.c.l.b16 %v2686
        %v2770 = vunpack.c.l.b16 %v2687
        %v2771 = vpack.c.b16 %v2770, %v2769
        %2772 = vrot.lane.b32.xlu0 %v1758, 112
        %v2773 = vpop.permute.xlu0 %2772
        %v2776 = vsel %vm1520, %v2771, 0
        %2778 = vmatpush.bf16.msra.mxu0 0
        %2779 = vmatpush.bf16.msra.mxu0 0
        %2780 = vmatpush.bf16.msra.mxu0 0
        %2781 = vmatpush.bf16.msra.mxu0 0
        %2782 = vmatpush.bf16.msra.mxu0 0
        %2783 = vmatpush.bf16.msra.mxu0 0
        %2784 = vmatpush.bf16.msra.mxu0 0
        %2785 = vmatpush.bf16.msra.mxu0 %v2773
        %2786 = vmatmul.bf16.gmra.mxu0 %v2776
        %v2787 = vpop.f32.mrf.mxu0
        %v2788 = vadd.f32 0.0, %v2787
        %v2789 = vpop.f32.mrf.mxu0
        %v2790 = vadd.f32 0.0, %v2789
        %2791 = vdwg.mxu0
        %v2794 = vunpack.c.l.b16 %v2688
        %v2795 = vunpack.c.l.b16 %v2689
        %v2796 = vpack.c.b16 %v2795, %v2794
        %2797 = vrot.lane.b32.xlu0 %v1786, 112
        %v2798 = vpop.permute.xlu0 %2797
        %v2801 = vsel %vm1520, %v2796, 0
        %2803 = vmatpush.bf16.msra.mxu0 0
        %2804 = vmatpush.bf16.msra.mxu0 0
        %2805 = vmatpush.bf16.msra.mxu0 0
        %2806 = vmatpush.bf16.msra.mxu0 0
        %2807 = vmatpush.bf16.msra.mxu0 0
        %2808 = vmatpush.bf16.msra.mxu0 0
        %2809 = vmatpush.bf16.msra.mxu0 0
        %2810 = vmatpush.bf16.msra.mxu0 %v2798
        %2811 = vmatmul.bf16.gmra.mxu0 %v2801
        %v2812 = vpop.f32.mrf.mxu0
        %v2813 = vadd.f32 0.0, %v2812
        %v2814 = vpop.f32.mrf.mxu0
        %v2815 = vadd.f32 0.0, %v2814
        %2816 = vdwg.mxu0
        %v2819 = vunpack.c.l.b16 %v2690
        %v2820 = vunpack.c.l.b16 %v2691
        %v2821 = vpack.c.b16 %v2820, %v2819
        %2822 = vrot.lane.b32.xlu0 %v1814, 112
        %v2823 = vpop.permute.xlu0 %2822
        %v2826 = vsel %vm1520, %v2821, 0
        %2828 = vmatpush.bf16.msra.mxu0 0
        %2829 = vmatpush.bf16.msra.mxu0 0
        %2830 = vmatpush.bf16.msra.mxu0 0
        %2831 = vmatpush.bf16.msra.mxu0 0
        %2832 = vmatpush.bf16.msra.mxu0 0
        %2833 = vmatpush.bf16.msra.mxu0 0
        %2834 = vmatpush.bf16.msra.mxu0 0
        %2835 = vmatpush.bf16.msra.mxu0 %v2823
        %2836 = vmatmul.bf16.gmra.mxu0 %v2826
        %v2837 = vpop.f32.mrf.mxu0
        %v2838 = vadd.f32 0.0, %v2837
        %v2839 = vpop.f32.mrf.mxu0
        %v2840 = vadd.f32 0.0, %v2839
        %2841 = vdwg.mxu0
        %v2842 = vpack.c.bf16 %v2715, %v2713
        %v2843 = vpack.c.bf16 %v2740, %v2738
        %v2844 = vpack.c.bf16 %v2765, %v2763
        %v2845 = vpack.c.bf16 %v2790, %v2788
        %v2846 = vpack.c.bf16 %v2815, %v2813
        %v2847 = vpack.c.bf16 %v2840, %v2838
        %v2849 = vsel %vm1349, %v2842, 0
        %v2852 = vsel %vm1349, %v2843, 0
        %v2855 = vsel %vm1349, %v2844, 0
        %v2858 = vsel %vm1349, %v2845, 0
        %v2861 = vsel %vm1349, %v2846, 0
        %v2864 = vsel %vm1349, %v2847, 0
        %v2867 = vsel %vm2301, %v1301, 0
        %2869 = vmatpush.bf16.msra.mxu0 0
        %2870 = vmatpush.bf16.msra.mxu0 0
        %2871 = vmatpush.bf16.msra.mxu0 0
        %2872 = vmatpush.bf16.msra.mxu0 0
        %2873 = vmatpush.bf16.msra.mxu0 0
        %2874 = vmatpush.bf16.msra.mxu0 0
        %2875 = vmatpush.bf16.msra.mxu0 0
        %2876 = vmatpush.bf16.msra.mxu0 %v2867
        %2877 = vmatmul.bf16.gmra.mxu0 %v2849
        %v2878 = vpop.f32.mrf.mxu0
        %v2879 = vadd.f32 0.0, %v2878
        %v2880 = vpop.f32.mrf.mxu0
        %v2881 = vadd.f32 0.0, %v2880
        %2882 = vmatmul.bf16.gmra.mxu0 %v2852
        %v2883 = vpop.f32.mrf.mxu0
        %v2884 = vadd.f32 0.0, %v2883
        %v2885 = vpop.f32.mrf.mxu0
        %v2886 = vadd.f32 0.0, %v2885
        %2887 = vmatmul.bf16.gmra.mxu0 %v2855
        %v2888 = vpop.f32.mrf.mxu0
        %v2889 = vadd.f32 0.0, %v2888
        %v2890 = vpop.f32.mrf.mxu0
        %v2891 = vadd.f32 0.0, %v2890
        %2892 = vmatmul.bf16.gmra.mxu0 %v2858
        %v2893 = vpop.f32.mrf.mxu0
        %v2894 = vadd.f32 0.0, %v2893
        %v2895 = vpop.f32.mrf.mxu0
        %v2896 = vadd.f32 0.0, %v2895
        %2897 = vmatmul.bf16.gmra.mxu0 %v2861
        %v2898 = vpop.f32.mrf.mxu0
        %v2899 = vadd.f32 0.0, %v2898
        %v2900 = vpop.f32.mrf.mxu0
        %v2901 = vadd.f32 0.0, %v2900
        %2902 = vmatmul.bf16.gmra.mxu0 %v2864
        %v2903 = vpop.f32.mrf.mxu0
        %v2904 = vadd.f32 0.0, %v2903
        %v2905 = vpop.f32.mrf.mxu0
        %v2906 = vadd.f32 0.0, %v2905
        %2907 = vdwg.mxu0
        %v2908 = vadd.f32 %v2375, %v2879
        %v2909 = vadd.f32 %v2377, %v2881
        %v2910 = vadd.f32 %v2380, %v2884
        %v2911 = vadd.f32 %v2382, %v2886
        %v2912 = vadd.f32 %v2385, %v2889
        %v2913 = vadd.f32 %v2387, %v2891
        %v2914 = vadd.f32 %v2390, %v2894
        %v2915 = vadd.f32 %v2392, %v2896
        %v2916 = vadd.f32 %v2395, %v2899
        %v2917 = vadd.f32 %v2397, %v2901
        %v2918 = vadd.f32 %v2400, %v2904
        %v2919 = vadd.f32 %v2402, %v2906
        %2920 = vrot.lane.b32.xlu0 %v1343, 104
        %v2921 = vpop.permute.xlu0 %2920
        %2922 = vrot.lane.b32.xlu0 %v1348, 104
        %v2923 = vpop.permute.xlu0 %2922
        %v2925 = vsel %vm1349, %v2921, 0
        %v2928 = vsel %vm1349, %v2923, 0
        %2930 = vmatpush.bf16.xpose.msra.mxu0 0
        %2931 = vmatpush.bf16.xpose.msra.mxu0 0
        %2932 = vmatpush.bf16.xpose.msra.mxu0 0
        %2933 = vmatpush.bf16.xpose.msra.mxu0 0
        %2934 = vmatpush.bf16.xpose.msra.mxu0 0
        %2935 = vmatpush.bf16.xpose.msra.mxu0 0
        %2936 = vmatpush.bf16.xpose.msra.mxu0 0
        %2937 = vmatpush.bf16.xpose.msra.mxu0 %v2928
        %2938 = vmatmul.bf16.gmra.mxu0 %v2925
        %v2939 = vpop.f32.mrf.mxu0
        %v2940 = vadd.f32 0.0, %v2939
        %v2941 = vpop.f32.mrf.mxu0
        %v2942 = vadd.f32 0.0, %v2941
        %2943 = vdwg.mxu0
        %2944 = vrot.lane.b32.xlu0 %v1374, 104
        %v2945 = vpop.permute.xlu0 %2944
        %2946 = vrot.lane.b32.xlu0 %v1379, 104
        %v2947 = vpop.permute.xlu0 %2946
        %v2949 = vsel %vm1349, %v2945, 0
        %v2952 = vsel %vm1349, %v2947, 0
        %2954 = vmatpush.bf16.xpose.msra.mxu0 0
        %2955 = vmatpush.bf16.xpose.msra.mxu0 0
        %2956 = vmatpush.bf16.xpose.msra.mxu0 0
        %2957 = vmatpush.bf16.xpose.msra.mxu0 0
        %2958 = vmatpush.bf16.xpose.msra.mxu0 0
        %2959 = vmatpush.bf16.xpose.msra.mxu0 0
        %2960 = vmatpush.bf16.xpose.msra.mxu0 0
        %2961 = vmatpush.bf16.xpose.msra.mxu0 %v2952
        %2962 = vmatmul.bf16.gmra.mxu0 %v2949
        %v2963 = vpop.f32.mrf.mxu0
        %v2964 = vadd.f32 0.0, %v2963
        %v2965 = vpop.f32.mrf.mxu0
        %v2966 = vadd.f32 0.0, %v2965
        %2967 = vdwg.mxu0
        %2968 = vrot.lane.b32.xlu0 %v1404, 104
        %v2969 = vpop.permute.xlu0 %2968
        %2970 = vrot.lane.b32.xlu0 %v1409, 104
        %v2971 = vpop.permute.xlu0 %2970
        %v2973 = vsel %vm1349, %v2969, 0
        %v2976 = vsel %vm1349, %v2971, 0
        %2978 = vmatpush.bf16.xpose.msra.mxu0 0
        %2979 = vmatpush.bf16.xpose.msra.mxu0 0
        %2980 = vmatpush.bf16.xpose.msra.mxu0 0
        %2981 = vmatpush.bf16.xpose.msra.mxu0 0
        %2982 = vmatpush.bf16.xpose.msra.mxu0 0
        %2983 = vmatpush.bf16.xpose.msra.mxu0 0
        %2984 = vmatpush.bf16.xpose.msra.mxu0 0
        %2985 = vmatpush.bf16.xpose.msra.mxu0 %v2976
        %2986 = vmatmul.bf16.gmra.mxu0 %v2973
        %v2987 = vpop.f32.mrf.mxu0
        %v2988 = vadd.f32 0.0, %v2987
        %v2989 = vpop.f32.mrf.mxu0
        %v2990 = vadd.f32 0.0, %v2989
        %2991 = vdwg.mxu0
        %2992 = vrot.lane.b32.xlu0 %v1434, 104
        %v2993 = vpop.permute.xlu0 %2992
        %2994 = vrot.lane.b32.xlu0 %v1439, 104
        %v2995 = vpop.permute.xlu0 %2994
        %v2997 = vsel %vm1349, %v2993, 0
        %v3000 = vsel %vm1349, %v2995, 0
        %3002 = vmatpush.bf16.xpose.msra.mxu0 0
        %3003 = vmatpush.bf16.xpose.msra.mxu0 0
        %3004 = vmatpush.bf16.xpose.msra.mxu0 0
        %3005 = vmatpush.bf16.xpose.msra.mxu0 0
        %3006 = vmatpush.bf16.xpose.msra.mxu0 0
        %3007 = vmatpush.bf16.xpose.msra.mxu0 0
        %3008 = vmatpush.bf16.xpose.msra.mxu0 0
        %3009 = vmatpush.bf16.xpose.msra.mxu0 %v3000
        %3010 = vmatmul.bf16.gmra.mxu0 %v2997
        %v3011 = vpop.f32.mrf.mxu0
        %v3012 = vadd.f32 0.0, %v3011
        %v3013 = vpop.f32.mrf.mxu0
        %v3014 = vadd.f32 0.0, %v3013
        %3015 = vdwg.mxu0
        %3016 = vrot.lane.b32.xlu0 %v1464, 104
        %v3017 = vpop.permute.xlu0 %3016
        %3018 = vrot.lane.b32.xlu0 %v1469, 104
        %v3019 = vpop.permute.xlu0 %3018
        %v3021 = vsel %vm1349, %v3017, 0
        %v3024 = vsel %vm1349, %v3019, 0
        %3026 = vmatpush.bf16.xpose.msra.mxu0 0
        %3027 = vmatpush.bf16.xpose.msra.mxu0 0
        %3028 = vmatpush.bf16.xpose.msra.mxu0 0
        %3029 = vmatpush.bf16.xpose.msra.mxu0 0
        %3030 = vmatpush.bf16.xpose.msra.mxu0 0
        %3031 = vmatpush.bf16.xpose.msra.mxu0 0
        %3032 = vmatpush.bf16.xpose.msra.mxu0 0
        %3033 = vmatpush.bf16.xpose.msra.mxu0 %v3024
        %3034 = vmatmul.bf16.gmra.mxu0 %v3021
        %v3035 = vpop.f32.mrf.mxu0
        %v3036 = vadd.f32 0.0, %v3035
        %v3037 = vpop.f32.mrf.mxu0
        %v3038 = vadd.f32 0.0, %v3037
        %3039 = vdwg.mxu0
        %3040 = vrot.lane.b32.xlu0 %v1494, 104
        %v3041 = vpop.permute.xlu0 %3040
        %3042 = vrot.lane.b32.xlu0 %v1499, 104
        %v3043 = vpop.permute.xlu0 %3042
        %v3045 = vsel %vm1349, %v3041, 0
        %v3048 = vsel %vm1349, %v3043, 0
        %3050 = vmatpush.bf16.xpose.msra.mxu0 0
        %3051 = vmatpush.bf16.xpose.msra.mxu0 0
        %3052 = vmatpush.bf16.xpose.msra.mxu0 0
        %3053 = vmatpush.bf16.xpose.msra.mxu0 0
        %3054 = vmatpush.bf16.xpose.msra.mxu0 0
        %3055 = vmatpush.bf16.xpose.msra.mxu0 0
        %3056 = vmatpush.bf16.xpose.msra.mxu0 0
        %3057 = vmatpush.bf16.xpose.msra.mxu0 %v3048
        %3058 = vmatmul.bf16.gmra.mxu0 %v3045
        %v3059 = vpop.f32.mrf.mxu0
        %v3060 = vadd.f32 0.0, %v3059
        %v3061 = vpop.f32.mrf.mxu0
        %v3062 = vadd.f32 0.0, %v3061
        %3063 = vdwg.mxu0
        %v3064 = vsel %vm1520, %v2940, -inf
        %3065 = vmax.xlane.f32.xlu0 %v3064
        %v3066 = vpop.xlane.xlu0 %3065
        %v3067 = vsel %vm1520, %v2942, -inf
        %3068 = vmax.xlane.f32.xlu0 %v3067
        %v3069 = vpop.xlane.xlu0 %3068
        %v3070 = vsel %vm1520, %v2964, -inf
        %3071 = vmax.xlane.f32.xlu0 %v3070
        %v3072 = vpop.xlane.xlu0 %3071
        %v3073 = vsel %vm1520, %v2966, -inf
        %3074 = vmax.xlane.f32.xlu0 %v3073
        %v3075 = vpop.xlane.xlu0 %3074
        %v3076 = vsel %vm1520, %v2988, -inf
        %3077 = vmax.xlane.f32.xlu0 %v3076
        %v3078 = vpop.xlane.xlu0 %3077
        %v3079 = vsel %vm1520, %v2990, -inf
        %3080 = vmax.xlane.f32.xlu0 %v3079
        %v3081 = vpop.xlane.xlu0 %3080
        %v3082 = vsel %vm1520, %v3012, -inf
        %3083 = vmax.xlane.f32.xlu0 %v3082
        %v3084 = vpop.xlane.xlu0 %3083
        %v3085 = vsel %vm1520, %v3014, -inf
        %3086 = vmax.xlane.f32.xlu0 %v3085
        %v3087 = vpop.xlane.xlu0 %3086
        %v3088 = vsel %vm1520, %v3036, -inf
        %3089 = vmax.xlane.f32.xlu0 %v3088
        %v3090 = vpop.xlane.xlu0 %3089
        %v3091 = vsel %vm1520, %v3038, -inf
        %3092 = vmax.xlane.f32.xlu0 %v3091
        %v3093 = vpop.xlane.xlu0 %3092
        %v3094 = vsel %vm1520, %v3060, -inf
        %3095 = vmax.xlane.f32.xlu0 %v3094
        %v3096 = vpop.xlane.xlu0 %3095
        %v3097 = vsel %vm1520, %v3062, -inf
        %3098 = vmax.xlane.f32.xlu0 %v3097
        %v3099 = vpop.xlane.xlu0 %3098
        %v3100 = vsub.f32 %v2940, %v3066
        %v3101 = vsub.f32 %v2942, %v3069
        %v3102 = vsub.f32 %v2964, %v3072
        %v3103 = vsub.f32 %v2966, %v3075
        %v3104 = vsub.f32 %v2988, %v3078
        %v3105 = vsub.f32 %v2990, %v3081
        %v3106 = vsub.f32 %v3012, %v3084
        %v3107 = vsub.f32 %v3014, %v3087
        %v3108 = vsub.f32 %v3036, %v3090
        %v3109 = vsub.f32 %v3038, %v3093
        %v3110 = vsub.f32 %v3060, %v3096
        %v3111 = vsub.f32 %v3062, %v3099
        %v3112 = vmul.f32 %v3100, 1.442695
        %v3113 = vpow.pop %v3112
        %v3114 = vmul.f32 %v3101, 1.442695
        %v3115 = vpow.pop %v3114
        %v3116 = vmul.f32 %v3102, 1.442695
        %v3117 = vpow.pop %v3116
        %v3118 = vmul.f32 %v3103, 1.442695
        %v3119 = vpow.pop %v3118
        %v3120 = vmul.f32 %v3104, 1.442695
        %v3121 = vpow.pop %v3120
        %v3122 = vmul.f32 %v3105, 1.442695
        %v3123 = vpow.pop %v3122
        %v3124 = vmul.f32 %v3106, 1.442695
        %v3125 = vpow.pop %v3124
        %v3126 = vmul.f32 %v3107, 1.442695
        %v3127 = vpow.pop %v3126
        %v3128 = vmul.f32 %v3108, 1.442695
        %v3129 = vpow.pop %v3128
        %v3130 = vmul.f32 %v3109, 1.442695
        %v3131 = vpow.pop %v3130
        %v3132 = vmul.f32 %v3110, 1.442695
        %v3133 = vpow.pop %v3132
        %v3134 = vmul.f32 %v3111, 1.442695
        %v3135 = vpow.pop %v3134
        %v3136 = vsel %vm1520, %v3113, 0.0
        %3137 = vadd.xlane.f32.xlu0 %v3136
        %v3138 = vpop.xlane.xlu0 %3137
        %v3139 = vsel %vm1520, %v3115, 0.0
        %3140 = vadd.xlane.f32.xlu0 %v3139
        %v3141 = vpop.xlane.xlu0 %3140
        %v3142 = vsel %vm1520, %v3117, 0.0
        %3143 = vadd.xlane.f32.xlu0 %v3142
        %v3144 = vpop.xlane.xlu0 %3143
        %v3145 = vsel %vm1520, %v3119, 0.0
        %3146 = vadd.xlane.f32.xlu0 %v3145
        %v3147 = vpop.xlane.xlu0 %3146
        %v3148 = vsel %vm1520, %v3121, 0.0
        %3149 = vadd.xlane.f32.xlu0 %v3148
        %v3150 = vpop.xlane.xlu0 %3149
        %v3151 = vsel %vm1520, %v3123, 0.0
        %3152 = vadd.xlane.f32.xlu0 %v3151
        %v3153 = vpop.xlane.xlu0 %3152
        %v3154 = vsel %vm1520, %v3125, 0.0
        %3155 = vadd.xlane.f32.xlu0 %v3154
        %v3156 = vpop.xlane.xlu0 %3155
        %v3157 = vsel %vm1520, %v3127, 0.0
        %3158 = vadd.xlane.f32.xlu0 %v3157
        %v3159 = vpop.xlane.xlu0 %3158
        %v3160 = vsel %vm1520, %v3129, 0.0
        %3161 = vadd.xlane.f32.xlu0 %v3160
        %v3162 = vpop.xlane.xlu0 %3161
        %v3163 = vsel %vm1520, %v3131, 0.0
        %3164 = vadd.xlane.f32.xlu0 %v3163
        %v3165 = vpop.xlane.xlu0 %3164
        %v3166 = vsel %vm1520, %v3133, 0.0
        %3167 = vadd.xlane.f32.xlu0 %v3166
        %v3168 = vpop.xlane.xlu0 %3167
        %v3169 = vsel %vm1520, %v3135, 0.0
        %3170 = vadd.xlane.f32.xlu0 %v3169
        %v3171 = vpop.xlane.xlu0 %3170
        %v3172 = vrcp.pop %v3138
        %v3173 = vrcp.pop %v3141
        %v3174 = vrcp.pop %v3144
        %v3175 = vrcp.pop %v3147
        %v3176 = vrcp.pop %v3150
        %v3177 = vrcp.pop %v3153
        %v3178 = vrcp.pop %v3156
        %v3179 = vrcp.pop %v3159
        %v3180 = vrcp.pop %v3162
        %v3181 = vrcp.pop %v3165
        %v3182 = vrcp.pop %v3168
        %v3183 = vrcp.pop %v3171
        %v3184 = vmul.f32 %v3113, %v3172
        %v3185 = vmul.f32 %v3115, %v3173
        %v3186 = vmul.f32 %v3117, %v3174
        %v3187 = vmul.f32 %v3119, %v3175
        %v3188 = vmul.f32 %v3121, %v3176
        %v3189 = vmul.f32 %v3123, %v3177
        %v3190 = vmul.f32 %v3125, %v3178
        %v3191 = vmul.f32 %v3127, %v3179
        %v3192 = vmul.f32 %v3129, %v3180
        %v3193 = vmul.f32 %v3131, %v3181
        %v3194 = vmul.f32 %v3133, %v3182
        %v3195 = vmul.f32 %v3135, %v3183
        %v3196 = vpack.c.bf16 %v3184, %v3184
        %v3197 = vpack.c.bf16 %v3185, %v3185
        %v3198 = vpack.c.bf16 %v3186, %v3186
        %v3199 = vpack.c.bf16 %v3187, %v3187
        %v3200 = vpack.c.bf16 %v3188, %v3188
        %v3201 = vpack.c.bf16 %v3189, %v3189
        %v3202 = vpack.c.bf16 %v3190, %v3190
        %v3203 = vpack.c.bf16 %v3191, %v3191
        %v3204 = vpack.c.bf16 %v3192, %v3192
        %v3205 = vpack.c.bf16 %v3193, %v3193
        %v3206 = vpack.c.bf16 %v3194, %v3194
        %v3207 = vpack.c.bf16 %v3195, %v3195
        %v3210 = vunpack.c.l.b16 %v3196
        %v3211 = vunpack.c.l.b16 %v3197
        %v3212 = vpack.c.b16 %v3211, %v3210
        %3213 = vrot.lane.b32.xlu0 %v1674, 104
        %v3214 = vpop.permute.xlu0 %3213
        %v3217 = vsel %vm1520, %v3212, 0
        %3219 = vmatpush.bf16.msra.mxu0 0
        %3220 = vmatpush.bf16.msra.mxu0 0
        %3221 = vmatpush.bf16.msra.mxu0 0
        %3222 = vmatpush.bf16.msra.mxu0 0
        %3223 = vmatpush.bf16.msra.mxu0 0
        %3224 = vmatpush.bf16.msra.mxu0 0
        %3225 = vmatpush.bf16.msra.mxu0 0
        %3226 = vmatpush.bf16.msra.mxu0 %v3214
        %3227 = vmatmul.bf16.gmra.mxu0 %v3217
        %v3228 = vpop.f32.mrf.mxu0
        %v3229 = vadd.f32 0.0, %v3228
        %v3230 = vpop.f32.mrf.mxu0
        %v3231 = vadd.f32 0.0, %v3230
        %3232 = vdwg.mxu0
        %v3235 = vunpack.c.l.b16 %v3198
        %v3236 = vunpack.c.l.b16 %v3199
        %v3237 = vpack.c.b16 %v3236, %v3235
        %3238 = vrot.lane.b32.xlu0 %v1702, 104
        %v3239 = vpop.permute.xlu0 %3238
        %v3242 = vsel %vm1520, %v3237, 0
        %3244 = vmatpush.bf16.msra.mxu0 0
        %3245 = vmatpush.bf16.msra.mxu0 0
        %3246 = vmatpush.bf16.msra.mxu0 0
        %3247 = vmatpush.bf16.msra.mxu0 0
        %3248 = vmatpush.bf16.msra.mxu0 0
        %3249 = vmatpush.bf16.msra.mxu0 0
        %3250 = vmatpush.bf16.msra.mxu0 0
        %3251 = vmatpush.bf16.msra.mxu0 %v3239
        %3252 = vmatmul.bf16.gmra.mxu0 %v3242
        %v3253 = vpop.f32.mrf.mxu0
        %v3254 = vadd.f32 0.0, %v3253
        %v3255 = vpop.f32.mrf.mxu0
        %v3256 = vadd.f32 0.0, %v3255
        %3257 = vdwg.mxu0
        %v3260 = vunpack.c.l.b16 %v3200
        %v3261 = vunpack.c.l.b16 %v3201
        %v3262 = vpack.c.b16 %v3261, %v3260
        %3263 = vrot.lane.b32.xlu0 %v1730, 104
        %v3264 = vpop.permute.xlu0 %3263
        %v3267 = vsel %vm1520, %v3262, 0
        %3269 = vmatpush.bf16.msra.mxu0 0
        %3270 = vmatpush.bf16.msra.mxu0 0
        %3271 = vmatpush.bf16.msra.mxu0 0
        %3272 = vmatpush.bf16.msra.mxu0 0
        %3273 = vmatpush.bf16.msra.mxu0 0
        %3274 = vmatpush.bf16.msra.mxu0 0
        %3275 = vmatpush.bf16.msra.mxu0 0
        %3276 = vmatpush.bf16.msra.mxu0 %v3264
        %3277 = vmatmul.bf16.gmra.mxu0 %v3267
        %v3278 = vpop.f32.mrf.mxu0
        %v3279 = vadd.f32 0.0, %v3278
        %v3280 = vpop.f32.mrf.mxu0
        %v3281 = vadd.f32 0.0, %v3280
        %3282 = vdwg.mxu0
        %v3285 = vunpack.c.l.b16 %v3202
        %v3286 = vunpack.c.l.b16 %v3203
        %v3287 = vpack.c.b16 %v3286, %v3285
        %3288 = vrot.lane.b32.xlu0 %v1758, 104
        %v3289 = vpop.permute.xlu0 %3288
        %v3292 = vsel %vm1520, %v3287, 0
        %3294 = vmatpush.bf16.msra.mxu0 0
        %3295 = vmatpush.bf16.msra.mxu0 0
        %3296 = vmatpush.bf16.msra.mxu0 0
        %3297 = vmatpush.bf16.msra.mxu0 0
        %3298 = vmatpush.bf16.msra.mxu0 0
        %3299 = vmatpush.bf16.msra.mxu0 0
        %3300 = vmatpush.bf16.msra.mxu0 0
        %3301 = vmatpush.bf16.msra.mxu0 %v3289
        %3302 = vmatmul.bf16.gmra.mxu0 %v3292
        %v3303 = vpop.f32.mrf.mxu0
        %v3304 = vadd.f32 0.0, %v3303
        %v3305 = vpop.f32.mrf.mxu0
        %v3306 = vadd.f32 0.0, %v3305
        %3307 = vdwg.mxu0
        %v3310 = vunpack.c.l.b16 %v3204
        %v3311 = vunpack.c.l.b16 %v3205
        %v3312 = vpack.c.b16 %v3311, %v3310
        %3313 = vrot.lane.b32.xlu0 %v1786, 104
        %v3314 = vpop.permute.xlu0 %3313
        %v3317 = vsel %vm1520, %v3312, 0
        %3319 = vmatpush.bf16.msra.mxu0 0
        %3320 = vmatpush.bf16.msra.mxu0 0
        %3321 = vmatpush.bf16.msra.mxu0 0
        %3322 = vmatpush.bf16.msra.mxu0 0
        %3323 = vmatpush.bf16.msra.mxu0 0
        %3324 = vmatpush.bf16.msra.mxu0 0
        %3325 = vmatpush.bf16.msra.mxu0 0
        %3326 = vmatpush.bf16.msra.mxu0 %v3314
        %3327 = vmatmul.bf16.gmra.mxu0 %v3317
        %v3328 = vpop.f32.mrf.mxu0
        %v3329 = vadd.f32 0.0, %v3328
        %v3330 = vpop.f32.mrf.mxu0
        %v3331 = vadd.f32 0.0, %v3330
        %3332 = vdwg.mxu0
        %v3335 = vunpack.c.l.b16 %v3206
        %v3336 = vunpack.c.l.b16 %v3207
        %v3337 = vpack.c.b16 %v3336, %v3335
        %3338 = vrot.lane.b32.xlu0 %v1814, 104
        %v3339 = vpop.permute.xlu0 %3338
        %v3342 = vsel %vm1520, %v3337, 0
        %3344 = vmatpush.bf16.msra.mxu0 0
        %3345 = vmatpush.bf16.msra.mxu0 0
        %3346 = vmatpush.bf16.msra.mxu0 0
        %3347 = vmatpush.bf16.msra.mxu0 0
        %3348 = vmatpush.bf16.msra.mxu0 0
        %3349 = vmatpush.bf16.msra.mxu0 0
        %3350 = vmatpush.bf16.msra.mxu0 0
        %3351 = vmatpush.bf16.msra.mxu0 %v3339
        %3352 = vmatmul.bf16.gmra.mxu0 %v3342
        %v3353 = vpop.f32.mrf.mxu0
        %v3354 = vadd.f32 0.0, %v3353
        %v3355 = vpop.f32.mrf.mxu0
        %v3356 = vadd.f32 0.0, %v3355
        %3357 = vdwg.mxu0
        %v3358 = vpack.c.bf16 %v3231, %v3229
        %v3359 = vpack.c.bf16 %v3256, %v3254
        %v3360 = vpack.c.bf16 %v3281, %v3279
        %v3361 = vpack.c.bf16 %v3306, %v3304
        %v3362 = vpack.c.bf16 %v3331, %v3329
        %v3363 = vpack.c.bf16 %v3356, %v3354
        %v3365 = vsel %vm1349, %v3358, 0
        %v3368 = vsel %vm1349, %v3359, 0
        %v3371 = vsel %vm1349, %v3360, 0
        %v3374 = vsel %vm1349, %v3361, 0
        %v3377 = vsel %vm1349, %v3362, 0
        %v3380 = vsel %vm1349, %v3363, 0
        %v3383 = vsel %vm2301, %v1302, 0
        %3385 = vmatpush.bf16.msra.mxu0 0
        %3386 = vmatpush.bf16.msra.mxu0 0
        %3387 = vmatpush.bf16.msra.mxu0 0
        %3388 = vmatpush.bf16.msra.mxu0 0
        %3389 = vmatpush.bf16.msra.mxu0 0
        %3390 = vmatpush.bf16.msra.mxu0 0
        %3391 = vmatpush.bf16.msra.mxu0 0
        %3392 = vmatpush.bf16.msra.mxu0 %v3383
        %3393 = vmatmul.bf16.gmra.mxu0 %v3365
        %v3394 = vpop.f32.mrf.mxu0
        %v3395 = vadd.f32 0.0, %v3394
        %v3396 = vpop.f32.mrf.mxu0
        %v3397 = vadd.f32 0.0, %v3396
        %3398 = vmatmul.bf16.gmra.mxu0 %v3368
        %v3399 = vpop.f32.mrf.mxu0
        %v3400 = vadd.f32 0.0, %v3399
        %v3401 = vpop.f32.mrf.mxu0
        %v3402 = vadd.f32 0.0, %v3401
        %3403 = vmatmul.bf16.gmra.mxu0 %v3371
        %v3404 = vpop.f32.mrf.mxu0
        %v3405 = vadd.f32 0.0, %v3404
        %v3406 = vpop.f32.mrf.mxu0
        %v3407 = vadd.f32 0.0, %v3406
        %3408 = vmatmul.bf16.gmra.mxu0 %v3374
        %v3409 = vpop.f32.mrf.mxu0
        %v3410 = vadd.f32 0.0, %v3409
        %v3411 = vpop.f32.mrf.mxu0
        %v3412 = vadd.f32 0.0, %v3411
        %3413 = vmatmul.bf16.gmra.mxu0 %v3377
        %v3414 = vpop.f32.mrf.mxu0
        %v3415 = vadd.f32 0.0, %v3414
        %v3416 = vpop.f32.mrf.mxu0
        %v3417 = vadd.f32 0.0, %v3416
        %3418 = vmatmul.bf16.gmra.mxu0 %v3380
        %v3419 = vpop.f32.mrf.mxu0
        %v3420 = vadd.f32 0.0, %v3419
        %v3421 = vpop.f32.mrf.mxu0
        %v3422 = vadd.f32 0.0, %v3421
        %3423 = vdwg.mxu0
        %v3424 = vadd.f32 %v2908, %v3395
        %v3425 = vadd.f32 %v2909, %v3397
        %v3426 = vadd.f32 %v2910, %v3400
        %v3427 = vadd.f32 %v2911, %v3402
        %v3428 = vadd.f32 %v2912, %v3405
        %v3429 = vadd.f32 %v2913, %v3407
        %v3430 = vadd.f32 %v2914, %v3410
        %v3431 = vadd.f32 %v2915, %v3412
        %v3432 = vadd.f32 %v2916, %v3415
        %v3433 = vadd.f32 %v2917, %v3417
        %v3434 = vadd.f32 %v2918, %v3420
        %v3435 = vadd.f32 %v2919, %v3422
        %v3436 = vadd.f32 %v778, %v3424
        %v3437 = vadd.f32 %v779, %v3425
        %v3438 = vadd.f32 %v780, %v3426
        %v3439 = vadd.f32 %v781, %v3427
        %v3440 = vadd.f32 %v782, %v3428
        %v3441 = vadd.f32 %v783, %v3429
        %v3442 = vadd.f32 %v784, %v3430
        %v3443 = vadd.f32 %v785, %v3431
        %v3444 = vadd.f32 %v786, %v3432
        %v3445 = vadd.f32 %v787, %v3433
        %v3446 = vadd.f32 %v788, %v3434
        %v3447 = vadd.f32 %v789, %v3435
        %v3448 = vld [vmem:[%s724] sm:$0x1]
        %v3450 = vperm.slane %v3448, 0
        %v3452 = vadd.f32 %v3436, %v3450
        %v3453 = vadd.f32 %v3437, %v3450
        %v3454 = vadd.f32 %v3438, %v3450
        %v3455 = vadd.f32 %v3439, %v3450
        %v3456 = vadd.f32 %v3440, %v3450
        %v3457 = vadd.f32 %v3441, %v3450
        %v3458 = vadd.f32 %v3442, %v3450
        %v3459 = vadd.f32 %v3443, %v3450
        %v3460 = vadd.f32 %v3444, %v3450
        %v3461 = vadd.f32 %v3445, %v3450
        %v3462 = vadd.f32 %v3446, %v3450
        %v3463 = vadd.f32 %v3447, %v3450
        %v3464 = vld [vmem:[%s727] sm:$0x1]
        %v3465 = vld [vmem:[%s730] sm:$0x1]
        %v3466 = vsel %vm792, %v3452, 0.0
        %3467 = vadd.xlane.f32.xlu0 %v3466
        %v3468 = vpop.xlane.xlu0 %3467
        %v3469 = vsel %vm792, %v3453, 0.0
        %3470 = vadd.xlane.f32.xlu0 %v3469
        %v3471 = vpop.xlane.xlu0 %3470
        %v3472 = vsel %vm792, %v3454, 0.0
        %3473 = vadd.xlane.f32.xlu0 %v3472
        %v3474 = vpop.xlane.xlu0 %3473
        %v3475 = vsel %vm792, %v3455, 0.0
        %3476 = vadd.xlane.f32.xlu0 %v3475
        %v3477 = vpop.xlane.xlu0 %3476
        %v3478 = vsel %vm792, %v3456, 0.0
        %3479 = vadd.xlane.f32.xlu0 %v3478
        %v3480 = vpop.xlane.xlu0 %3479
        %v3481 = vsel %vm792, %v3457, 0.0
        %3482 = vadd.xlane.f32.xlu0 %v3481
        %v3483 = vpop.xlane.xlu0 %3482
        %v3484 = vsel %vm792, %v3458, 0.0
        %3485 = vadd.xlane.f32.xlu0 %v3484
        %v3486 = vpop.xlane.xlu0 %3485
        %v3487 = vsel %vm792, %v3459, 0.0
        %3488 = vadd.xlane.f32.xlu0 %v3487
        %v3489 = vpop.xlane.xlu0 %3488
        %v3490 = vsel %vm792, %v3460, 0.0
        %3491 = vadd.xlane.f32.xlu0 %v3490
        %v3492 = vpop.xlane.xlu0 %3491
        %v3493 = vsel %vm792, %v3461, 0.0
        %3494 = vadd.xlane.f32.xlu0 %v3493
        %v3495 = vpop.xlane.xlu0 %3494
        %v3496 = vsel %vm792, %v3462, 0.0
        %3497 = vadd.xlane.f32.xlu0 %v3496
        %v3498 = vpop.xlane.xlu0 %3497
        %v3499 = vsel %vm792, %v3463, 0.0
        %3500 = vadd.xlane.f32.xlu0 %v3499
        %v3501 = vpop.xlane.xlu0 %3500
        %v3502 = vmul.f32 %v3468, %v835
        %v3503 = vmul.f32 %v3471, %v835
        %v3504 = vmul.f32 %v3474, %v835
        %v3505 = vmul.f32 %v3477, %v835
        %v3506 = vmul.f32 %v3480, %v835
        %v3507 = vmul.f32 %v3483, %v835
        %v3508 = vmul.f32 %v3486, %v835
        %v3509 = vmul.f32 %v3489, %v835
        %v3510 = vmul.f32 %v3492, %v835
        %v3511 = vmul.f32 %v3495, %v835
        %v3512 = vmul.f32 %v3498, %v835
        %v3513 = vmul.f32 %v3501, %v835
        %v3514 = vsub.f32 %v3452, %v3502
        %v3515 = vsub.f32 %v3453, %v3503
        %v3516 = vsub.f32 %v3454, %v3504
        %v3517 = vsub.f32 %v3455, %v3505
        %v3518 = vsub.f32 %v3456, %v3506
        %v3519 = vsub.f32 %v3457, %v3507
        %v3520 = vsub.f32 %v3458, %v3508
        %v3521 = vsub.f32 %v3459, %v3509
        %v3522 = vsub.f32 %v3460, %v3510
        %v3523 = vsub.f32 %v3461, %v3511
        %v3524 = vsub.f32 %v3462, %v3512
        %v3525 = vsub.f32 %v3463, %v3513
        %v3526 = vmul.f32 %v3514, %v3514
        %v3527 = vmul.f32 %v3515, %v3515
        %v3528 = vmul.f32 %v3516, %v3516
        %v3529 = vmul.f32 %v3517, %v3517
        %v3530 = vmul.f32 %v3518, %v3518
        %v3531 = vmul.f32 %v3519, %v3519
        %v3532 = vmul.f32 %v3520, %v3520
        %v3533 = vmul.f32 %v3521, %v3521
        %v3534 = vmul.f32 %v3522, %v3522
        %v3535 = vmul.f32 %v3523, %v3523
        %v3536 = vmul.f32 %v3524, %v3524
        %v3537 = vmul.f32 %v3525, %v3525
        %v3538 = vsel %vm792, %v3526, 0.0
        %3539 = vadd.xlane.f32.xlu0 %v3538
        %v3540 = vpop.xlane.xlu0 %3539
        %v3541 = vsel %vm792, %v3527, 0.0
        %3542 = vadd.xlane.f32.xlu0 %v3541
        %v3543 = vpop.xlane.xlu0 %3542
        %v3544 = vsel %vm792, %v3528, 0.0
        %3545 = vadd.xlane.f32.xlu0 %v3544
        %v3546 = vpop.xlane.xlu0 %3545
        %v3547 = vsel %vm792, %v3529, 0.0
        %3548 = vadd.xlane.f32.xlu0 %v3547
        %v3549 = vpop.xlane.xlu0 %3548
        %v3550 = vsel %vm792, %v3530, 0.0
        %3551 = vadd.xlane.f32.xlu0 %v3550
        %v3552 = vpop.xlane.xlu0 %3551
        %v3553 = vsel %vm792, %v3531, 0.0
        %3554 = vadd.xlane.f32.xlu0 %v3553
        %v3555 = vpop.xlane.xlu0 %3554
        %v3556 = vsel %vm792, %v3532, 0.0
        %3557 = vadd.xlane.f32.xlu0 %v3556
        %v3558 = vpop.xlane.xlu0 %3557
        %v3559 = vsel %vm792, %v3533, 0.0
        %3560 = vadd.xlane.f32.xlu0 %v3559
        %v3561 = vpop.xlane.xlu0 %3560
        %v3562 = vsel %vm792, %v3534, 0.0
        %3563 = vadd.xlane.f32.xlu0 %v3562
        %v3564 = vpop.xlane.xlu0 %3563
        %v3565 = vsel %vm792, %v3535, 0.0
        %3566 = vadd.xlane.f32.xlu0 %v3565
        %v3567 = vpop.xlane.xlu0 %3566
        %v3568 = vsel %vm792, %v3536, 0.0
        %3569 = vadd.xlane.f32.xlu0 %v3568
        %v3570 = vpop.xlane.xlu0 %3569
        %v3571 = vsel %vm792, %v3537, 0.0
        %3572 = vadd.xlane.f32.xlu0 %v3571
        %v3573 = vpop.xlane.xlu0 %3572
        %v3574 = vmul.f32 %v3540, %v835
        %v3575 = vmul.f32 %v3543, %v835
        %v3576 = vmul.f32 %v3546, %v835
        %v3577 = vmul.f32 %v3549, %v835
        %v3578 = vmul.f32 %v3552, %v835
        %v3579 = vmul.f32 %v3555, %v835
        %v3580 = vmul.f32 %v3558, %v835
        %v3581 = vmul.f32 %v3561, %v835
        %v3582 = vmul.f32 %v3564, %v835
        %v3583 = vmul.f32 %v3567, %v835
        %v3584 = vmul.f32 %v3570, %v835
        %v3585 = vmul.f32 %v3573, %v835
        %v3586 = vadd.f32 %v3574, 1e-05
        %v3587 = vadd.f32 %v3575, 1e-05
        %v3588 = vadd.f32 %v3576, 1e-05
        %v3589 = vadd.f32 %v3577, 1e-05
        %v3590 = vadd.f32 %v3578, 1e-05
        %v3591 = vadd.f32 %v3579, 1e-05
        %v3592 = vadd.f32 %v3580, 1e-05
        %v3593 = vadd.f32 %v3581, 1e-05
        %v3594 = vadd.f32 %v3582, 1e-05
        %v3595 = vadd.f32 %v3583, 1e-05
        %v3596 = vadd.f32 %v3584, 1e-05
        %v3597 = vadd.f32 %v3585, 1e-05
        %v3598 = vrsqrt.pop %v3586
        %v3599 = vmul.f32 %v3598, %v3586
        %v3600 = vmul.f32 %v3599, %v3598
        %v3601 = vmul.f32 0.5, %v3600
        %v3602 = vsub.f32 1.5, %v3601
        %v3603 = vmul.f32 %v3598, %v3602
        %vm3604 = vweird.f32 %v3586
        %vm3605 = vweird.f32 %v3598
        %vm3606 = vmor %vm3604, %vm3605
        %v3607 = vsel %vm3606, %v3598, %v3603
        %v3608 = vrsqrt.pop %v3587
        %v3609 = vmul.f32 %v3608, %v3587
        %v3610 = vmul.f32 %v3609, %v3608
        %v3611 = vmul.f32 0.5, %v3610
        %v3612 = vsub.f32 1.5, %v3611
        %v3613 = vmul.f32 %v3608, %v3612
        %vm3614 = vweird.f32 %v3587
        %vm3615 = vweird.f32 %v3608
        %vm3616 = vmor %vm3614, %vm3615
        %v3617 = vsel %vm3616, %v3608, %v3613
        %v3618 = vrsqrt.pop %v3588
        %v3619 = vmul.f32 %v3618, %v3588
        %v3620 = vmul.f32 %v3619, %v3618
        %v3621 = vmul.f32 0.5, %v3620
        %v3622 = vsub.f32 1.5, %v3621
        %v3623 = vmul.f32 %v3618, %v3622
        %vm3624 = vweird.f32 %v3588
        %vm3625 = vweird.f32 %v3618
        %vm3626 = vmor %vm3624, %vm3625
        %v3627 = vsel %vm3626, %v3618, %v3623
        %v3628 = vrsqrt.pop %v3589
        %v3629 = vmul.f32 %v3628, %v3589
        %v3630 = vmul.f32 %v3629, %v3628
        %v3631 = vmul.f32 0.5, %v3630
        %v3632 = vsub.f32 1.5, %v3631
        %v3633 = vmul.f32 %v3628, %v3632
        %vm3634 = vweird.f32 %v3589
        %vm3635 = vweird.f32 %v3628
        %vm3636 = vmor %vm3634, %vm3635
        %v3637 = vsel %vm3636, %v3628, %v3633
        %v3638 = vrsqrt.pop %v3590
        %v3639 = vmul.f32 %v3638, %v3590
        %v3640 = vmul.f32 %v3639, %v3638
        %v3641 = vmul.f32 0.5, %v3640
        %v3642 = vsub.f32 1.5, %v3641
        %v3643 = vmul.f32 %v3638, %v3642
        %vm3644 = vweird.f32 %v3590
        %vm3645 = vweird.f32 %v3638
        %vm3646 = vmor %vm3644, %vm3645
        %v3647 = vsel %vm3646, %v3638, %v3643
        %v3648 = vrsqrt.pop %v3591
        %v3649 = vmul.f32 %v3648, %v3591
        %v3650 = vmul.f32 %v3649, %v3648
        %v3651 = vmul.f32 0.5, %v3650
        %v3652 = vsub.f32 1.5, %v3651
        %v3653 = vmul.f32 %v3648, %v3652
        %vm3654 = vweird.f32 %v3591
        %vm3655 = vweird.f32 %v3648
        %vm3656 = vmor %vm3654, %vm3655
        %v3657 = vsel %vm3656, %v3648, %v3653
        %v3658 = vrsqrt.pop %v3592
        %v3659 = vmul.f32 %v3658, %v3592
        %v3660 = vmul.f32 %v3659, %v3658
        %v3661 = vmul.f32 0.5, %v3660
        %v3662 = vsub.f32 1.5, %v3661
        %v3663 = vmul.f32 %v3658, %v3662
        %vm3664 = vweird.f32 %v3592
        %vm3665 = vweird.f32 %v3658
        %vm3666 = vmor %vm3664, %vm3665
        %v3667 = vsel %vm3666, %v3658, %v3663
        %v3668 = vrsqrt.pop %v3593
        %v3669 = vmul.f32 %v3668, %v3593
        %v3670 = vmul.f32 %v3669, %v3668
        %v3671 = vmul.f32 0.5, %v3670
        %v3672 = vsub.f32 1.5, %v3671
        %v3673 = vmul.f32 %v3668, %v3672
        %vm3674 = vweird.f32 %v3593
        %vm3675 = vweird.f32 %v3668
        %vm3676 = vmor %vm3674, %vm3675
        %v3677 = vsel %vm3676, %v3668, %v3673
        %v3678 = vrsqrt.pop %v3594
        %v3679 = vmul.f32 %v3678, %v3594
        %v3680 = vmul.f32 %v3679, %v3678
        %v3681 = vmul.f32 0.5, %v3680
        %v3682 = vsub.f32 1.5, %v3681
        %v3683 = vmul.f32 %v3678, %v3682
        %vm3684 = vweird.f32 %v3594
        %vm3685 = vweird.f32 %v3678
        %vm3686 = vmor %vm3684, %vm3685
        %v3687 = vsel %vm3686, %v3678, %v3683
        %v3688 = vrsqrt.pop %v3595
        %v3689 = vmul.f32 %v3688, %v3595
        %v3690 = vmul.f32 %v3689, %v3688
        %v3691 = vmul.f32 0.5, %v3690
        %v3692 = vsub.f32 1.5, %v3691
        %v3693 = vmul.f32 %v3688, %v3692
        %vm3694 = vweird.f32 %v3595
        %vm3695 = vweird.f32 %v3688
        %vm3696 = vmor %vm3694, %vm3695
        %v3697 = vsel %vm3696, %v3688, %v3693
        %v3698 = vrsqrt.pop %v3596
        %v3699 = vmul.f32 %v3698, %v3596
        %v3700 = vmul.f32 %v3699, %v3698
        %v3701 = vmul.f32 0.5, %v3700
        %v3702 = vsub.f32 1.5, %v3701
        %v3703 = vmul.f32 %v3698, %v3702
        %vm3704 = vweird.f32 %v3596
        %vm3705 = vweird.f32 %v3698
        %vm3706 = vmor %vm3704, %vm3705
        %v3707 = vsel %vm3706, %v3698, %v3703
        %v3708 = vrsqrt.pop %v3597
        %v3709 = vmul.f32 %v3708, %v3597
        %v3710 = vmul.f32 %v3709, %v3708
        %v3711 = vmul.f32 0.5, %v3710
        %v3712 = vsub.f32 1.5, %v3711
        %v3713 = vmul.f32 %v3708, %v3712
        %vm3714 = vweird.f32 %v3597
        %vm3715 = vweird.f32 %v3708
        %vm3716 = vmor %vm3714, %vm3715
        %v3717 = vsel %vm3716, %v3708, %v3713
        %v3718 = vmul.f32 %v3514, %v3607
        %v3719 = vmul.f32 %v3515, %v3617
        %v3720 = vmul.f32 %v3516, %v3627
        %v3721 = vmul.f32 %v3517, %v3637
        %v3722 = vmul.f32 %v3518, %v3647
        %v3723 = vmul.f32 %v3519, %v3657
        %v3724 = vmul.f32 %v3520, %v3667
        %v3725 = vmul.f32 %v3521, %v3677
        %v3726 = vmul.f32 %v3522, %v3687
        %v3727 = vmul.f32 %v3523, %v3697
        %v3728 = vmul.f32 %v3524, %v3707
        %v3729 = vmul.f32 %v3525, %v3717
        %v3731 = vperm.slane %v3464, 0
        %v3733 = vmul.f32 %v3718, %v3731
        %v3734 = vmul.f32 %v3719, %v3731
        %v3735 = vmul.f32 %v3720, %v3731
        %v3736 = vmul.f32 %v3721, %v3731
        %v3737 = vmul.f32 %v3722, %v3731
        %v3738 = vmul.f32 %v3723, %v3731
        %v3739 = vmul.f32 %v3724, %v3731
        %v3740 = vmul.f32 %v3725, %v3731
        %v3741 = vmul.f32 %v3726, %v3731
        %v3742 = vmul.f32 %v3727, %v3731
        %v3743 = vmul.f32 %v3728, %v3731
        %v3744 = vmul.f32 %v3729, %v3731
        %v3746 = vperm.slane %v3465, 0
        %v3748 = vadd.f32 %v3733, %v3746
        %v3749 = vadd.f32 %v3734, %v3746
        %v3750 = vadd.f32 %v3735, %v3746
        %v3751 = vadd.f32 %v3736, %v3746
        %v3752 = vadd.f32 %v3737, %v3746
        %v3753 = vadd.f32 %v3738, %v3746
        %v3754 = vadd.f32 %v3739, %v3746
        %v3755 = vadd.f32 %v3740, %v3746
        %v3756 = vadd.f32 %v3741, %v3746
        %v3757 = vadd.f32 %v3742, %v3746
        %v3758 = vadd.f32 %v3743, %v3746
        %v3759 = vadd.f32 %v3744, %v3746
        %v3760 = vpack.c.bf16 %v3749, %v3748
        %v3761 = vpack.c.bf16 %v3751, %v3750
        %v3762 = vpack.c.bf16 %v3753, %v3752
        %v3763 = vpack.c.bf16 %v3755, %v3754
        %v3764 = vpack.c.bf16 %v3757, %v3756
        %v3765 = vpack.c.bf16 %v3759, %v3758
        %v3766 = vld [vmem:[%s735] sm:$0xf]
        %v3767 = vld [vmem:[%s735 + $0x4] sm:$0xf]
        %v3768 = vld [vmem:[%s735 + $0x8] sm:$0xf]
        %v3769 = vld [vmem:[%s735 + $0xc] sm:$0xf]
        %v3770 = vld [vmem:[%s738] sm:$0x1]
        %v3772 = vperm.slane %v3770, 0
        %v3778 = vunpack.c.l.b16 %v3766
        %v3779 = vunpack.c.l.b16 %v3767
        %v3780 = vunpack.c.l.b16 %v3768
        %v3781 = vunpack.c.l.b16 %v3769
        %v3782 = vpack.c.b16 %v3779, %v3778
        %v3783 = vpack.c.b16 %v3781, %v3780
        %v3787 = vsel %vm792, %v3760, 0
        %v3790 = vsel %vm792, %v3761, 0
        %v3793 = vsel %vm792, %v3762, 0
        %v3796 = vsel %vm792, %v3763, 0
        %v3799 = vsel %vm792, %v3764, 0
        %v3802 = vsel %vm792, %v3765, 0
        %3804 = vmatpush.bf16.msra.mxu0 0
        %3805 = vmatpush.bf16.msra.mxu0 0
        %3806 = vmatpush.bf16.msra.mxu0 0
        %3807 = vmatpush.bf16.msra.mxu0 0
        %3808 = vmatpush.bf16.msra.mxu0 0
        %3809 = vmatpush.bf16.msra.mxu0 0
        %3810 = vmatpush.bf16.msra.mxu0 %v3783
        %3811 = vmatpush.bf16.msra.mxu0 %v3782
        %3812 = vmatmul.bf16.gmra.mxu0 %v3787
        %v3813 = vpop.f32.mrf.mxu0
        %v3814 = vadd.f32 %v3772, %v3813
        %v3815 = vpop.f32.mrf.mxu0
        %v3816 = vadd.f32 %v3772, %v3815
        %3817 = vmatmul.bf16.gmra.mxu0 %v3790
        %v3818 = vpop.f32.mrf.mxu0
        %v3819 = vadd.f32 %v3772, %v3818
        %v3820 = vpop.f32.mrf.mxu0
        %v3821 = vadd.f32 %v3772, %v3820
        %3822 = vmatmul.bf16.gmra.mxu0 %v3793
        %v3823 = vpop.f32.mrf.mxu0
        %v3824 = vadd.f32 %v3772, %v3823
        %v3825 = vpop.f32.mrf.mxu0
        %v3826 = vadd.f32 %v3772, %v3825
        %3827 = vmatmul.bf16.gmra.mxu0 %v3796
        %v3828 = vpop.f32.mrf.mxu0
        %v3829 = vadd.f32 %v3772, %v3828
        %v3830 = vpop.f32.mrf.mxu0
        %v3831 = vadd.f32 %v3772, %v3830
        %3832 = vmatmul.bf16.gmra.mxu0 %v3799
        %v3833 = vpop.f32.mrf.mxu0
        %v3834 = vadd.f32 %v3772, %v3833
        %v3835 = vpop.f32.mrf.mxu0
        %v3836 = vadd.f32 %v3772, %v3835
        %3837 = vmatmul.bf16.gmra.mxu0 %v3802
        %v3838 = vpop.f32.mrf.mxu0
        %v3839 = vadd.f32 %v3772, %v3838
        %v3840 = vpop.f32.mrf.mxu0
        %v3841 = vadd.f32 %v3772, %v3840
        %3842 = vdwg.mxu0
        %v3843 = vmul.f32 %v3814, %v3814
        %v3844 = vmul.f32 %v3816, %v3816
        %v3845 = vmul.f32 %v3819, %v3819
        %v3846 = vmul.f32 %v3821, %v3821
        %v3847 = vmul.f32 %v3824, %v3824
        %v3848 = vmul.f32 %v3826, %v3826
        %v3849 = vmul.f32 %v3829, %v3829
        %v3850 = vmul.f32 %v3831, %v3831
        %v3851 = vmul.f32 %v3834, %v3834
        %v3852 = vmul.f32 %v3836, %v3836
        %v3853 = vmul.f32 %v3839, %v3839
        %v3854 = vmul.f32 %v3841, %v3841
        %v3855 = vmul.f32 %v3814, %v3843
        %v3856 = vmul.f32 %v3816, %v3844
        %v3857 = vmul.f32 %v3819, %v3845
        %v3858 = vmul.f32 %v3821, %v3846
        %v3859 = vmul.f32 %v3824, %v3847
        %v3860 = vmul.f32 %v3826, %v3848
        %v3861 = vmul.f32 %v3829, %v3849
        %v3862 = vmul.f32 %v3831, %v3850
        %v3863 = vmul.f32 %v3834, %v3851
        %v3864 = vmul.f32 %v3836, %v3852
        %v3865 = vmul.f32 %v3839, %v3853
        %v3866 = vmul.f32 %v3841, %v3854
        %v3867 = vmul.f32 %v3855, 0.044715
        %v3868 = vmul.f32 %v3856, 0.044715
        %v3869 = vmul.f32 %v3857, 0.044715
        %v3870 = vmul.f32 %v3858, 0.044715
        %v3871 = vmul.f32 %v3859, 0.044715
        %v3872 = vmul.f32 %v3860, 0.044715
        %v3873 = vmul.f32 %v3861, 0.044715
        %v3874 = vmul.f32 %v3862, 0.044715
        %v3875 = vmul.f32 %v3863, 0.044715
        %v3876 = vmul.f32 %v3864, 0.044715
        %v3877 = vmul.f32 %v3865, 0.044715
        %v3878 = vmul.f32 %v3866, 0.044715
        %v3879 = vadd.f32 %v3814, %v3867
        %v3880 = vadd.f32 %v3816, %v3868
        %v3881 = vadd.f32 %v3819, %v3869
        %v3882 = vadd.f32 %v3821, %v3870
        %v3883 = vadd.f32 %v3824, %v3871
        %v3884 = vadd.f32 %v3826, %v3872
        %v3885 = vadd.f32 %v3829, %v3873
        %v3886 = vadd.f32 %v3831, %v3874
        %v3887 = vadd.f32 %v3834, %v3875
        %v3888 = vadd.f32 %v3836, %v3876
        %v3889 = vadd.f32 %v3839, %v3877
        %v3890 = vadd.f32 %v3841, %v3878
        %v3891 = vmul.f32 %v3879, 0.7978846
        %v3892 = vmul.f32 %v3880, 0.7978846
        %v3893 = vmul.f32 %v3881, 0.7978846
        %v3894 = vmul.f32 %v3882, 0.7978846
        %v3895 = vmul.f32 %v3883, 0.7978846
        %v3896 = vmul.f32 %v3884, 0.7978846
        %v3897 = vmul.f32 %v3885, 0.7978846
        %v3898 = vmul.f32 %v3886, 0.7978846
        %v3899 = vmul.f32 %v3887, 0.7978846
        %v3900 = vmul.f32 %v3888, 0.7978846
        %v3901 = vmul.f32 %v3889, 0.7978846
        %v3902 = vmul.f32 %v3890, 0.7978846
        %v3903 = vtanh.pop %v3891
        %v3904 = vtanh.pop %v3892
        %v3905 = vtanh.pop %v3893
        %v3906 = vtanh.pop %v3894
        %v3907 = vtanh.pop %v3895
        %v3908 = vtanh.pop %v3896
        %v3909 = vtanh.pop %v3897
        %v3910 = vtanh.pop %v3898
        %v3911 = vtanh.pop %v3899
        %v3912 = vtanh.pop %v3900
        %v3913 = vtanh.pop %v3901
        %v3914 = vtanh.pop %v3902
        %v3915 = vadd.f32 %v3903, 1.0
        %v3916 = vadd.f32 %v3904, 1.0
        %v3917 = vadd.f32 %v3905, 1.0
        %v3918 = vadd.f32 %v3906, 1.0
        %v3919 = vadd.f32 %v3907, 1.0
        %v3920 = vadd.f32 %v3908, 1.0
        %v3921 = vadd.f32 %v3909, 1.0
        %v3922 = vadd.f32 %v3910, 1.0
        %v3923 = vadd.f32 %v3911, 1.0
        %v3924 = vadd.f32 %v3912, 1.0
        %v3925 = vadd.f32 %v3913, 1.0
        %v3926 = vadd.f32 %v3914, 1.0
        %v3927 = vmul.f32 %v3915, 0.5
        %v3928 = vmul.f32 %v3916, 0.5
        %v3929 = vmul.f32 %v3917, 0.5
        %v3930 = vmul.f32 %v3918, 0.5
        %v3931 = vmul.f32 %v3919, 0.5
        %v3932 = vmul.f32 %v3920, 0.5
        %v3933 = vmul.f32 %v3921, 0.5
        %v3934 = vmul.f32 %v3922, 0.5
        %v3935 = vmul.f32 %v3923, 0.5
        %v3936 = vmul.f32 %v3924, 0.5
        %v3937 = vmul.f32 %v3925, 0.5
        %v3938 = vmul.f32 %v3926, 0.5
        %v3939 = vmul.f32 %v3814, %v3927
        %v3940 = vmul.f32 %v3816, %v3928
        %v3941 = vmul.f32 %v3819, %v3929
        %v3942 = vmul.f32 %v3821, %v3930
        %v3943 = vmul.f32 %v3824, %v3931
        %v3944 = vmul.f32 %v3826, %v3932
        %v3945 = vmul.f32 %v3829, %v3933
        %v3946 = vmul.f32 %v3831, %v3934
        %v3947 = vmul.f32 %v3834, %v3935
        %v3948 = vmul.f32 %v3836, %v3936
        %v3949 = vmul.f32 %v3839, %v3937
        %v3950 = vmul.f32 %v3841, %v3938
        %v3951 = vpack.c.bf16 %v3940, %v3939
        %v3952 = vpack.c.bf16 %v3942, %v3941
        %v3953 = vpack.c.bf16 %v3944, %v3943
        %v3954 = vpack.c.bf16 %v3946, %v3945
        %v3955 = vpack.c.bf16 %v3948, %v3947
        %v3956 = vpack.c.bf16 %v3950, %v3949
        %v3957 = vld [vmem:[%s743] sm:$0xf]
        %v3958 = vld [vmem:[%s743 + $0x4] sm:$0xf]
        %v3959 = vld [vmem:[%s743 + $0x8] sm:$0xf]
        %v3960 = vld [vmem:[%s743 + $0xc] sm:$0xf]
        %v3961 = vld [vmem:[%s743 + $0x10] sm:$0xf]
        %v3962 = vld [vmem:[%s743 + $0x14] sm:$0xf]
        %v3963 = vld [vmem:[%s743 + $0x18] sm:$0xf]
        %v3964 = vld [vmem:[%s743 + $0x1c] sm:$0xf]
        %v3965 = vld [vmem:[%s743 + $0x20] sm:$0xf]
        %v3966 = vld [vmem:[%s743 + $0x24] sm:$0xf]
        %v3967 = vld [vmem:[%s743 + $0x28] sm:$0xf]
        %v3968 = vld [vmem:[%s743 + $0x2c] sm:$0xf]
        %v3969 = vld [vmem:[%s743 + $0x30] sm:$0xf]
        %v3970 = vld [vmem:[%s743 + $0x34] sm:$0xf]
        %v3971 = vld [vmem:[%s743 + $0x38] sm:$0xf]
        %v3972 = vld [vmem:[%s743 + $0x3c] sm:$0xf]
        %v3973 = vld [vmem:[%s746] sm:$0x1]
        %v3975 = vperm.slane %v3973, 0
        %v3993 = vunpack.c.l.b16 %v3957
        %v3994 = vunpack.c.l.b16 %v3958
        %v3995 = vunpack.c.l.b16 %v3959
        %v3996 = vunpack.c.l.b16 %v3960
        %v3997 = vunpack.c.l.b16 %v3961
        %v3998 = vunpack.c.l.b16 %v3962
        %v3999 = vunpack.c.l.b16 %v3963
        %v4000 = vunpack.c.l.b16 %v3964
        %v4001 = vunpack.c.l.b16 %v3965
        %v4002 = vunpack.c.l.b16 %v3966
        %v4003 = vunpack.c.l.b16 %v3967
        %v4004 = vunpack.c.l.b16 %v3968
        %v4005 = vunpack.c.l.b16 %v3969
        %v4006 = vunpack.c.l.b16 %v3970
        %v4007 = vunpack.c.l.b16 %v3971
        %v4008 = vunpack.c.l.b16 %v3972
        %v4009 = vpack.c.b16 %v3994, %v3993
        %v4010 = vpack.c.b16 %v3996, %v3995
        %v4011 = vpack.c.b16 %v3998, %v3997
        %v4012 = vpack.c.b16 %v4000, %v3999
        %v4013 = vpack.c.b16 %v4002, %v4001
        %v4014 = vpack.c.b16 %v4004, %v4003
        %v4015 = vpack.c.b16 %v4006, %v4005
        %v4016 = vpack.c.b16 %v4008, %v4007
        %4025 = vmatpush.bf16.msra.mxu0 %v4016
        %4026 = vmatpush.bf16.msra.mxu0 %v4015
        %4027 = vmatpush.bf16.msra.mxu0 %v4014
        %4028 = vmatpush.bf16.msra.mxu0 %v4013
        %4029 = vmatpush.bf16.msra.mxu0 %v4012
        %4030 = vmatpush.bf16.msra.mxu0 %v4011
        %4031 = vmatpush.bf16.msra.mxu0 %v4010
        %4032 = vmatpush.bf16.msra.mxu0 %v4009
        %4033 = vmatmul.bf16.gmra.mxu0 %v3951
        %v4034 = vpop.f32.mrf.mxu0
        %v4035 = vadd.f32 %v3975, %v4034
        %v4036 = vpop.f32.mrf.mxu0
        %v4037 = vadd.f32 %v3975, %v4036
        %4038 = vmatmul.bf16.gmra.mxu0 %v3952
        %v4039 = vpop.f32.mrf.mxu0
        %v4040 = vadd.f32 %v3975, %v4039
        %v4041 = vpop.f32.mrf.mxu0
        %v4042 = vadd.f32 %v3975, %v4041
        %4043 = vmatmul.bf16.gmra.mxu0 %v3953
        %v4044 = vpop.f32.mrf.mxu0
        %v4045 = vadd.f32 %v3975, %v4044
        %v4046 = vpop.f32.mrf.mxu0
        %v4047 = vadd.f32 %v3975, %v4046
        %4048 = vmatmul.bf16.gmra.mxu0 %v3954
        %v4049 = vpop.f32.mrf.mxu0
        %v4050 = vadd.f32 %v3975, %v4049
        %v4051 = vpop.f32.mrf.mxu0
        %v4052 = vadd.f32 %v3975, %v4051
        %4053 = vmatmul.bf16.gmra.mxu0 %v3955
        %v4054 = vpop.f32.mrf.mxu0
        %v4055 = vadd.f32 %v3975, %v4054
        %v4056 = vpop.f32.mrf.mxu0
        %v4057 = vadd.f32 %v3975, %v4056
        %4058 = vmatmul.bf16.gmra.mxu0 %v3956
        %v4059 = vpop.f32.mrf.mxu0
        %v4060 = vadd.f32 %v3975, %v4059
        %v4061 = vpop.f32.mrf.mxu0
        %v4062 = vadd.f32 %v3975, %v4061
        %4063 = vdwg.mxu0
        %v4064 = vadd.f32 %v3452, %v4035
        %v4065 = vadd.f32 %v3453, %v4037
        %v4066 = vadd.f32 %v3454, %v4040
        %v4067 = vadd.f32 %v3455, %v4042
        %v4068 = vadd.f32 %v3456, %v4045
        %v4069 = vadd.f32 %v3457, %v4047
        %v4070 = vadd.f32 %v3458, %v4050
        %v4071 = vadd.f32 %v3459, %v4052
        %v4072 = vadd.f32 %v3460, %v4055
        %v4073 = vadd.f32 %v3461, %v4057
        %v4074 = vadd.f32 %v3462, %v4060
        %v4075 = vadd.f32 %v3463, %v4062
        %s4076 = smul.u32 %s37, 3
        %s4077 = sld [smem:[#allocation8 + %s4076]]
        %s4078 = smul.u32 %s37, 9
        %s4079 = sld [smem:[#allocation7 + %s4078]]
        %v4080 = vstv %s4079
        %v4081 = vmul.f32 %v4080, %v4064
        %v4082 = vmul.f32 %v4080, %v4065
        %v4083 = vmul.f32 %v4080, %v4070
        %v4084 = vmul.f32 %v4080, %v4071
        %v4085 = vstv %s4077
        %v4086 = vadd.f32 %v4085, %v4081
        %v4087 = vadd.f32 %v4085, %v4082
        %v4088 = vadd.f32 %v4085, %v4083
        %v4089 = vadd.f32 %v4085, %v4084
        %s4090 = sadd.s32 %s4078, 1
        %s4091 = sld [smem:[#allocation7 + %s4090]]
        %v4092 = vstv %s4091
        %v4093 = vmul.f32 %v4092, %v4066
        %v4094 = vmul.f32 %v4092, %v4067
        %v4095 = vmul.f32 %v4092, %v4072
        %v4096 = vmul.f32 %v4092, %v4073
        %v4097 = vadd.f32 %v4086, %v4093
        %v4098 = vadd.f32 %v4087, %v4094
        %v4099 = vadd.f32 %v4088, %v4095
        %v4100 = vadd.f32 %v4089, %v4096
        %s4101 = sadd.s32 %s4078, 2
        %s4102 = sld [smem:[#allocation7 + %s4101]]
        %v4103 = vstv %s4102
        %v4104 = vmul.f32 %v4103, %v4068
        %v4105 = vmul.f32 %v4103, %v4069
        %v4106 = vmul.f32 %v4103, %v4074
        %v4107 = vmul.f32 %v4103, %v4075
        %v4108 = vadd.f32 %v4097, %v4104
        %v4109 = vadd.f32 %v4098, %v4105
        %v4110 = vadd.f32 %v4099, %v4106
        %v4111 = vadd.f32 %v4100, %v4107
        %s4112 = sadd.s32 %s4076, 1
        %s4113 = sld [smem:[#allocation8 + %s4112]]
        %s4114 = smul.u32 %s4112, 3
        %s4115 = sld [smem:[#allocation7 + %s4114]]
        %v4116 = vstv %s4115
        %v4117 = vmul.f32 %v4116, %v4064
        %v4118 = vmul.f32 %v4116, %v4065
        %v4119 = vmul.f32 %v4116, %v4070
        %v4120 = vmul.f32 %v4116, %v4071
        %v4121 = vstv %s4113
        %v4122 = vadd.f32 %v4121, %v4117
        %v4123 = vadd.f32 %v4121, %v4118
        %v4124 = vadd.f32 %v4121, %v4119
        %v4125 = vadd.f32 %v4121, %v4120
        %s4126 = sadd.s32 %s4114, 1
        %s4127 = sld [smem:[#allocation7 + %s4126]]
        %v4128 = vstv %s4127
        %v4129 = vmul.f32 %v4128, %v4066
        %v4130 = vmul.f32 %v4128, %v4067
        %v4131 = vmul.f32 %v4128, %v4072
        %v4132 = vmul.f32 %v4128, %v4073
        %v4133 = vadd.f32 %v4122, %v4129
        %v4134 = vadd.f32 %v4123, %v4130
        %v4135 = vadd.f32 %v4124, %v4131
        %v4136 = vadd.f32 %v4125, %v4132
        %s4137 = sadd.s32 %s4114, 2
        %s4138 = sld [smem:[#allocation7 + %s4137]]
        %v4139 = vstv %s4138
        %v4140 = vmul.f32 %v4139, %v4068
        %v4141 = vmul.f32 %v4139, %v4069
        %v4142 = vmul.f32 %v4139, %v4074
        %v4143 = vmul.f32 %v4139, %v4075
        %v4144 = vadd.f32 %v4133, %v4140
        %v4145 = vadd.f32 %v4134, %v4141
        %v4146 = vadd.f32 %v4135, %v4142
        %v4147 = vadd.f32 %v4136, %v4143
        %s4148 = sadd.s32 %s4076, 2
        %s4149 = sld [smem:[#allocation8 + %s4148]]
        %s4150 = smul.u32 %s4148, 3
        %s4151 = sld [smem:[#allocation7 + %s4150]]
        %v4152 = vstv %s4151
        %v4153 = vmul.f32 %v4152, %v4064
        %v4154 = vmul.f32 %v4152, %v4065
        %v4155 = vmul.f32 %v4152, %v4070
        %v4156 = vmul.f32 %v4152, %v4071
        %v4157 = vstv %s4149
        %v4158 = vadd.f32 %v4157, %v4153
        %v4159 = vadd.f32 %v4157, %v4154
        %v4160 = vadd.f32 %v4157, %v4155
        %v4161 = vadd.f32 %v4157, %v4156
        %s4162 = sadd.s32 %s4150, 1
        %s4163 = sld [smem:[#allocation7 + %s4162]]
        %v4164 = vstv %s4163
        %v4165 = vmul.f32 %v4164, %v4066
        %v4166 = vmul.f32 %v4164, %v4067
        %v4167 = vmul.f32 %v4164, %v4072
        %v4168 = vmul.f32 %v4164, %v4073
        %v4169 = vadd.f32 %v4158, %v4165
        %v4170 = vadd.f32 %v4159, %v4166
        %v4171 = vadd.f32 %v4160, %v4167
        %v4172 = vadd.f32 %v4161, %v4168
        %s4173 = sadd.s32 %s4150, 2
        %s4174 = sld [smem:[#allocation7 + %s4173]]
        %v4175 = vstv %s4174
        %v4176 = vmul.f32 %v4175, %v4068
        %v4177 = vmul.f32 %v4175, %v4069
        %v4178 = vmul.f32 %v4175, %v4074
        %v4179 = vmul.f32 %v4175, %v4075
        %v4180 = vadd.f32 %v4169, %v4176
        %v4181 = vadd.f32 %v4170, %v4177
        %v4182 = vadd.f32 %v4171, %v4178
        %v4183 = vadd.f32 %v4172, %v4179
        %4184 = vst.msk [vmem:[#allocation2] sm:$0xff] %vm792, %v4108
        %4185 = vst.msk [vmem:[#allocation2 + $0x8] sm:$0xff] %vm792, %v4109
        %4186 = vst.msk [vmem:[#allocation2 + $0x10] sm:$0xff] %vm792, %v4144
        %4187 = vst.msk [vmem:[#allocation2 + $0x18] sm:$0xff] %vm792, %v4145
        %4188 = vst.msk [vmem:[#allocation2 + $0x20] sm:$0xff] %vm792, %v4180
        %4189 = vst.msk [vmem:[#allocation2 + $0x28] sm:$0xff] %vm792, %v4181
        %4190 = vst.msk [vmem:[#allocation2 + $0x30] sm:$0xff] %vm792, %v4110
        %4191 = vst.msk [vmem:[#allocation2 + $0x38] sm:$0xff] %vm792, %v4111
        %4192 = vst.msk [vmem:[#allocation2 + $0x40] sm:$0xff] %vm792, %v4146
        %4193 = vst.msk [vmem:[#allocation2 + $0x48] sm:$0xff] %vm792, %v4147
        %4194 = vst.msk [vmem:[#allocation2 + $0x50] sm:$0xff] %vm792, %v4182
        %4195 = vst.msk [vmem:[#allocation2 + $0x58] sm:$0xff] %vm792, %v4183
        %p4196 = scmp.eq.s32.totalorder %s37, 1
        // Predicated region
        $region97: #{tpu_custom_call.1} parent=79 // pred_check
          %p4197 = pneg %p4196
        $region98: #{tpu_custom_call.1} parent=79 // pred_check_branch
          %4199 = sbr.rel (%p4197) target = $region100
        $region99: #{tpu_custom_call.1} parent=79 // pred_region
          %4200 = vst.msk [vmem:[#allocation10] sm:$0xff] %vm792, %v4108
          %4201 = vst.msk [vmem:[#allocation10 + $0x8] sm:$0xff] %vm792, %v4109
          %4202 = vst.msk [vmem:[#allocation10 + $0x10] sm:$0xff] %vm792, %v4144
          %4203 = vst.msk [vmem:[#allocation10 + $0x18] sm:$0xff] %vm792, %v4145
          %4204 = vst.msk [vmem:[#allocation10 + $0x20] sm:$0xff] %vm792, %v4180
          %4205 = vst.msk [vmem:[#allocation10 + $0x28] sm:$0xff] %vm792, %v4181
          %4206 = vst.msk [vmem:[#allocation10 + $0x30] sm:$0xff] %vm792, %v4110
          %4207 = vst.msk [vmem:[#allocation10 + $0x38] sm:$0xff] %vm792, %v4111
          %4208 = vst.msk [vmem:[#allocation10 + $0x40] sm:$0xff] %vm792, %v4146
          %4209 = vst.msk [vmem:[#allocation10 + $0x48] sm:$0xff] %vm792, %v4147
          %4210 = vst.msk [vmem:[#allocation10 + $0x50] sm:$0xff] %vm792, %v4182
          %4211 = vst.msk [vmem:[#allocation10 + $0x58] sm:$0xff] %vm792, %v4183
        $region100: #{tpu_custom_call.1} parent=79 // pred_fallthru
          _
        // Predicated region
        $region101: #{tpu_custom_call.1} parent=79 // pred_check
          %p4212 = pneg %p442
        $region102: #{tpu_custom_call.1} parent=79 // pred_check_branch
          %4214 = sbr.rel (%p4212) target = $region104
        $region103: #{tpu_custom_call.1} parent=79 // pred_region
          %s4215 = smul.u32 2, %s36
          %4217 = vsyncadd [#allocation5], 0
          %s4218 = smul.addr %s4215, 6
          %s4219 = smul.addr %s4218, 8
          %s4220 = scalar_lea.hbm %s15, %s4219
          %s4221 = sshll.u32 [#allocation10], 4
          %s4222 = int_to_ptr.vmem [resolvable:$true] %s4221
          %s4223 = sshll.u32 %s4220, 4
          %s4224 = int_to_ptr.hbm [resolvable:$true] %s4223
          %4229 = dma.vmem_to_hbm [thread:$0]  %s4222, 1536, %s4224, [#allocation5], 128, 128, 8
        $region104: #{tpu_custom_call.1} parent=79 // pred_fallthru
          _
        // Predicated region
        $region105: #{tpu_custom_call.1} parent=79 // pred_check
          %p4230 = pneg %p442
        $region106: #{tpu_custom_call.1} parent=79 // pred_check_branch
          %4232 = sbr.rel (%p4230) target = $region108
        $region107: #{tpu_custom_call.1} parent=79 // pred_region
          %4234 = dma.done [#allocation5], 1536
        $region108: #{tpu_custom_call.1} parent=79 // pred_fallthru
          _
      $region80: #{tpu_custom_call.1} parent=5 // pred_fallthru
        _
      %p4235 = scmp.le.s32.totalorder 2, %s27
      // Predicated region
      $region109: #{tpu_custom_call.1} parent=5 // pred_check
        %p4236 = pneg %p4235
      $region110: #{tpu_custom_call.1} parent=5 // pred_check_branch
        %4238 = sbr.rel (%p4236) target = $region112
      $region111: #{tpu_custom_call.1} parent=5 // pred_region
        %s4239 = ssub.s32 %s27, 2
      $region112: #{tpu_custom_call.1} parent=5 // pred_fallthru
        _
    $region6: #{tpu_custom_call.1} parent=1 // loop_footer
      %s31 = sadd.s32 1, %s27
    $region7: #{tpu_custom_call.1} parent=1 // loop_footer_branch
      %26 = sbr.rel target = $region3
    $region8: #{tpu_custom_call.1} parent=1 // loop_exit
      _
    %4240 = vsyncpa [#allocation4], 1
    %s4241 = scalar_lea.sflag [#allocation4], 1
    %4242 = vsyncpa %s4241, 1
    %4243 = vsyncpa [#allocation5], 1
    %s4244 = scalar_lea.sflag [#allocation5], 1
    %4245 = vsyncpa %s4244, 1
    %4246 = vsyncpa [#allocation6], 1
    %s4247 = scalar_lea.sflag [#allocation6], 1
    %4248 = vsyncpa %s4247, 1
    %4249 = vsyncpa [#allocation9], 1

</llo_original>
